<compile_context>
chip_gen: v7x
topology: tpu7x:2x2x1
jax: 0.10.0
libtpu: 0.0.40
codegen_flags: <defaults>
</compile_context>

<pallas_src>
import functools

import jax
import jax.numpy as jnp
from jax.experimental import pallas as pl
from jax.experimental.pallas import tpu as pltpu

VMEM_LIMIT = 64 * 1024 * 1024   # explicit scoped-VMEM cap (fits every listed generation)


# ----------------------------------------------------------------------- helpers

def _pick_tm(m):
    # token-tile size: whole array when small, 512-row tiles at scale
    # (bf16 weights/activations leave headroom for 512 on v6e; re-check on v7x/64MiB).
    return m if m <= 1024 else 512


def _row_spec(tm, n):
    return pl.BlockSpec((tm, n), lambda i: (i, 0))


def _rep_spec(shape):
    # replicated block (weights / biases): same block for every grid step.
    # TODO(synk): single-buffer these (pipeline_mode=pl.Buffered(1)) on v7x once the
    # VMEM report confirms double-buffering; kept default for lowering safety.
    return pl.BlockSpec(shape, lambda i: (0,) * len(shape))


def _cparams(sem):
    return pltpu.CompilerParams(dimension_semantics=sem, vmem_limit_bytes=VMEM_LIMIT)


def _mxu_dot(x, w):
    # operands are already bf16 (weights stored bf16 in HBM); f32 accumulation on MXU
    return jnp.dot(x, w, preferred_element_type=jnp.float32)


def _layernorm(x, g, b, eps=1e-12):
    mu = jnp.mean(x, axis=-1, keepdims=True)
    var = jnp.mean(jnp.square(x - mu), axis=-1, keepdims=True)
    return (x - mu) * jax.lax.rsqrt(var + eps) * g + b


def _gelu(y):
    # TODO(synk): HF BERT uses exact erf-GELU; tanh approximation used for robust Mosaic lowering.
    c = jnp.float32(0.7978845608028654)  # sqrt(2/pi)
    return 0.5 * y * (1.0 + jnp.tanh(c * (y + 0.044715 * y * y * y)))


# ----------------------------------------------------------------------- kernels

def _ln_kernel(x_ref, g_ref, b_ref, o_ref):
    x = x_ref[...].astype(jnp.float32)
    o_ref[...] = _layernorm(x, g_ref[...], b_ref[...]).astype(o_ref.dtype)


def pallas_layernorm(x, g, b):
    M, H = x.shape
    tm = _pick_tm(M)
    return pl.pallas_call(
        _ln_kernel,
        grid=(pl.cdiv(M, tm),),
        out_shape=jax.ShapeDtypeStruct((M, H), jnp.bfloat16),
        in_specs=[_row_spec(tm, H), _rep_spec((1, H)), _rep_spec((1, H))],
        out_specs=_row_spec(tm, H),
        compiler_params=_cparams(("parallel",)),
    )(x, g.reshape(1, H), b.reshape(1, H))


def _qkv_kernel(x_ref, w_ref, b_ref, o_ref):
    o_ref[...] = (_mxu_dot(x_ref[...], w_ref[...]) + b_ref[...]).astype(o_ref.dtype)


def pallas_qkv(x, w, b):
    M, H = x.shape
    N = w.shape[1]
    tm = _pick_tm(M)
    return pl.pallas_call(
        _qkv_kernel,
        grid=(pl.cdiv(M, tm),),
        out_shape=jax.ShapeDtypeStruct((M, N), jnp.bfloat16),
        in_specs=[_row_spec(tm, H), _rep_spec((H, N)), _rep_spec((1, N))],
        out_specs=_row_spec(tm, N),
        compiler_params=_cparams(("parallel",)),
    )(x, w, b.reshape(1, N))


def _attention_kernel(qkv_ref, bias_ref, o_ref, *, nh, dh, scale):
    # One whole sequence per grid step: (S, 3H) fused QKV block, all heads in-kernel.
    qkv = qkv_ref[...]                       # (S, 3H) bf16
    bias = bias_ref[...]                     # (1, S)  f32 additive mask bias
    H = nh * dh
    outs = []
    for h in range(nh):                      # static unroll; lane slices, no HBM traffic
        q = qkv[:, h * dh:(h + 1) * dh]
        k = qkv[:, H + h * dh:H + (h + 1) * dh]
        v = qkv[:, 2 * H + h * dh:2 * H + (h + 1) * dh]
        # contraction on the last dim of both operands (no JAX-side K transpose).
        s = jax.lax.dot_general(q, k, (((1,), (1,)), ((), ())),
                                preferred_element_type=jnp.float32)
        s = s * jnp.float32(scale) + bias    # (S,S) + (1,S) broadcast
        s = s - jnp.max(s, axis=-1, keepdims=True)
        p = jnp.exp(s)
        p = p * pl.reciprocal(jnp.sum(p, axis=-1, keepdims=True), approx=True)
        outs.append(jnp.dot(p.astype(jnp.bfloat16), v,
                            preferred_element_type=jnp.float32))
    # single lane-dense (S, H) store straight into the (M, H) context buffer
    o_ref[...] = jnp.concatenate(outs, axis=-1).astype(o_ref.dtype)


def pallas_attention(qkv, bias, *, B, S, nh, dh, scale):
    H = nh * dh
    return pl.pallas_call(
        functools.partial(_attention_kernel, nh=nh, dh=dh, scale=scale),
        grid=(B,),
        out_shape=jax.ShapeDtypeStruct((B * S, H), jnp.bfloat16),
        in_specs=[pl.BlockSpec((S, 3 * H), lambda b: (b, 0)),
                  pl.BlockSpec((None, 1, S), lambda b: (b, 0, 0))],
        out_specs=pl.BlockSpec((S, H), lambda b: (b, 0)),
        compiler_params=_cparams(("parallel",)),
    )(qkv, bias)


def _attnout_ln_kernel(ctx_ref, res_ref, w_ref, b_ref, g_ref, beta_ref, o_ref):
    y = (_mxu_dot(ctx_ref[...], w_ref[...]) + b_ref[...]
         + res_ref[...].astype(jnp.float32))
    o_ref[...] = _layernorm(y, g_ref[...], beta_ref[...]).astype(o_ref.dtype)


def pallas_attnout_ln(ctx, res, w, b, g, beta):
    M, H = ctx.shape
    tm = _pick_tm(M)
    return pl.pallas_call(
        _attnout_ln_kernel,
        grid=(pl.cdiv(M, tm),),
        out_shape=jax.ShapeDtypeStruct((M, H), jnp.bfloat16),
        in_specs=[_row_spec(tm, H), _row_spec(tm, H), _rep_spec((H, H)),
                  _rep_spec((1, H)), _rep_spec((1, H)), _rep_spec((1, H))],
        out_specs=_row_spec(tm, H),
        compiler_params=_cparams(("parallel",)),
    )(ctx, res, w, b.reshape(1, H), g.reshape(1, H), beta.reshape(1, H))


def _ffn_ln_kernel(h_ref, iw_ref, ib_ref, ow_ref, ob_ref, g_ref, beta_ref, o_ref):
    # TODO(synk): for BERT-large-class configs on v7x (64 MiB VMEM/TC), split this
    # kernel (up-proj+GELU | down-proj+residual+LN) or tile the I reduction axis.
    h = h_ref[...]                                              # (tm, H) bf16
    y = _gelu(_mxu_dot(h, iw_ref[...]) + ib_ref[...])           # (tm, I) f32
    z = (_mxu_dot(y.astype(jnp.bfloat16), ow_ref[...]) + ob_ref[...]
         + h.astype(jnp.float32))
    o_ref[...] = _layernorm(z, g_ref[...], beta_ref[...]).astype(o_ref.dtype)


def pallas_ffn_ln(h, iw, ib, ow, ob, g, beta):
    M, H = h.shape
    I = iw.shape[1]
    tm = _pick_tm(M)
    return pl.pallas_call(
        _ffn_ln_kernel,
        grid=(pl.cdiv(M, tm),),
        out_shape=jax.ShapeDtypeStruct((M, H), jnp.bfloat16),
        in_specs=[_row_spec(tm, H), _rep_spec((H, I)), _rep_spec((1, I)),
                  _rep_spec((I, H)), _rep_spec((1, H)),
                  _rep_spec((1, H)), _rep_spec((1, H))],
        out_specs=_row_spec(tm, H),
        compiler_params=_cparams(("parallel",)),
    )(h, iw, ib.reshape(1, I), ow, ob.reshape(1, H),
      g.reshape(1, H), beta.reshape(1, H))


def _tag_ce_kernel(h_ref, w_ref, b_ref, labels_ref, tag_ref, loss_ref,
                   sum_ref, cnt_ref, *, num_tag, total_rows):
    i = pl.program_id(0)

    @pl.when(i == 0)
    def _():
        sum_ref[...] = jnp.zeros_like(sum_ref)
        cnt_ref[...] = jnp.zeros_like(cnt_ref)

    logits = _mxu_dot(h_ref[...], w_ref[...]) + b_ref[...]       # (TM, Cpad) f32
    TM, Cpad = logits.shape
    col = jax.lax.broadcasted_iota(jnp.int32, (TM, Cpad), 1)
    logits_m = jnp.where(col < num_tag, logits, jnp.float32(-1e30))

    # narrow tag-logit output (only the real columns hit HBM)
    tag_ref[...] = logits[:, :num_tag]

    labels = labels_ref[...]                                     # (TM, 1) int32
    row = jax.lax.broadcasted_iota(jnp.int32, (TM, 1), 0) + i * TM
    valid = jnp.logical_and(labels != -100, row < total_rows)

    m = jnp.max(logits_m, axis=-1, keepdims=True)
    lse = jnp.log(jnp.sum(jnp.exp(logits_m - m), axis=-1, keepdims=True)) + m
    picked = jnp.sum(jnp.where(col == labels, logits_m, 0.0), axis=-1, keepdims=True)
    nll = jnp.where(valid, lse - picked, 0.0)                    # (TM, 1)

    # TODO(synk): SMEM scalar accumulators suggested; kept (1,1) VMEM for robust lowering.
    sum_ref[...] += jnp.sum(nll, keepdims=True)
    cnt_ref[...] += jnp.sum(valid.astype(jnp.float32), keepdims=True)

    @pl.when(i == pl.num_programs(0) - 1)
    def _():
        # torch CrossEntropyLoss: mean over non-ignored tokens (ignore_index=-100)
        loss_ref[...] = sum_ref[...] / jnp.maximum(cnt_ref[...], 1.0)


def pallas_tag_ce(h, tag_w, tag_b, labels, num_tag):
    M, H = h.shape
    cpad = ((num_tag + 127) // 128) * 128        # lane-dense logits for the MXU/CE math
    w_pad = jnp.zeros((H, cpad), jnp.bfloat16).at[:, :num_tag].set(tag_w)
    b_pad = jnp.zeros((1, cpad), jnp.float32).at[:, :num_tag].set(tag_b)
    tm = _pick_tm(M)
    tag, loss = pl.pallas_call(
        functools.partial(_tag_ce_kernel, num_tag=num_tag, total_rows=M),
        grid=(pl.cdiv(M, tm),),
        out_shape=(jax.ShapeDtypeStruct((M, num_tag), jnp.float32),
                   jax.ShapeDtypeStruct((1, 1), jnp.float32)),
        in_specs=[_row_spec(tm, H), _rep_spec((H, cpad)), _rep_spec((1, cpad)),
                  _row_spec(tm, 1)],
        out_specs=(_row_spec(tm, num_tag), _rep_spec((1, 1))),
        scratch_shapes=[pltpu.VMEM((1, 1), jnp.float32),
                        pltpu.VMEM((1, 1), jnp.float32)],
        # accumulators require the grid axis to stay sequential ("arbitrary")
        compiler_params=_cparams(("arbitrary",)),
    )(h, w_pad, b_pad, labels)
    return tag, loss[0, 0]


# ------------------------------------------------------------------ params / model

def init_params(key, cfg):
    H, I, V = cfg['hidden'], cfg['inter'], cfg['vocab']
    keys = iter(jax.random.split(key, 16 + 8 * cfg['layers']))

    def nrm(shape, dtype=jnp.float32):
        return (0.02 * jax.random.normal(next(keys), shape, jnp.float32)).astype(dtype)

    bf = jnp.bfloat16   # matmul weights live in bf16 in HBM (half DMA / VMEM)
    params = dict(
        word_emb=nrm((V, H)),
        pos_emb=nrm((cfg['max_pos'], H)),
        type_emb=nrm((cfg['type_vocab'], H)),
        emb_ln_g=jnp.ones((H,), jnp.float32),
        emb_ln_b=jnp.zeros((H,), jnp.float32),
        tag_w=nrm((H, cfg['num_tag']), bf),
        tag_b=jnp.zeros((cfg['num_tag'],), jnp.float32),
        layers=[],
    )
    for _ in range(cfg['layers']):
        params['layers'].append(dict(
            qkv_w=nrm((H, 3 * H), bf), qkv_b=jnp.zeros((3 * H,), jnp.float32),
            ao_w=nrm((H, H), bf), ao_b=jnp.zeros((H,), jnp.float32),
            ln1_g=jnp.ones((H,), jnp.float32), ln1_b=jnp.zeros((H,), jnp.float32),
            i_w=nrm((H, I), bf), i_b=jnp.zeros((I,), jnp.float32),
            fo_w=nrm((I, H), bf), fo_b=jnp.zeros((H,), jnp.float32),
            ln2_g=jnp.ones((H,), jnp.float32), ln2_b=jnp.zeros((H,), jnp.float32),
        ))
    return params


def ner_bert_forward(params, ids, mask, token_type_ids, target_tags, *, cfg):
    B, S = ids.shape
    H, nh = cfg['hidden'], cfg['heads']
    dh = H // nh
    M = B * S

    # --- BERT embeddings (gathers are glue; LayerNorm runs in Pallas, emits bf16) ---
    emb = (jnp.take(params['word_emb'], ids, axis=0)
           + params['pos_emb'][:S][None, :, :]
           + jnp.take(params['type_emb'], token_type_ids, axis=0))
    h = pallas_layernorm(emb.reshape(M, H), params['emb_ln_g'], params['emb_ln_b'])

    # tiny additive attention-mask bias (B,1,S); expanded in-kernel, never (B*nh,S,S)
    bias = ((1.0 - mask.astype(jnp.float32)) * jnp.float32(-1e9)).reshape(B, 1, S)
    scale = 1.0 / float(dh) ** 0.5

    # --- transformer encoder layers (no JAX-side transposes: attention reads the
    #     fused (M,3H) QKV directly and writes the (M,H) context directly) ---
    for lyr in params['layers']:
        qkv = pallas_qkv(h, lyr['qkv_w'], lyr['qkv_b'])                      # (M,3H) bf16
        ctx = pallas_attention(qkv, bias, B=B, S=S, nh=nh, dh=dh, scale=scale)  # (M,H) bf16
        h = pallas_attnout_ln(ctx, h, lyr['ao_w'], lyr['ao_b'],
                              lyr['ln1_g'], lyr['ln1_b'])
        h = pallas_ffn_ln(h, lyr['i_w'], lyr['i_b'], lyr['fo_w'], lyr['fo_b'],
                          lyr['ln2_g'], lyr['ln2_b'])

    # bert_drop = nn.Dropout(0.3): identity in eval mode; pooled output unused.

    # --- tag head + masked cross-entropy (ignore_index = -100), fused ---
    active_labels = jnp.where(mask.reshape(-1) == 1,
                              target_tags.reshape(-1).astype(jnp.int32),
                              jnp.int32(-100)).reshape(M, 1)
    tag_flat, loss = pallas_tag_ce(h, params['tag_w'], params['tag_b'],
                                   active_labels, cfg['num_tag'])
    return tag_flat.reshape(B, S, cfg['num_tag']), loss


# ----------------------------------------------------------------------------- main

if __name__ == "__main__":
    cfg = dict(vocab=100, hidden=32, heads=4, layers=2, inter=64,
               max_pos=16, type_vocab=2, num_tag=5)
    B, S = 2, 8

    key = jax.random.PRNGKey(0)
    k_param, k_ids, k_tags = jax.random.split(key, 3)

    params = init_params(k_param, cfg)
    ids = jax.random.randint(k_ids, (B, S), 0, cfg['vocab'], dtype=jnp.int32)
    # attention mask: last two tokens of batch element 1 are padding
    mask = jnp.array([[1] * S, [1] * (S - 2) + [0, 0]], dtype=jnp.int32)
    token_type_ids = jnp.zeros((B, S), dtype=jnp.int32)
    target_tags = jax.random.randint(k_tags, (B, S), 0, cfg['num_tag'], dtype=jnp.int32)

    fwd = jax.jit(functools.partial(ner_bert_forward, cfg=cfg))
    tag, loss = fwd(params, ids, mask, token_type_ids, target_tags)
    jax.block_until_ready((tag, loss))

    assert tag.shape == (B, S, cfg['num_tag'])
    assert loss.shape == ()
    assert bool(jnp.isfinite(loss))
    print("KERNEL_OK")
</pallas_src>

<mosaic_0001>
module attributes {stable_mosaic.version = 11 : i64} {
  func.func @_ln_kernel(%arg0: i32, %arg1: memref<16x32xf32, #tpu.memory_space<vmem>>, %arg2: memref<1x32xf32, #tpu.memory_space<vmem>>, %arg3: memref<1x32xf32, #tpu.memory_space<vmem>>, %arg4: memref<16x32xbf16, #tpu.memory_space<vmem>>) attributes {dimension_semantics = [#tpu.dimension_semantics<parallel>], iteration_bounds = array<i64: 1>, scalar_prefetch = 0 : i64, scratch_operands = 0 : i64, tpu.core_type = #tpu.core_type<tc>, window_params = [{transform_indices = @transform_0, window_bounds = array<i64: 16, 32>}, {pipeline_mode = #tpu.pipeline_mode<synchronous>, transform_indices = @transform_1, window_bounds = array<i64: 1, 32>}, {pipeline_mode = #tpu.pipeline_mode<synchronous>, transform_indices = @transform_2, window_bounds = array<i64: 1, 32>}, {transform_indices = @transform_3, window_bounds = array<i64: 16, 32>}]} {
    %c0 = arith.constant 0 : index
    %c0_0 = arith.constant 0 : index
    %0 = vector.load %arg1[%c0, %c0_0] : memref<16x32xf32, #tpu.memory_space<vmem>>, vector<16x32xf32>
    %c0_1 = arith.constant 0 : index
    %c0_2 = arith.constant 0 : index
    %1 = vector.load %arg2[%c0_1, %c0_2] : memref<1x32xf32, #tpu.memory_space<vmem>>, vector<1x32xf32>
    %c0_3 = arith.constant 0 : index
    %c0_4 = arith.constant 0 : index
    %2 = vector.load %arg3[%c0_3, %c0_4] : memref<1x32xf32, #tpu.memory_space<vmem>>, vector<1x32xf32>
    %cst = arith.constant dense<0.000000e+00> : vector<16xf32>
    %3 = vector.multi_reduction <add>, %0, %cst [1] : vector<16x32xf32> to vector<16xf32>
    %4 = vector.shape_cast %3 : vector<16xf32> to vector<16x1xf32>
    %cst_5 = arith.constant 3.200000e+01 : f32
    %5 = vector.broadcast %cst_5 : f32 to vector<16x1xf32>
    %6 = arith.divf %4, %5 : vector<16x1xf32>
    %7 = vector.broadcast %6 : vector<16x1xf32> to vector<16x32xf32>
    %8 = arith.subf %0, %7 : vector<16x32xf32>
    %9 = arith.mulf %8, %8 : vector<16x32xf32>
    %cst_6 = arith.constant dense<0.000000e+00> : vector<16xf32>
    %10 = vector.multi_reduction <add>, %9, %cst_6 [1] : vector<16x32xf32> to vector<16xf32>
    %11 = vector.shape_cast %10 : vector<16xf32> to vector<16x1xf32>
    %cst_7 = arith.constant 3.200000e+01 : f32
    %12 = vector.broadcast %cst_7 : f32 to vector<16x1xf32>
    %13 = arith.divf %11, %12 : vector<16x1xf32>
    %14 = vector.broadcast %6 : vector<16x1xf32> to vector<16x32xf32>
    %15 = arith.subf %0, %14 : vector<16x32xf32>
    %cst_8 = arith.constant 9.99999996E-13 : f32
    %16 = vector.broadcast %cst_8 : f32 to vector<16x1xf32>
    %17 = arith.addf %13, %16 : vector<16x1xf32>
    %18 = math.rsqrt %17 : vector<16x1xf32>
    %19 = vector.broadcast %18 : vector<16x1xf32> to vector<16x32xf32>
    %20 = arith.mulf %15, %19 : vector<16x32xf32>
    %21 = vector.broadcast %1 : vector<1x32xf32> to vector<16x32xf32>
    %22 = arith.mulf %20, %21 : vector<16x32xf32>
    %23 = vector.broadcast %2 : vector<1x32xf32> to vector<16x32xf32>
    %24 = arith.addf %22, %23 : vector<16x32xf32>
    %25 = arith.truncf %24 : vector<16x32xf32> to vector<16x32xbf16>
    %c0_9 = arith.constant 0 : index
    %c0_10 = arith.constant 0 : index
    %26 = vector.load %arg4[%c0_9, %c0_10] : memref<16x32xbf16, #tpu.memory_space<vmem>>, vector<16x32xbf16>
    tpu.vector_store %arg4[%c0_9, %c0_10], %25 {strides = array<i32>} : memref<16x32xbf16, #tpu.memory_space<vmem>>, vector<16x32xbf16>,
    return
  }
  func.func @transform_0(%arg0: i32) -> (i32, i32) {
    %c0_i32 = arith.constant 0 : i32
    %c0_i32_0 = arith.constant 0 : i32
    return %arg0, %c0_i32 : i32, i32
  }
  func.func @transform_1(%arg0: i32) -> (i32, i32) {
    %c0_i32 = arith.constant 0 : i32
    %c0_i32_0 = arith.constant 0 : i32
    %c0_i32_1 = arith.constant 0 : i32
    return %c0_i32, %c0_i32_0 : i32, i32
  }
  func.func @transform_2(%arg0: i32) -> (i32, i32) {
    %c0_i32 = arith.constant 0 : i32
    %c0_i32_0 = arith.constant 0 : i32
    %c0_i32_1 = arith.constant 0 : i32
    return %c0_i32, %c0_i32_0 : i32, i32
  }
  func.func @transform_3(%arg0: i32) -> (i32, i32) {
    %c0_i32 = arith.constant 0 : i32
    %c0_i32_0 = arith.constant 0 : i32
    return %arg0, %c0_i32 : i32, i32
  }
}

module attributes {stable_mosaic.version = 11 : i64} {
  func.func @_qkv_kernel(%arg0: i32, %arg1: memref<16x32xbf16, #tpu.memory_space<vmem>>, %arg2: memref<32x96xbf16, #tpu.memory_space<vmem>>, %arg3: memref<1x96xf32, #tpu.memory_space<vmem>>, %arg4: memref<16x96xbf16, #tpu.memory_space<vmem>>) attributes {dimension_semantics = [#tpu.dimension_semantics<parallel>], iteration_bounds = array<i64: 1>, scalar_prefetch = 0 : i64, scratch_operands = 0 : i64, tpu.core_type = #tpu.core_type<tc>, window_params = [{transform_indices = @transform_0, window_bounds = array<i64: 16, 32>}, {pipeline_mode = #tpu.pipeline_mode<synchronous>, transform_indices = @transform_1, window_bounds = array<i64: 32, 96>}, {pipeline_mode = #tpu.pipeline_mode<synchronous>, transform_indices = @transform_2, window_bounds = array<i64: 1, 96>}, {transform_indices = @transform_3, window_bounds = array<i64: 16, 96>}]} {
    %c0 = arith.constant 0 : index
    %c0_0 = arith.constant 0 : index
    %0 = vector.load %arg1[%c0, %c0_0] : memref<16x32xbf16, #tpu.memory_space<vmem>>, vector<16x32xbf16>
    %c0_1 = arith.constant 0 : index
    %c0_2 = arith.constant 0 : index
    %1 = vector.load %arg2[%c0_1, %c0_2] : memref<32x96xbf16, #tpu.memory_space<vmem>>, vector<32x96xbf16>
    %cst = arith.constant dense<0.000000e+00> : vector<16x96xf32>
    %2 = tpu.matmul %0, %1, %cst {dimension_numbers = #tpu.dot_dimension_numbers<[1], [0], [0], [1], [0, 0, 1, 1], [], []>} : vector<16x32xbf16>, vector<32x96xbf16>, vector<16x96xf32> -> vector<16x96xf32>
    %c0_3 = arith.constant 0 : index
    %c0_4 = arith.constant 0 : index
    %3 = vector.load %arg3[%c0_3, %c0_4] : memref<1x96xf32, #tpu.memory_space<vmem>>, vector<1x96xf32>
    %4 = vector.broadcast %3 : vector<1x96xf32> to vector<16x96xf32>
    %5 = arith.addf %2, %4 : vector<16x96xf32>
    %6 = arith.truncf %5 : vector<16x96xf32> to vector<16x96xbf16>
    %c0_5 = arith.constant 0 : index
    %c0_6 = arith.constant 0 : index
    %7 = vector.load %arg4[%c0_5, %c0_6] : memref<16x96xbf16, #tpu.memory_space<vmem>>, vector<16x96xbf16>
    tpu.vector_store %arg4[%c0_5, %c0_6], %6 {strides = array<i32>} : memref<16x96xbf16, #tpu.memory_space<vmem>>, vector<16x96xbf16>,
    return
  }
  func.func @transform_0(%arg0: i32) -> (i32, i32) {
    %c0_i32 = arith.constant 0 : i32
    %c0_i32_0 = arith.constant 0 : i32
    return %arg0, %c0_i32 : i32, i32
  }
  func.func @transform_1(%arg0: i32) -> (i32, i32) {
    %c0_i32 = arith.constant 0 : i32
    %c0_i32_0 = arith.constant 0 : i32
    %c0_i32_1 = arith.constant 0 : i32
    return %c0_i32, %c0_i32_0 : i32, i32
  }
  func.func @transform_2(%arg0: i32) -> (i32, i32) {
    %c0_i32 = arith.constant 0 : i32
    %c0_i32_0 = arith.constant 0 : i32
    %c0_i32_1 = arith.constant 0 : i32
    return %c0_i32, %c0_i32_0 : i32, i32
  }
  func.func @transform_3(%arg0: i32) -> (i32, i32) {
    %c0_i32 = arith.constant 0 : i32
    %c0_i32_0 = arith.constant 0 : i32
    return %arg0, %c0_i32 : i32, i32
  }
}

module attributes {stable_mosaic.version = 11 : i64} {
  func.func @_attention_kernel(%arg0: i32, %arg1: memref<8x96xbf16, #tpu.memory_space<vmem>>, %arg2: memref<1x1x8xf32, #tpu.memory_space<vmem>>, %arg3: memref<8x32xbf16, #tpu.memory_space<vmem>>) attributes {dimension_semantics = [#tpu.dimension_semantics<parallel>], iteration_bounds = array<i64: 2>, scalar_prefetch = 0 : i64, scratch_operands = 0 : i64, tpu.core_type = #tpu.core_type<tc>, window_params = [{transform_indices = @transform_0, window_bounds = array<i64: 8, 96>}, {transform_indices = @transform_1, window_bounds = array<i64: 1, 1, 8>}, {transform_indices = @transform_2, window_bounds = array<i64: 8, 32>}]} {
    %c0 = arith.constant 0 : index
    %c0_0 = arith.constant 0 : index
    %0 = vector.load %arg1[%c0, %c0_0] : memref<8x96xbf16, #tpu.memory_space<vmem>>, vector<8x96xbf16>
    %c0_1 = arith.constant 0 : index
    %c0_2 = arith.constant 0 : index
    %c0_3 = arith.constant 0 : index
    %1 = vector.load %arg2[%c0_1, %c0_2, %c0_3] : memref<1x1x8xf32, #tpu.memory_space<vmem>>, vector<1x1x8xf32>
    %2 = vector.shape_cast %1 : vector<1x1x8xf32> to vector<1x8xf32>
    %3 = vector.extract_strided_slice %0 {offsets = [0, 0], sizes = [8, 8], strides = [1, 1]} : vector<8x96xbf16> to vector<8x8xbf16>
    %4 = vector.extract_strided_slice %0 {offsets = [0, 32], sizes = [8, 8], strides = [1, 1]} : vector<8x96xbf16> to vector<8x8xbf16>
    %5 = vector.extract_strided_slice %0 {offsets = [0, 64], sizes = [8, 8], strides = [1, 1]} : vector<8x96xbf16> to vector<8x8xbf16>
    %cst = arith.constant dense<0.000000e+00> : vector<8x8xf32>
    %6 = tpu.matmul %3, %4, %cst {dimension_numbers = #tpu.dot_dimension_numbers<[1], [1], [0], [0], [0, 0, 1, 0], [], []>} : vector<8x8xbf16>, vector<8x8xbf16>, vector<8x8xf32> -> vector<8x8xf32>
    %cst_4 = arith.constant 0.353553385 : f32
    %7 = vector.broadcast %cst_4 : f32 to vector<8x8xf32>
    %8 = arith.mulf %6, %7 : vector<8x8xf32>
    %9 = vector.broadcast %2 : vector<1x8xf32> to vector<8x8xf32>
    %10 = arith.addf %8, %9 : vector<8x8xf32>
    %cst_5 = arith.constant dense<0xFF800000> : vector<8xf32>
    %11 = vector.multi_reduction <maximumf>, %10, %cst_5 [1] : vector<8x8xf32> to vector<8xf32>
    %12 = vector.shape_cast %11 : vector<8xf32> to vector<8x1xf32>
    %13 = vector.broadcast %12 : vector<8x1xf32> to vector<8x8xf32>
    %14 = arith.subf %10, %13 : vector<8x8xf32>
    %15 = math.exp %14 : vector<8x8xf32>
    %cst_6 = arith.constant dense<0.000000e+00> : vector<8xf32>
    %16 = vector.multi_reduction <add>, %15, %cst_6 [1] : vector<8x8xf32> to vector<8xf32>
    %17 = vector.shape_cast %16 : vector<8xf32> to vector<8x1xf32>
    %18 = tpu.reciprocal %17 {approx = true} : vector<8x1xf32> -> vector<8x1xf32>
    %19 = vector.broadcast %18 : vector<8x1xf32> to vector<8x8xf32>
    %20 = arith.mulf %15, %19 : vector<8x8xf32>
    %21 = arith.truncf %20 : vector<8x8xf32> to vector<8x8xbf16>
    %cst_7 = arith.constant dense<0.000000e+00> : vector<8x8xf32>
    %22 = tpu.matmul %21, %5, %cst_7 {dimension_numbers = #tpu.dot_dimension_numbers<[1], [0], [0], [1], [0, 0, 1, 1], [], []>} : vector<8x8xbf16>, vector<8x8xbf16>, vector<8x8xf32> -> vector<8x8xf32>
    %23 = vector.extract_strided_slice %0 {offsets = [0, 8], sizes = [8, 8], strides = [1, 1]} : vector<8x96xbf16> to vector<8x8xbf16>
    %24 = vector.extract_strided_slice %0 {offsets = [0, 40], sizes = [8, 8], strides = [1, 1]} : vector<8x96xbf16> to vector<8x8xbf16>
    %25 = vector.extract_strided_slice %0 {offsets = [0, 72], sizes = [8, 8], strides = [1, 1]} : vector<8x96xbf16> to vector<8x8xbf16>
    %cst_8 = arith.constant dense<0.000000e+00> : vector<8x8xf32>
    %26 = tpu.matmul %23, %24, %cst_8 {dimension_numbers = #tpu.dot_dimension_numbers<[1], [1], [0], [0], [0, 0, 1, 0], [], []>} : vector<8x8xbf16>, vector<8x8xbf16>, vector<8x8xf32> -> vector<8x8xf32>
    %cst_9 = arith.constant 0.353553385 : f32
    %27 = vector.broadcast %cst_9 : f32 to vector<8x8xf32>
    %28 = arith.mulf %26, %27 : vector<8x8xf32>
    %29 = vector.broadcast %2 : vector<1x8xf32> to vector<8x8xf32>
    %30 = arith.addf %28, %29 : vector<8x8xf32>
    %cst_10 = arith.constant dense<0xFF800000> : vector<8xf32>
    %31 = vector.multi_reduction <maximumf>, %30, %cst_10 [1] : vector<8x8xf32> to vector<8xf32>
    %32 = vector.shape_cast %31 : vector<8xf32> to vector<8x1xf32>
    %33 = vector.broadcast %32 : vector<8x1xf32> to vector<8x8xf32>
    %34 = arith.subf %30, %33 : vector<8x8xf32>
    %35 = math.exp %34 : vector<8x8xf32>
    %cst_11 = arith.constant dense<0.000000e+00> : vector<8xf32>
    %36 = vector.multi_reduction <add>, %35, %cst_11 [1] : vector<8x8xf32> to vector<8xf32>
    %37 = vector.shape_cast %36 : vector<8xf32> to vector<8x1xf32>
    %38 = tpu.reciprocal %37 {approx = true} : vector<8x1xf32> -> vector<8x1xf32>
    %39 = vector.broadcast %38 : vector<8x1xf32> to vector<8x8xf32>
    %40 = arith.mulf %35, %39 : vector<8x8xf32>
    %41 = arith.truncf %40 : vector<8x8xf32> to vector<8x8xbf16>
    %cst_12 = arith.constant dense<0.000000e+00> : vector<8x8xf32>
    %42 = tpu.matmul %41, %25, %cst_12 {dimension_numbers = #tpu.dot_dimension_numbers<[1], [0], [0], [1], [0, 0, 1, 1], [], []>} : vector<8x8xbf16>, vector<8x8xbf16>, vector<8x8xf32> -> vector<8x8xf32>
    %43 = vector.extract_strided_slice %0 {offsets = [0, 16], sizes = [8, 8], strides = [1, 1]} : vector<8x96xbf16> to vector<8x8xbf16>
    %44 = vector.extract_strided_slice %0 {offsets = [0, 48], sizes = [8, 8], strides = [1, 1]} : vector<8x96xbf16> to vector<8x8xbf16>
    %45 = vector.extract_strided_slice %0 {offsets = [0, 80], sizes = [8, 8], strides = [1, 1]} : vector<8x96xbf16> to vector<8x8xbf16>
    %cst_13 = arith.constant dense<0.000000e+00> : vector<8x8xf32>
    %46 = tpu.matmul %43, %44, %cst_13 {dimension_numbers = #tpu.dot_dimension_numbers<[1], [1], [0], [0], [0, 0, 1, 0], [], []>} : vector<8x8xbf16>, vector<8x8xbf16>, vector<8x8xf32> -> vector<8x8xf32>
    %cst_14 = arith.constant 0.353553385 : f32
    %47 = vector.broadcast %cst_14 : f32 to vector<8x8xf32>
    %48 = arith.mulf %46, %47 : vector<8x8xf32>
    %49 = vector.broadcast %2 : vector<1x8xf32> to vector<8x8xf32>
    %50 = arith.addf %48, %49 : vector<8x8xf32>
    %cst_15 = arith.constant dense<0xFF800000> : vector<8xf32>
    %51 = vector.multi_reduction <maximumf>, %50, %cst_15 [1] : vector<8x8xf32> to vector<8xf32>
    %52 = vector.shape_cast %51 : vector<8xf32> to vector<8x1xf32>
    %53 = vector.broadcast %52 : vector<8x1xf32> to vector<8x8xf32>
    %54 = arith.subf %50, %53 : vector<8x8xf32>
    %55 = math.exp %54 : vector<8x8xf32>
    %cst_16 = arith.constant dense<0.000000e+00> : vector<8xf32>
    %56 = vector.multi_reduction <add>, %55, %cst_16 [1] : vector<8x8xf32> to vector<8xf32>
    %57 = vector.shape_cast %56 : vector<8xf32> to vector<8x1xf32>
    %58 = tpu.reciprocal %57 {approx = true} : vector<8x1xf32> -> vector<8x1xf32>
    %59 = vector.broadcast %58 : vector<8x1xf32> to vector<8x8xf32>
    %60 = arith.mulf %55, %59 : vector<8x8xf32>
    %61 = arith.truncf %60 : vector<8x8xf32> to vector<8x8xbf16>
    %cst_17 = arith.constant dense<0.000000e+00> : vector<8x8xf32>
    %62 = tpu.matmul %61, %45, %cst_17 {dimension_numbers = #tpu.dot_dimension_numbers<[1], [0], [0], [1], [0, 0, 1, 1], [], []>} : vector<8x8xbf16>, vector<8x8xbf16>, vector<8x8xf32> -> vector<8x8xf32>
    %63 = vector.extract_strided_slice %0 {offsets = [0, 24], sizes = [8, 8], strides = [1, 1]} : vector<8x96xbf16> to vector<8x8xbf16>
    %64 = vector.extract_strided_slice %0 {offsets = [0, 56], sizes = [8, 8], strides = [1, 1]} : vector<8x96xbf16> to vector<8x8xbf16>
    %65 = vector.extract_strided_slice %0 {offsets = [0, 88], sizes = [8, 8], strides = [1, 1]} : vector<8x96xbf16> to vector<8x8xbf16>
    %cst_18 = arith.constant dense<0.000000e+00> : vector<8x8xf32>
    %66 = tpu.matmul %63, %64, %cst_18 {dimension_numbers = #tpu.dot_dimension_numbers<[1], [1], [0], [0], [0, 0, 1, 0], [], []>} : vector<8x8xbf16>, vector<8x8xbf16>, vector<8x8xf32> -> vector<8x8xf32>
    %cst_19 = arith.constant 0.353553385 : f32
    %67 = vector.broadcast %cst_19 : f32 to vector<8x8xf32>
    %68 = arith.mulf %66, %67 : vector<8x8xf32>
    %69 = vector.broadcast %2 : vector<1x8xf32> to vector<8x8xf32>
    %70 = arith.addf %68, %69 : vector<8x8xf32>
    %cst_20 = arith.constant dense<0xFF800000> : vector<8xf32>
    %71 = vector.multi_reduction <maximumf>, %70, %cst_20 [1] : vector<8x8xf32> to vector<8xf32>
    %72 = vector.shape_cast %71 : vector<8xf32> to vector<8x1xf32>
    %73 = vector.broadcast %72 : vector<8x1xf32> to vector<8x8xf32>
    %74 = arith.subf %70, %73 : vector<8x8xf32>
    %75 = math.exp %74 : vector<8x8xf32>
    %cst_21 = arith.constant dense<0.000000e+00> : vector<8xf32>
    %76 = vector.multi_reduction <add>, %75, %cst_21 [1] : vector<8x8xf32> to vector<8xf32>
    %77 = vector.shape_cast %76 : vector<8xf32> to vector<8x1xf32>
    %78 = tpu.reciprocal %77 {approx = true} : vector<8x1xf32> -> vector<8x1xf32>
    %79 = vector.broadcast %78 : vector<8x1xf32> to vector<8x8xf32>
    %80 = arith.mulf %75, %79 : vector<8x8xf32>
    %81 = arith.truncf %80 : vector<8x8xf32> to vector<8x8xbf16>
    %cst_22 = arith.constant dense<0.000000e+00> : vector<8x8xf32>
    %82 = tpu.matmul %81, %65, %cst_22 {dimension_numbers = #tpu.dot_dimension_numbers<[1], [0], [0], [1], [0, 0, 1, 1], [], []>} : vector<8x8xbf16>, vector<8x8xbf16>, vector<8x8xf32> -> vector<8x8xf32>
    %83 = tpu.concatenate %22, %42, %62, %82 in 1 : vector<8x8xf32>, vector<8x8xf32>, vector<8x8xf32>, vector<8x8xf32> -> vector<8x32xf32>
    %84 = arith.truncf %83 : vector<8x32xf32> to vector<8x32xbf16>
    %c0_23 = arith.constant 0 : index
    %c0_24 = arith.constant 0 : index
    %85 = vector.load %arg3[%c0_23, %c0_24] : memref<8x32xbf16, #tpu.memory_space<vmem>>, vector<8x32xbf16>
    tpu.vector_store %arg3[%c0_23, %c0_24], %84 {strides = array<i32>} : memref<8x32xbf16, #tpu.memory_space<vmem>>, vector<8x32xbf16>,
    return
  }
  func.func @transform_0(%arg0: i32) -> (i32, i32) {
    %c0_i32 = arith.constant 0 : i32
    %c0_i32_0 = arith.constant 0 : i32
    return %arg0, %c0_i32 : i32, i32
  }
  func.func @transform_1(%arg0: i32) -> (i32, i32, i32) {
    %c0_i32 = arith.constant 0 : i32
    %c0_i32_0 = arith.constant 0 : i32
    %c0_i32_1 = arith.constant 0 : i32
    return %arg0, %c0_i32, %c0_i32_0 : i32, i32, i32
  }
  func.func @transform_2(%arg0: i32) -> (i32, i32) {
    %c0_i32 = arith.constant 0 : i32
    %c0_i32_0 = arith.constant 0 : i32
    return %arg0, %c0_i32 : i32, i32
  }
}

module attributes {stable_mosaic.version = 11 : i64} {
  func.func @_attnout_ln_kernel(%arg0: i32, %arg1: memref<16x32xbf16, #tpu.memory_space<vmem>>, %arg2: memref<16x32xbf16, #tpu.memory_space<vmem>>, %arg3: memref<32x32xbf16, #tpu.memory_space<vmem>>, %arg4: memref<1x32xf32, #tpu.memory_space<vmem>>, %arg5: memref<1x32xf32, #tpu.memory_space<vmem>>, %arg6: memref<1x32xf32, #tpu.memory_space<vmem>>, %arg7: memref<16x32xbf16, #tpu.memory_space<vmem>>) attributes {dimension_semantics = [#tpu.dimension_semantics<parallel>], iteration_bounds = array<i64: 1>, scalar_prefetch = 0 : i64, scratch_operands = 0 : i64, tpu.core_type = #tpu.core_type<tc>, window_params = [{transform_indices = @transform_0, window_bounds = array<i64: 16, 32>}, {transform_indices = @transform_1, window_bounds = array<i64: 16, 32>}, {pipeline_mode = #tpu.pipeline_mode<synchronous>, transform_indices = @transform_2, window_bounds = array<i64: 32, 32>}, {pipeline_mode = #tpu.pipeline_mode<synchronous>, transform_indices = @transform_3, window_bounds = array<i64: 1, 32>}, {pipeline_mode = #tpu.pipeline_mode<synchronous>, transform_indices = @transform_4, window_bounds = array<i64: 1, 32>}, {pipeline_mode = #tpu.pipeline_mode<synchronous>, transform_indices = @transform_5, window_bounds = array<i64: 1, 32>}, {transform_indices = @transform_6, window_bounds = array<i64: 16, 32>}]} {
    %c0 = arith.constant 0 : index
    %c0_0 = arith.constant 0 : index
    %0 = vector.load %arg1[%c0, %c0_0] : memref<16x32xbf16, #tpu.memory_space<vmem>>, vector<16x32xbf16>
    %c0_1 = arith.constant 0 : index
    %c0_2 = arith.constant 0 : index
    %1 = vector.load %arg3[%c0_1, %c0_2] : memref<32x32xbf16, #tpu.memory_space<vmem>>, vector<32x32xbf16>
    %cst = arith.constant dense<0.000000e+00> : vector<16x32xf32>
    %2 = tpu.matmul %0, %1, %cst {dimension_numbers = #tpu.dot_dimension_numbers<[1], [0], [0], [1], [0, 0, 1, 1], [], []>} : vector<16x32xbf16>, vector<32x32xbf16>, vector<16x32xf32> -> vector<16x32xf32>
    %c0_3 = arith.constant 0 : index
    %c0_4 = arith.constant 0 : index
    %3 = vector.load %arg4[%c0_3, %c0_4] : memref<1x32xf32, #tpu.memory_space<vmem>>, vector<1x32xf32>
    %4 = vector.broadcast %3 : vector<1x32xf32> to vector<16x32xf32>
    %5 = arith.addf %2, %4 : vector<16x32xf32>
    %c0_5 = arith.constant 0 : index
    %c0_6 = arith.constant 0 : index
    %6 = vector.load %arg2[%c0_5, %c0_6] : memref<16x32xbf16, #tpu.memory_space<vmem>>, vector<16x32xbf16>
    %7 = arith.extf %6 : vector<16x32xbf16> to vector<16x32xf32>
    %8 = arith.addf %5, %7 : vector<16x32xf32>
    %c0_7 = arith.constant 0 : index
    %c0_8 = arith.constant 0 : index
    %9 = vector.load %arg5[%c0_7, %c0_8] : memref<1x32xf32, #tpu.memory_space<vmem>>, vector<1x32xf32>
    %c0_9 = arith.constant 0 : index
    %c0_10 = arith.constant 0 : index
    %10 = vector.load %arg6[%c0_9, %c0_10] : memref<1x32xf32, #tpu.memory_space<vmem>>, vector<1x32xf32>
    %cst_11 = arith.constant dense<0.000000e+00> : vector<16xf32>
    %11 = vector.multi_reduction <add>, %8, %cst_11 [1] : vector<16x32xf32> to vector<16xf32>
    %12 = vector.shape_cast %11 : vector<16xf32> to vector<16x1xf32>
    %cst_12 = arith.constant 3.200000e+01 : f32
    %13 = vector.broadcast %cst_12 : f32 to vector<16x1xf32>
    %14 = arith.divf %12, %13 : vector<16x1xf32>
    %15 = vector.broadcast %14 : vector<16x1xf32> to vector<16x32xf32>
    %16 = arith.subf %8, %15 : vector<16x32xf32>
    %17 = arith.mulf %16, %16 : vector<16x32xf32>
    %cst_13 = arith.constant dense<0.000000e+00> : vector<16xf32>
    %18 = vector.multi_reduction <add>, %17, %cst_13 [1] : vector<16x32xf32> to vector<16xf32>
    %19 = vector.shape_cast %18 : vector<16xf32> to vector<16x1xf32>
    %cst_14 = arith.constant 3.200000e+01 : f32
    %20 = vector.broadcast %cst_14 : f32 to vector<16x1xf32>
    %21 = arith.divf %19, %20 : vector<16x1xf32>
    %22 = vector.broadcast %14 : vector<16x1xf32> to vector<16x32xf32>
    %23 = arith.subf %8, %22 : vector<16x32xf32>
    %cst_15 = arith.constant 9.99999996E-13 : f32
    %24 = vector.broadcast %cst_15 : f32 to vector<16x1xf32>
    %25 = arith.addf %21, %24 : vector<16x1xf32>
    %26 = math.rsqrt %25 : vector<16x1xf32>
    %27 = vector.broadcast %26 : vector<16x1xf32> to vector<16x32xf32>
    %28 = arith.mulf %23, %27 : vector<16x32xf32>
    %29 = vector.broadcast %9 : vector<1x32xf32> to vector<16x32xf32>
    %30 = arith.mulf %28, %29 : vector<16x32xf32>
    %31 = vector.broadcast %10 : vector<1x32xf32> to vector<16x32xf32>
    %32 = arith.addf %30, %31 : vector<16x32xf32>
    %33 = arith.truncf %32 : vector<16x32xf32> to vector<16x32xbf16>
    %c0_16 = arith.constant 0 : index
    %c0_17 = arith.constant 0 : index
    %34 = vector.load %arg7[%c0_16, %c0_17] : memref<16x32xbf16, #tpu.memory_space<vmem>>, vector<16x32xbf16>
    tpu.vector_store %arg7[%c0_16, %c0_17], %33 {strides = array<i32>} : memref<16x32xbf16, #tpu.memory_space<vmem>>, vector<16x32xbf16>,
    return
  }
  func.func @transform_0(%arg0: i32) -> (i32, i32) {
    %c0_i32 = arith.constant 0 : i32
    %c0_i32_0 = arith.constant 0 : i32
    return %arg0, %c0_i32 : i32, i32
  }
  func.func @transform_1(%arg0: i32) -> (i32, i32) {
    %c0_i32 = arith.constant 0 : i32
    %c0_i32_0 = arith.constant 0 : i32
    return %arg0, %c0_i32 : i32, i32
  }
  func.func @transform_2(%arg0: i32) -> (i32, i32) {
    %c0_i32 = arith.constant 0 : i32
    %c0_i32_0 = arith.constant 0 : i32
    %c0_i32_1 = arith.constant 0 : i32
    return %c0_i32, %c0_i32_0 : i32, i32
  }
  func.func @transform_3(%arg0: i32) -> (i32, i32) {
    %c0_i32 = arith.constant 0 : i32
    %c0_i32_0 = arith.constant 0 : i32
    %c0_i32_1 = arith.constant 0 : i32
    return %c0_i32, %c0_i32_0 : i32, i32
  }
  func.func @transform_4(%arg0: i32) -> (i32, i32) {
    %c0_i32 = arith.constant 0 : i32
    %c0_i32_0 = arith.constant 0 : i32
    %c0_i32_1 = arith.constant 0 : i32
    return %c0_i32, %c0_i32_0 : i32, i32
  }
  func.func @transform_5(%arg0: i32) -> (i32, i32) {
    %c0_i32 = arith.constant 0 : i32
    %c0_i32_0 = arith.constant 0 : i32
    %c0_i32_1 = arith.constant 0 : i32
    return %c0_i32, %c0_i32_0 : i32, i32
  }
  func.func @transform_6(%arg0: i32) -> (i32, i32) {
    %c0_i32 = arith.constant 0 : i32
    %c0_i32_0 = arith.constant 0 : i32
    return %arg0, %c0_i32 : i32, i32
  }
}

module attributes {stable_mosaic.version = 11 : i64} {
  func.func @_ffn_ln_kernel(%arg0: i32, %arg1: memref<16x32xbf16, #tpu.memory_space<vmem>>, %arg2: memref<32x64xbf16, #tpu.memory_space<vmem>>, %arg3: memref<1x64xf32, #tpu.memory_space<vmem>>, %arg4: memref<64x32xbf16, #tpu.memory_space<vmem>>, %arg5: memref<1x32xf32, #tpu.memory_space<vmem>>, %arg6: memref<1x32xf32, #tpu.memory_space<vmem>>, %arg7: memref<1x32xf32, #tpu.memory_space<vmem>>, %arg8: memref<16x32xbf16, #tpu.memory_space<vmem>>) attributes {dimension_semantics = [#tpu.dimension_semantics<parallel>], iteration_bounds = array<i64: 1>, scalar_prefetch = 0 : i64, scratch_operands = 0 : i64, tpu.core_type = #tpu.core_type<tc>, window_params = [{transform_indices = @transform_0, window_bounds = array<i64: 16, 32>}, {pipeline_mode = #tpu.pipeline_mode<synchronous>, transform_indices = @transform_1, window_bounds = array<i64: 32, 64>}, {pipeline_mode = #tpu.pipeline_mode<synchronous>, transform_indices = @transform_2, window_bounds = array<i64: 1, 64>}, {pipeline_mode = #tpu.pipeline_mode<synchronous>, transform_indices = @transform_3, window_bounds = array<i64: 64, 32>}, {pipeline_mode = #tpu.pipeline_mode<synchronous>, transform_indices = @transform_4, window_bounds = array<i64: 1, 32>}, {pipeline_mode = #tpu.pipeline_mode<synchronous>, transform_indices = @transform_5, window_bounds = array<i64: 1, 32>}, {pipeline_mode = #tpu.pipeline_mode<synchronous>, transform_indices = @transform_6, window_bounds = array<i64: 1, 32>}, {transform_indices = @transform_7, window_bounds = array<i64: 16, 32>}]} {
    %c0 = arith.constant 0 : index
    %c0_0 = arith.constant 0 : index
    %0 = vector.load %arg1[%c0, %c0_0] : memref<16x32xbf16, #tpu.memory_space<vmem>>, vector<16x32xbf16>
    %c0_1 = arith.constant 0 : index
    %c0_2 = arith.constant 0 : index
    %1 = vector.load %arg2[%c0_1, %c0_2] : memref<32x64xbf16, #tpu.memory_space<vmem>>, vector<32x64xbf16>
    %cst = arith.constant dense<0.000000e+00> : vector<16x64xf32>
    %2 = tpu.matmul %0, %1, %cst {dimension_numbers = #tpu.dot_dimension_numbers<[1], [0], [0], [1], [0, 0, 1, 1], [], []>} : vector<16x32xbf16>, vector<32x64xbf16>, vector<16x64xf32> -> vector<16x64xf32>
    %c0_3 = arith.constant 0 : index
    %c0_4 = arith.constant 0 : index
    %3 = vector.load %arg3[%c0_3, %c0_4] : memref<1x64xf32, #tpu.memory_space<vmem>>, vector<1x64xf32>
    %4 = vector.broadcast %3 : vector<1x64xf32> to vector<16x64xf32>
    %5 = arith.addf %2, %4 : vector<16x64xf32>
    %cst_5 = arith.constant 5.000000e-01 : f32
    %6 = vector.broadcast %cst_5 : f32 to vector<16x64xf32>
    %7 = arith.mulf %6, %5 : vector<16x64xf32>
    %cst_6 = arith.constant 4.471500e-02 : f32
    %8 = vector.broadcast %cst_6 : f32 to vector<16x64xf32>
    %9 = arith.mulf %8, %5 : vector<16x64xf32>
    %10 = arith.mulf %9, %5 : vector<16x64xf32>
    %11 = arith.mulf %10, %5 : vector<16x64xf32>
    %12 = arith.addf %5, %11 : vector<16x64xf32>
    %cst_7 = arith.constant 0.797884583 : f32
    %13 = vector.broadcast %cst_7 : f32 to vector<16x64xf32>
    %14 = arith.mulf %13, %12 : vector<16x64xf32>
    %15 = math.tanh %14 : vector<16x64xf32>
    %cst_8 = arith.constant 1.000000e+00 : f32
    %16 = vector.broadcast %cst_8 : f32 to vector<16x64xf32>
    %17 = arith.addf %16, %15 : vector<16x64xf32>
    %18 = arith.mulf %7, %17 : vector<16x64xf32>
    %19 = arith.truncf %18 : vector<16x64xf32> to vector<16x64xbf16>
    %c0_9 = arith.constant 0 : index
    %c0_10 = arith.constant 0 : index
    %20 = vector.load %arg4[%c0_9, %c0_10] : memref<64x32xbf16, #tpu.memory_space<vmem>>, vector<64x32xbf16>
    %cst_11 = arith.constant dense<0.000000e+00> : vector<16x32xf32>
    %21 = tpu.matmul %19, %20, %cst_11 {dimension_numbers = #tpu.dot_dimension_numbers<[1], [0], [0], [1], [0, 0, 1, 1], [], []>} : vector<16x64xbf16>, vector<64x32xbf16>, vector<16x32xf32> -> vector<16x32xf32>
    %c0_12 = arith.constant 0 : index
    %c0_13 = arith.constant 0 : index
    %22 = vector.load %arg5[%c0_12, %c0_13] : memref<1x32xf32, #tpu.memory_space<vmem>>, vector<1x32xf32>
    %23 = vector.broadcast %22 : vector<1x32xf32> to vector<16x32xf32>
    %24 = arith.addf %21, %23 : vector<16x32xf32>
    %25 = arith.extf %0 : vector<16x32xbf16> to vector<16x32xf32>
    %26 = arith.addf %24, %25 : vector<16x32xf32>
    %c0_14 = arith.constant 0 : index
    %c0_15 = arith.constant 0 : index
    %27 = vector.load %arg6[%c0_14, %c0_15] : memref<1x32xf32, #tpu.memory_space<vmem>>, vector<1x32xf32>
    %c0_16 = arith.constant 0 : index
    %c0_17 = arith.constant 0 : index
    %28 = vector.load %arg7[%c0_16, %c0_17] : memref<1x32xf32, #tpu.memory_space<vmem>>, vector<1x32xf32>
    %cst_18 = arith.constant dense<0.000000e+00> : vector<16xf32>
    %29 = vector.multi_reduction <add>, %26, %cst_18 [1] : vector<16x32xf32> to vector<16xf32>
    %30 = vector.shape_cast %29 : vector<16xf32> to vector<16x1xf32>
    %cst_19 = arith.constant 3.200000e+01 : f32
    %31 = vector.broadcast %cst_19 : f32 to vector<16x1xf32>
    %32 = arith.divf %30, %31 : vector<16x1xf32>
    %33 = vector.broadcast %32 : vector<16x1xf32> to vector<16x32xf32>
    %34 = arith.subf %26, %33 : vector<16x32xf32>
    %35 = arith.mulf %34, %34 : vector<16x32xf32>
    %cst_20 = arith.constant dense<0.000000e+00> : vector<16xf32>
    %36 = vector.multi_reduction <add>, %35, %cst_20 [1] : vector<16x32xf32> to vector<16xf32>
    %37 = vector.shape_cast %36 : vector<16xf32> to vector<16x1xf32>
    %cst_21 = arith.constant 3.200000e+01 : f32
    %38 = vector.broadcast %cst_21 : f32 to vector<16x1xf32>
    %39 = arith.divf %37, %38 : vector<16x1xf32>
    %40 = vector.broadcast %32 : vector<16x1xf32> to vector<16x32xf32>
    %41 = arith.subf %26, %40 : vector<16x32xf32>
    %cst_22 = arith.constant 9.99999996E-13 : f32
    %42 = vector.broadcast %cst_22 : f32 to vector<16x1xf32>
    %43 = arith.addf %39, %42 : vector<16x1xf32>
    %44 = math.rsqrt %43 : vector<16x1xf32>
    %45 = vector.broadcast %44 : vector<16x1xf32> to vector<16x32xf32>
    %46 = arith.mulf %41, %45 : vector<16x32xf32>
    %47 = vector.broadcast %27 : vector<1x32xf32> to vector<16x32xf32>
    %48 = arith.mulf %46, %47 : vector<16x32xf32>
    %49 = vector.broadcast %28 : vector<1x32xf32> to vector<16x32xf32>
    %50 = arith.addf %48, %49 : vector<16x32xf32>
    %51 = arith.truncf %50 : vector<16x32xf32> to vector<16x32xbf16>
    %c0_23 = arith.constant 0 : index
    %c0_24 = arith.constant 0 : index
    %52 = vector.load %arg8[%c0_23, %c0_24] : memref<16x32xbf16, #tpu.memory_space<vmem>>, vector<16x32xbf16>
    tpu.vector_store %arg8[%c0_23, %c0_24], %51 {strides = array<i32>} : memref<16x32xbf16, #tpu.memory_space<vmem>>, vector<16x32xbf16>,
    return
  }
  func.func @transform_0(%arg0: i32) -> (i32, i32) {
    %c0_i32 = arith.constant 0 : i32
    %c0_i32_0 = arith.constant 0 : i32
    return %arg0, %c0_i32 : i32, i32
  }
  func.func @transform_1(%arg0: i32) -> (i32, i32) {
    %c0_i32 = arith.constant 0 : i32
    %c0_i32_0 = arith.constant 0 : i32
    %c0_i32_1 = arith.constant 0 : i32
    return %c0_i32, %c0_i32_0 : i32, i32
  }
  func.func @transform_2(%arg0: i32) -> (i32, i32) {
    %c0_i32 = arith.constant 0 : i32
    %c0_i32_0 = arith.constant 0 : i32
    %c0_i32_1 = arith.constant 0 : i32
    return %c0_i32, %c0_i32_0 : i32, i32
  }
  func.func @transform_3(%arg0: i32) -> (i32, i32) {
    %c0_i32 = arith.constant 0 : i32
    %c0_i32_0 = arith.constant 0 : i32
    %c0_i32_1 = arith.constant 0 : i32
    return %c0_i32, %c0_i32_0 : i32, i32
  }
  func.func @transform_4(%arg0: i32) -> (i32, i32) {
    %c0_i32 = arith.constant 0 : i32
    %c0_i32_0 = arith.constant 0 : i32
    %c0_i32_1 = arith.constant 0 : i32
    return %c0_i32, %c0_i32_0 : i32, i32
  }
  func.func @transform_5(%arg0: i32) -> (i32, i32) {
    %c0_i32 = arith.constant 0 : i32
    %c0_i32_0 = arith.constant 0 : i32
    %c0_i32_1 = arith.constant 0 : i32
    return %c0_i32, %c0_i32_0 : i32, i32
  }
  func.func @transform_6(%arg0: i32) -> (i32, i32) {
    %c0_i32 = arith.constant 0 : i32
    %c0_i32_0 = arith.constant 0 : i32
    %c0_i32_1 = arith.constant 0 : i32
    return %c0_i32, %c0_i32_0 : i32, i32
  }
  func.func @transform_7(%arg0: i32) -> (i32, i32) {
    %c0_i32 = arith.constant 0 : i32
    %c0_i32_0 = arith.constant 0 : i32
    return %arg0, %c0_i32 : i32, i32
  }
}

module attributes {stable_mosaic.version = 11 : i64} {
  func.func @_tag_ce_kernel(%arg0: i32, %arg1: memref<16x32xbf16, #tpu.memory_space<vmem>>, %arg2: memref<32x128xbf16, #tpu.memory_space<vmem>>, %arg3: memref<1x128xf32, #tpu.memory_space<vmem>>, %arg4: memref<16x1xi32, #tpu.memory_space<vmem>>, %arg5: memref<16x5xf32, #tpu.memory_space<vmem>>, %arg6: memref<1x1xf32, #tpu.memory_space<vmem>>, %arg7: memref<1x1xf32, #tpu.memory_space<vmem>>, %arg8: memref<1x1xf32, #tpu.memory_space<vmem>>) attributes {dimension_semantics = [#tpu.dimension_semantics<arbitrary>], iteration_bounds = array<i64: 1>, scalar_prefetch = 0 : i64, scratch_operands = 2 : i64, tpu.core_type = #tpu.core_type<tc>, window_params = [{transform_indices = @transform_0, window_bounds = array<i64: 16, 32>}, {pipeline_mode = #tpu.pipeline_mode<synchronous>, transform_indices = @transform_1, window_bounds = array<i64: 32, 128>}, {pipeline_mode = #tpu.pipeline_mode<synchronous>, transform_indices = @transform_2, window_bounds = array<i64: 1, 128>}, {transform_indices = @transform_3, window_bounds = array<i64: 16, 1>}, {transform_indices = @transform_4, window_bounds = array<i64: 16, 5>}, {pipeline_mode = #tpu.pipeline_mode<synchronous>, transform_indices = @transform_5, window_bounds = array<i64: 1, 1>}]} {
    %c0_i32 = arith.constant 0 : i32
    %0 = arith.cmpi eq, %arg0, %c0_i32 : i32
    %1 = arith.extui %0 : i1 to i32
    %c0_i32_0 = arith.constant 0 : i32
    %2 = arith.cmpi ne, %1, %c0_i32_0 : i32
    scf.if %2 {
      %cst_29 = arith.constant 0.000000e+00 : f32
      %65 = vector.broadcast %cst_29 : f32 to vector<1x1xf32>
      %c0_30 = arith.constant 0 : index
      %c0_31 = arith.constant 0 : index
      %66 = vector.load %arg7[%c0_30, %c0_31] : memref<1x1xf32, #tpu.memory_space<vmem>>, vector<1x1xf32>
      tpu.vector_store %arg7[%c0_30, %c0_31], %65 {strides = array<i32>} : memref<1x1xf32, #tpu.memory_space<vmem>>, vector<1x1xf32>,
      %cst_32 = arith.constant 0.000000e+00 : f32
      %67 = vector.broadcast %cst_32 : f32 to vector<1x1xf32>
      %c0_33 = arith.constant 0 : index
      %c0_34 = arith.constant 0 : index
      %68 = vector.load %arg8[%c0_33, %c0_34] : memref<1x1xf32, #tpu.memory_space<vmem>>, vector<1x1xf32>
      tpu.vector_store %arg8[%c0_33, %c0_34], %67 {strides = array<i32>} : memref<1x1xf32, #tpu.memory_space<vmem>>, vector<1x1xf32>,
    } else {
    }
    %c0 = arith.constant 0 : index
    %c0_1 = arith.constant 0 : index
    %3 = vector.load %arg1[%c0, %c0_1] : memref<16x32xbf16, #tpu.memory_space<vmem>>, vector<16x32xbf16>
    %c0_2 = arith.constant 0 : index
    %c0_3 = arith.constant 0 : index
    %4 = vector.load %arg2[%c0_2, %c0_3] : memref<32x128xbf16, #tpu.memory_space<vmem>>, vector<32x128xbf16>
    %cst = arith.constant dense<0.000000e+00> : vector<16x128xf32>
    %5 = tpu.matmul %3, %4, %cst {dimension_numbers = #tpu.dot_dimension_numbers<[1], [0], [0], [1], [0, 0, 1, 1], [], []>} : vector<16x32xbf16>, vector<32x128xbf16>, vector<16x128xf32> -> vector<16x128xf32>
    %c0_4 = arith.constant 0 : index
    %c0_5 = arith.constant 0 : index
    %6 = vector.load %arg3[%c0_4, %c0_5] : memref<1x128xf32, #tpu.memory_space<vmem>>, vector<1x128xf32>
    %7 = vector.broadcast %6 : vector<1x128xf32> to vector<16x128xf32>
    %8 = arith.addf %5, %7 : vector<16x128xf32>
    %9 = tpu.iota {dimensions = array<i32: 1>} : vector<16x128xi32>
    %c5_i32 = arith.constant 5 : i32
    %10 = vector.broadcast %c5_i32 : i32 to vector<16x128xi32>
    %11 = arith.cmpi slt, %9, %10 : vector<16x128xi32>
    %cst_6 = arith.constant -1.000000e+30 : f32
    %12 = vector.broadcast %cst_6 : f32 to vector<16x128xf32>
    %13 = arith.select %11, %8, %12 : vector<16x128xi1>, vector<16x128xf32>
    %14 = vector.extract_strided_slice %8 {offsets = [0, 0], sizes = [16, 5], strides = [1, 1]} : vector<16x128xf32> to vector<16x5xf32>
    %c0_7 = arith.constant 0 : index
    %c0_8 = arith.constant 0 : index
    %15 = vector.load %arg5[%c0_7, %c0_8] : memref<16x5xf32, #tpu.memory_space<vmem>>, vector<16x5xf32>
    tpu.vector_store %arg5[%c0_7, %c0_8], %14 {strides = array<i32>} : memref<16x5xf32, #tpu.memory_space<vmem>>, vector<16x5xf32>,
    %c0_9 = arith.constant 0 : index
    %c0_10 = arith.constant 0 : index
    %16 = vector.load %arg4[%c0_9, %c0_10] : memref<16x1xi32, #tpu.memory_space<vmem>>, vector<16x1xi32>
    %17 = tpu.iota {dimensions = array<i32: 0>} : vector<16x1xi32>
    %c16_i32 = arith.constant 16 : i32
    %18 = arith.muli %arg0, %c16_i32 : i32
    %19 = vector.broadcast %18 : i32 to vector<16x1xi32>
    %20 = arith.addi %17, %19 : vector<16x1xi32>
    %c-100_i32 = arith.constant -100 : i32
    %21 = vector.broadcast %c-100_i32 : i32 to vector<16x1xi32>
    %22 = arith.cmpi ne, %16, %21 : vector<16x1xi32>
    %c16_i32_11 = arith.constant 16 : i32
    %23 = vector.broadcast %c16_i32_11 : i32 to vector<16x1xi32>
    %24 = arith.cmpi slt, %20, %23 : vector<16x1xi32>
    %25 = arith.andi %22, %24 : vector<16x1xi1>
    %cst_12 = arith.constant dense<0xFF800000> : vector<16xf32>
    %26 = vector.multi_reduction <maximumf>, %13, %cst_12 [1] : vector<16x128xf32> to vector<16xf32>
    %27 = vector.shape_cast %26 : vector<16xf32> to vector<16x1xf32>
    %28 = vector.broadcast %27 : vector<16x1xf32> to vector<16x128xf32>
    %29 = arith.subf %13, %28 : vector<16x128xf32>
    %30 = math.exp %29 : vector<16x128xf32>
    %cst_13 = arith.constant dense<0.000000e+00> : vector<16xf32>
    %31 = vector.multi_reduction <add>, %30, %cst_13 [1] : vector<16x128xf32> to vector<16xf32>
    %32 = vector.shape_cast %31 : vector<16xf32> to vector<16x1xf32>
    %33 = math.log %32 : vector<16x1xf32>
    %34 = arith.addf %33, %27 : vector<16x1xf32>
    %35 = vector.broadcast %16 : vector<16x1xi32> to vector<16x128xi32>
    %36 = arith.cmpi eq, %9, %35 : vector<16x128xi32>
    %cst_14 = arith.constant 0.000000e+00 : f32
    %37 = vector.broadcast %cst_14 : f32 to vector<16x128xf32>
    %38 = arith.select %36, %13, %37 : vector<16x128xi1>, vector<16x128xf32>
    %cst_15 = arith.constant dense<0.000000e+00> : vector<16xf32>
    %39 = vector.multi_reduction <add>, %38, %cst_15 [1] : vector<16x128xf32> to vector<16xf32>
    %40 = vector.shape_cast %39 : vector<16xf32> to vector<16x1xf32>
    %41 = arith.subf %34, %40 : vector<16x1xf32>
    %cst_16 = arith.constant 0.000000e+00 : f32
    %42 = vector.broadcast %cst_16 : f32 to vector<16x1xf32>
    %43 = arith.select %25, %41, %42 : vector<16x1xi1>, vector<16x1xf32>
    %c0_17 = arith.constant 0 : index
    %c0_18 = arith.constant 0 : index
    %44 = vector.load %arg7[%c0_17, %c0_18] : memref<1x1xf32, #tpu.memory_space<vmem>>, vector<1x1xf32>
    %45 = vector.shape_cast %43 : vector<16x1xf32> to vector<1x16x1xf32>
    %cst_19 = arith.constant dense<0.000000e+00> : vector<1xf32>
    %46 = vector.multi_reduction <add>, %45, %cst_19 [1, 2] : vector<1x16x1xf32> to vector<1xf32>
    %47 = vector.shape_cast %46 : vector<1xf32> to vector<1x1x1xf32>
    %48 = vector.extract %47[0, 0, 0] : f32 from vector<1x1x1xf32>
    %49 = vector.broadcast %48 : f32 to vector<1x1xf32>
    %50 = arith.addf %44, %49 : vector<1x1xf32>
    %c0_20 = arith.constant 0 : index
    %c0_21 = arith.constant 0 : index
    %51 = vector.load %arg7[%c0_20, %c0_21] : memref<1x1xf32, #tpu.memory_space<vmem>>, vector<1x1xf32>
    tpu.vector_store %arg7[%c0_20, %c0_21], %50 {strides = array<i32>} : memref<1x1xf32, #tpu.memory_space<vmem>>, vector<1x1xf32>,
    %c0_22 = arith.constant 0 : index
    %c0_23 = arith.constant 0 : index
    %52 = vector.load %arg8[%c0_22, %c0_23] : memref<1x1xf32, #tpu.memory_space<vmem>>, vector<1x1xf32>
    %53 = arith.extui %25 : vector<16x1xi1> to vector<16x1xi32>
    %54 = arith.sitofp %53 : vector<16x1xi32> to vector<16x1xf32>
    %55 = vector.shape_cast %54 : vector<16x1xf32> to vector<1x16x1xf32>
    %cst_24 = arith.constant dense<0.000000e+00> : vector<1xf32>
    %56 = vector.multi_reduction <add>, %55, %cst_24 [1, 2] : vector<1x16x1xf32> to vector<1xf32>
    %57 = vector.shape_cast %56 : vector<1xf32> to vector<1x1x1xf32>
    %58 = vector.extract %57[0, 0, 0] : f32 from vector<1x1x1xf32>
    %59 = vector.broadcast %58 : f32 to vector<1x1xf32>
    %60 = arith.addf %52, %59 : vector<1x1xf32>
    %c0_25 = arith.constant 0 : index
    %c0_26 = arith.constant 0 : index
    %61 = vector.load %arg8[%c0_25, %c0_26] : memref<1x1xf32, #tpu.memory_space<vmem>>, vector<1x1xf32>
    tpu.vector_store %arg8[%c0_25, %c0_26], %60 {strides = array<i32>} : memref<1x1xf32, #tpu.memory_space<vmem>>, vector<1x1xf32>,
    %c0_i32_27 = arith.constant 0 : i32
    %62 = arith.cmpi eq, %arg0, %c0_i32_27 : i32
    %63 = arith.extui %62 : i1 to i32
    %c0_i32_28 = arith.constant 0 : i32
    %64 = arith.cmpi ne, %63, %c0_i32_28 : i32
    scf.if %64 {
      %c0_29 = arith.constant 0 : index
      %c0_30 = arith.constant 0 : index
      %65 = vector.load %arg7[%c0_29, %c0_30] : memref<1x1xf32, #tpu.memory_space<vmem>>, vector<1x1xf32>
      %c0_31 = arith.constant 0 : index
      %c0_32 = arith.constant 0 : index
      %66 = vector.load %arg8[%c0_31, %c0_32] : memref<1x1xf32, #tpu.memory_space<vmem>>, vector<1x1xf32>
      %cst_33 = arith.constant 1.000000e+00 : f32
      %67 = vector.broadcast %cst_33 : f32 to vector<1x1xf32>
      %68 = arith.maximumf %66, %67 : vector<1x1xf32>
      %69 = arith.divf %65, %68 : vector<1x1xf32>
      %c0_34 = arith.constant 0 : index
      %c0_35 = arith.constant 0 : index
      %70 = vector.load %arg6[%c0_34, %c0_35] : memref<1x1xf32, #tpu.memory_space<vmem>>, vector<1x1xf32>
      tpu.vector_store %arg6[%c0_34, %c0_35], %69 {strides = array<i32>} : memref<1x1xf32, #tpu.memory_space<vmem>>, vector<1x1xf32>,
    } else {
    }
    return
  }
  func.func @transform_0(%arg0: i32) -> (i32, i32) {
    %c0_i32 = arith.constant 0 : i32
    %c0_i32_0 = arith.constant 0 : i32
    return %arg0, %c0_i32 : i32, i32
  }
  func.func @transform_1(%arg0: i32) -> (i32, i32) {
    %c0_i32 = arith.constant 0 : i32
    %c0_i32_0 = arith.constant 0 : i32
    %c0_i32_1 = arith.constant 0 : i32
    return %c0_i32, %c0_i32_0 : i32, i32
  }
  func.func @transform_2(%arg0: i32) -> (i32, i32) {
    %c0_i32 = arith.constant 0 : i32
    %c0_i32_0 = arith.constant 0 : i32
    %c0_i32_1 = arith.constant 0 : i32
    return %c0_i32, %c0_i32_0 : i32, i32
  }
  func.func @transform_3(%arg0: i32) -> (i32, i32) {
    %c0_i32 = arith.constant 0 : i32
    %c0_i32_0 = arith.constant 0 : i32
    return %arg0, %c0_i32 : i32, i32
  }
  func.func @transform_4(%arg0: i32) -> (i32, i32) {
    %c0_i32 = arith.constant 0 : i32
    %c0_i32_0 = arith.constant 0 : i32
    return %arg0, %c0_i32 : i32, i32
  }
  func.func @transform_5(%arg0: i32) -> (i32, i32) {
    %c0_i32 = arith.constant 0 : i32
    %c0_i32_0 = arith.constant 0 : i32
    %c0_i32_1 = arith.constant 0 : i32
    return %c0_i32, %c0_i32_0 : i32, i32
  }
}

</mosaic_0001>

<llo_original>
// kernel: ner_bert_forward.10
$region0: #{ner_bert_forward.10}
  #allocation0 [shape = 'u32[]', space=smem, size = 0x4, offset = 0x4, fixed_abs, tag = 'smem constant byte address 0x4 - core index']
  #allocation1 [shape = 'u32[144,128]{1,0:T(1,128)}', space=vmem, size = 0x12000, scoped, tag = 'internal scratch']
  %s0 = inlined_call_operand.hbm [shape: f32[16,32], index: 0, kind: input, shape index: {}]
  %s1 = inlined_call_operand.hbm [shape: f32[1,32], index: 1, kind: input, shape index: {}]
  %s2 = inlined_call_operand.hbm [shape: f32[1,32], index: 2, kind: input, shape index: {}]
  %s3 = inlined_call_operand.hbm [shape: bf16[16,32], index: 3, kind: output, shape index: {}]
  %s4 = sld [smem:[#allocation0]]
  $region34: #{ner_bert_forward.10} parent=0
    _
  %s6 = ssub.s32 1, %s4
  %s7 = scalar_select 0, %s6, %s4
  $region1: #{ner_bert_forward.10} parent=0
    #allocation2 [shape = 'u8[8192]{0}', space=vmem, size = 0x2000, scoped, tag = 'input window, operand 0, single buffered']
    #allocation3 [shape = 's32[1]{0}', space=sflag, size = 0x4, scoped, tag = 'scoped memory for ner_bert_forward.10']
    #allocation4 [shape = 's32[1]{0}', space=sflag, size = 0x4, scoped, tag = 'scoped memory for ner_bert_forward.10']
    #allocation5 [shape = 'u8[512]{0}', space=vmem, size = 0x400, scoped, tag = 'input window, operand 1, single buffered']
    #allocation6 [shape = 's32[1]{0}', space=sflag, size = 0x4, scoped, tag = 'scoped memory for ner_bert_forward.10']
    #allocation7 [shape = 'u8[512]{0}', space=vmem, size = 0x400, scoped, tag = 'input window, operand 2, single buffered']
    #allocation8 [shape = 'u8[4096]{0}', space=vmem, size = 0x1000, scoped, tag = 'output window, operand 0, single buffered']
    %8 = vsyncpa [#allocation3], 0
    %9 = vsyncpa [#allocation6], 0
    %10 = vsyncpa [#allocation4], 0
    // Predicated region
    $region2: #{ner_bert_forward.10} parent=1 // pred_check
      _
    $region3: #{ner_bert_forward.10} parent=1 // pred_check_branch
      %12 = sbr.rel (0) target = $region5
    $region4: #{ner_bert_forward.10} parent=1 // pred_region
      %s14 = ssub.s32 256, 256
      %15 = vsyncadd [#allocation3], %s14
      %s16 = sshll.u32 [#allocation2], 4
      %s17 = int_to_ptr.vmem [resolvable:$true] %s16
      %22 = dma.hbm_to_vmem [thread:$0]  %s0, 256, %s17, [#allocation3], 128, 128, 8
    $region5: #{ner_bert_forward.10} parent=1 // pred_fallthru
      _
    // Predicated region
    $region6: #{ner_bert_forward.10} parent=1 // pred_check
      _
    $region7: #{ner_bert_forward.10} parent=1 // pred_check_branch
      %24 = sbr.rel (0) target = $region9
    $region8: #{ner_bert_forward.10} parent=1 // pred_region
      %s26 = ssub.s32 16, 16
      %27 = vsyncadd [#allocation6], %s26
      %s29 = sshll.u32 [#allocation5], 4
      %s30 = int_to_ptr.vmem [resolvable:$true] %s29
      %32 = dma.hbm_to_vmem [thread:$0]  %s1, 16, %s30, [#allocation6]
    $region9: #{ner_bert_forward.10} parent=1 // pred_fallthru
      _
    // Predicated region
    $region10: #{ner_bert_forward.10} parent=1 // pred_check
      _
    $region11: #{ner_bert_forward.10} parent=1 // pred_check_branch
      %34 = sbr.rel (0) target = $region13
    $region12: #{ner_bert_forward.10} parent=1 // pred_region
      %s36 = ssub.s32 16, 16
      %37 = vsyncadd [#allocation6], %s36
      %s39 = sshll.u32 [#allocation7], 4
      %s40 = int_to_ptr.vmem [resolvable:$true] %s39
      %42 = dma.hbm_to_vmem [thread:$0]  %s2, 16, %s40, [#allocation6]
    $region13: #{ner_bert_forward.10} parent=1 // pred_fallthru
      _
    // Predicated region
    $region14: #{ner_bert_forward.10} parent=1 // pred_check
      _
    $region15: #{ner_bert_forward.10} parent=1 // pred_check_branch
      %44 = sbr.rel (0) target = $region17
    $region16: #{ner_bert_forward.10} parent=1 // pred_region
      %45 = dma.done [#allocation3], 256
    $region17: #{ner_bert_forward.10} parent=1 // pred_fallthru
      _
    // Predicated region
    $region18: #{ner_bert_forward.10} parent=1 // pred_check
      _
    $region19: #{ner_bert_forward.10} parent=1 // pred_check_branch
      %47 = sbr.rel (0) target = $region21
    $region20: #{ner_bert_forward.10} parent=1 // pred_region
      %48 = dma.done [#allocation6], 16
    $region21: #{ner_bert_forward.10} parent=1 // pred_fallthru
      _
    // Predicated region
    $region22: #{ner_bert_forward.10} parent=1 // pred_check
      _
    $region23: #{ner_bert_forward.10} parent=1 // pred_check_branch
      %50 = sbr.rel (0) target = $region25
    $region24: #{ner_bert_forward.10} parent=1 // pred_region
      %51 = dma.done [#allocation6], 16
    $region25: #{ner_bert_forward.10} parent=1 // pred_fallthru
      _
    %v52 = vld [vmem:[#allocation2] sm:$0xff]
    %v53 = vld [vmem:[#allocation2 + $0x8] sm:$0xff]
    %v54 = vld [vmem:[#allocation5] sm:$0x1]
    %v55 = vld [vmem:[#allocation7] sm:$0x1]
    %vm56 = vcmask 261120
    %v57 = vsel %vm56, %v52, 0.0
    %58 = vadd.xlane.f32.xlu0 %v57
    %v59 = vpop.xlane.xlu0 %58
    %v60 = vsel %vm56, %v53, 0.0
    %61 = vadd.xlane.f32.xlu0 %v60
    %v62 = vpop.xlane.xlu0 %61
    %v63 = vrcp.pop 32.0
    %v64 = vmul.f32 %v59, %v63
    %v65 = vmul.f32 %v62, %v63
    %v66 = vsub.f32 %v52, %v64
    %v67 = vsub.f32 %v53, %v65
    %v68 = vmul.f32 %v66, %v66
    %v69 = vmul.f32 %v67, %v67
    %v70 = vsel %vm56, %v68, 0.0
    %71 = vadd.xlane.f32.xlu0 %v70
    %v72 = vpop.xlane.xlu0 %71
    %v73 = vsel %vm56, %v69, 0.0
    %74 = vadd.xlane.f32.xlu0 %v73
    %v75 = vpop.xlane.xlu0 %74
    %v76 = vmul.f32 %v72, %v63
    %v77 = vmul.f32 %v75, %v63
    %v78 = vadd.f32 %v76, 1e-12
    %v79 = vadd.f32 %v77, 1e-12
    %v80 = vrsqrt.pop %v78
    %v81 = vrsqrt.pop %v79
    %v82 = vmul.f32 %v66, %v80
    %v83 = vmul.f32 %v67, %v81
    %v85 = vlaneseq
    %v86 = vshrl.u32 %v85, 7
    %v87 = vsub.s32 0, %v86
    %v88 = vrot.slane %v54, %v87
    %v90 = vmul.f32 %v82, %v88
    %v91 = vmul.f32 %v83, %v88
    %v93 = vlaneseq
    %v94 = vshrl.u32 %v93, 7
    %v95 = vsub.s32 0, %v94
    %v96 = vrot.slane %v55, %v95
    %v98 = vadd.f32 %v90, %v96
    %v99 = vadd.f32 %v91, %v96
    %v100 = vpack.c.bf16 %v99, %v98
    %v102 = vunpack.c.l.b16 %v100
    %v103 = vunpack.c.h.b16 %v100
    %v104 = vpack.c.b16 %v102, %v102
    %v105 = vpack.c.b16 %v103, %v103
    %vm108 = vcmask 257024
    %109 = vst.msk [vmem:[#allocation8] sm:$0xf] %vm108, %v104
    %110 = vst.msk [vmem:[#allocation8 + $0x4] sm:$0xf] %vm108, %v105
    // Predicated region
    $region26: #{ner_bert_forward.10} parent=1 // pred_check
      _
    $region27: #{ner_bert_forward.10} parent=1 // pred_check_branch
      %112 = sbr.rel (0) target = $region29
    $region28: #{ner_bert_forward.10} parent=1 // pred_region
      %s114 = ssub.s32 128, 128
      %115 = vsyncadd [#allocation4], %s114
      %s116 = sshll.u32 [#allocation8], 4
      %s117 = int_to_ptr.vmem [resolvable:$true] %s116
      %122 = dma.vmem_to_hbm [thread:$0]  %s117, 128, %s3, [#allocation4], 64, 64, 4
    $region29: #{ner_bert_forward.10} parent=1 // pred_fallthru
      _
    // Predicated region
    $region30: #{ner_bert_forward.10} parent=1 // pred_check
      _
    $region31: #{ner_bert_forward.10} parent=1 // pred_check_branch
      %124 = sbr.rel (0) target = $region33
    $region32: #{ner_bert_forward.10} parent=1 // pred_region
      %125 = dma.done [#allocation4], 128
    $region33: #{ner_bert_forward.10} parent=1 // pred_fallthru
      _
    %126 = vsyncpa [#allocation3], 1
    %127 = vsyncpa [#allocation6], 1
    %128 = vsyncpa [#allocation4], 1

// kernel: ner_bert_forward.11
$region0: #{ner_bert_forward.11}
  #allocation0 [shape = 'u32[]', space=smem, size = 0x4, offset = 0x4, fixed_abs, tag = 'smem constant byte address 0x4 - core index']
  #allocation1 [shape = 'u32[144,128]{1,0:T(1,128)}', space=vmem, size = 0x12000, scoped, tag = 'internal scratch']
  %s0 = inlined_call_operand.hbm [shape: bf16[16,32], index: 0, kind: input, shape index: {}]
  %s1 = inlined_call_operand.hbm [shape: bf16[32,96], index: 1, kind: input, shape index: {}]
  %s2 = inlined_call_operand.hbm [shape: f32[1,96], index: 2, kind: input, shape index: {}]
  %s3 = inlined_call_operand.hbm [shape: bf16[16,96], index: 3, kind: output, shape index: {}]
  %s4 = sld [smem:[#allocation0]]
  $region34: #{ner_bert_forward.11} parent=0
    _
  %s6 = ssub.s32 1, %s4
  %s7 = scalar_select 0, %s6, %s4
  $region1: #{ner_bert_forward.11} parent=0
    #allocation2 [shape = 'u8[4096]{0}', space=vmem, size = 0x1000, scoped, tag = 'input window, operand 0, single buffered']
    #allocation3 [shape = 's32[1]{0}', space=sflag, size = 0x4, scoped, tag = 'scoped memory for ner_bert_forward.11']
    #allocation4 [shape = 's32[1]{0}', space=sflag, size = 0x4, scoped, tag = 'scoped memory for ner_bert_forward.11']
    #allocation5 [shape = 'u8[8192]{0}', space=vmem, size = 0x2000, scoped, tag = 'input window, operand 1, single buffered']
    #allocation6 [shape = 's32[1]{0}', space=sflag, size = 0x4, scoped, tag = 'scoped memory for ner_bert_forward.11']
    #allocation7 [shape = 'u8[512]{0}', space=vmem, size = 0x400, scoped, tag = 'input window, operand 2, single buffered']
    #allocation8 [shape = 'u8[4096]{0}', space=vmem, size = 0x1000, scoped, tag = 'output window, operand 0, single buffered']
    %8 = vsyncpa [#allocation3], 0
    %9 = vsyncpa [#allocation6], 0
    %10 = vsyncpa [#allocation4], 0
    // Predicated region
    $region2: #{ner_bert_forward.11} parent=1 // pred_check
      _
    $region3: #{ner_bert_forward.11} parent=1 // pred_check_branch
      %12 = sbr.rel (0) target = $region5
    $region4: #{ner_bert_forward.11} parent=1 // pred_region
      %s14 = ssub.s32 128, 128
      %15 = vsyncadd [#allocation3], %s14
      %s16 = sshll.u32 [#allocation2], 4
      %s17 = int_to_ptr.vmem [resolvable:$true] %s16
      %22 = dma.hbm_to_vmem [thread:$0]  %s0, 128, %s17, [#allocation3], 64, 64, 4
    $region5: #{ner_bert_forward.11} parent=1 // pred_fallthru
      _
    // Predicated region
    $region6: #{ner_bert_forward.11} parent=1 // pred_check
      _
    $region7: #{ner_bert_forward.11} parent=1 // pred_check_branch
      %24 = sbr.rel (0) target = $region9
    $region8: #{ner_bert_forward.11} parent=1 // pred_region
      %s26 = ssub.s32 256, 256
      %27 = vsyncadd [#allocation6], %s26
      %s28 = sshll.u32 [#allocation5], 4
      %s29 = int_to_ptr.vmem [resolvable:$true] %s28
      %34 = dma.hbm_to_vmem [thread:$0]  %s1, 256, %s29, [#allocation6], 64, 64, 4
    $region9: #{ner_bert_forward.11} parent=1 // pred_fallthru
      _
    // Predicated region
    $region10: #{ner_bert_forward.11} parent=1 // pred_check
      _
    $region11: #{ner_bert_forward.11} parent=1 // pred_check_branch
      %36 = sbr.rel (0) target = $region13
    $region12: #{ner_bert_forward.11} parent=1 // pred_region
      %s38 = ssub.s32 16, 16
      %39 = vsyncadd [#allocation6], %s38
      %s41 = sshll.u32 [#allocation7], 4
      %s42 = int_to_ptr.vmem [resolvable:$true] %s41
      %44 = dma.hbm_to_vmem [thread:$0]  %s2, 16, %s42, [#allocation6]
    $region13: #{ner_bert_forward.11} parent=1 // pred_fallthru
      _
    // Predicated region
    $region14: #{ner_bert_forward.11} parent=1 // pred_check
      _
    $region15: #{ner_bert_forward.11} parent=1 // pred_check_branch
      %46 = sbr.rel (0) target = $region17
    $region16: #{ner_bert_forward.11} parent=1 // pred_region
      %47 = dma.done [#allocation3], 128
    $region17: #{ner_bert_forward.11} parent=1 // pred_fallthru
      _
    // Predicated region
    $region18: #{ner_bert_forward.11} parent=1 // pred_check
      _
    $region19: #{ner_bert_forward.11} parent=1 // pred_check_branch
      %49 = sbr.rel (0) target = $region21
    $region20: #{ner_bert_forward.11} parent=1 // pred_region
      %50 = dma.done [#allocation6], 256
    $region21: #{ner_bert_forward.11} parent=1 // pred_fallthru
      _
    // Predicated region
    $region22: #{ner_bert_forward.11} parent=1 // pred_check
      _
    $region23: #{ner_bert_forward.11} parent=1 // pred_check_branch
      %52 = sbr.rel (0) target = $region25
    $region24: #{ner_bert_forward.11} parent=1 // pred_region
      %53 = dma.done [#allocation6], 16
    $region25: #{ner_bert_forward.11} parent=1 // pred_fallthru
      _
    %v55 = vld [vmem:[#allocation2] sm:$0xf]
    %v56 = vld [vmem:[#allocation2 + $0x4] sm:$0xf]
    %v57 = vld [vmem:[#allocation5] sm:$0xf]
    %v58 = vld [vmem:[#allocation5 + $0x4] sm:$0xf]
    %v59 = vld [vmem:[#allocation5 + $0x8] sm:$0xf]
    %v60 = vld [vmem:[#allocation5 + $0xc] sm:$0xf]
    %v61 = vld [vmem:[#allocation7] sm:$0x1]
    %v63 = vlaneseq
    %v64 = vshrl.u32 %v63, 7
    %v65 = vsub.s32 0, %v64
    %v66 = vrot.slane %v61, %v65
    %v70 = vunpack.c.l.b16 %v55
    %v71 = vunpack.c.l.b16 %v56
    %v72 = vpack.c.b16 %v71, %v70
    %v77 = vunpack.c.l.b16 %v57
    %v78 = vunpack.c.l.b16 %v58
    %v79 = vunpack.c.l.b16 %v59
    %v80 = vunpack.c.l.b16 %v60
    %v81 = vpack.c.b16 %v78, %v77
    %v82 = vpack.c.b16 %v80, %v79
    %vm85 = vcmask 261120
    %v87 = vsel %vm85, %v72, 0
    %89 = vmatprep.subr.bf16.mxu0 0
    %90 = vmatpush1.bf16.msra.mxu0 %v81
    %91 = vmatprep.subr.bf16.mxu0 0
    %92 = vmatpush1.bf16.msra.mxu0 %v82
    %93 = vmatprep.subr.bf16.mxu0 0
    %94 = vmatpush1.bf16.msra.mxu0 0
    %95 = vmatprep.subr.bf16.mxu0 0
    %96 = vmatpush1.bf16.msra.mxu0 0
    %97 = vmatprep.subr.bf16.mxu0 0
    %98 = vmatpush1.bf16.msra.mxu0 0
    %99 = vmatprep.subr.bf16.mxu0 0
    %100 = vmatpush1.bf16.msra.mxu0 0
    %101 = vmatprep.subr.bf16.mxu0 0
    %102 = vmatpush1.bf16.msra.mxu0 0
    %103 = vmatprep.subr.bf16.mxu0 0
    %104 = vmatpush1.bf16.msra.mxu0 0
    %105 = vmatprep.subr.bf16.mxu0 0
    %106 = vmatpush1.bf16.msra.mxu0 0
    %107 = vmatprep.subr.bf16.mxu0 0
    %108 = vmatpush1.bf16.msra.mxu0 0
    %109 = vmatprep.subr.bf16.mxu0 0
    %110 = vmatpush1.bf16.msra.mxu0 0
    %111 = vmatprep.subr.bf16.mxu0 0
    %112 = vmatpush1.bf16.msra.mxu0 0
    %113 = vmatprep.subr.bf16.mxu0 0
    %114 = vmatpush1.bf16.msra.mxu0 0
    %115 = vmatprep.subr.bf16.mxu0 0
    %116 = vmatpush1.bf16.msra.mxu0 0
    %117 = vmatprep.subr.bf16.mxu0 0
    %118 = vmatpush1.bf16.msra.mxu0 0
    %119 = vmatprep.subr.bf16.mxu0 0
    %120 = vmatpush1.bf16.msra.mxu0 0
    %121 = vmatprep.mubr.bf16.mxu0 0
    %122 = vmatmul.mubr.bf16.gmra.mrb[0].mxu0 %v87
    %v123 = vpop.f32.mrb[0].mxu0
    %v124 = vadd.f32 %v66, %v123
    %v125 = vpop.f32.mrb[0].mxu0
    %v126 = vpop.f32.mrb[0].mxu0
    %v127 = vadd.f32 %v66, %v126
    %v128 = vpop.f32.mrb[0].mxu0
    %129 = vdwg.mxu0
    %v130 = vpack.c.bf16 %v127, %v124
    %v132 = vunpack.c.l.b16 %v130
    %v133 = vunpack.c.h.b16 %v130
    %v134 = vpack.c.b16 %v132, %v132
    %v135 = vpack.c.b16 %v133, %v133
    %vm138 = vcmask 781312
    %139 = vst.msk [vmem:[#allocation8] sm:$0xf] %vm138, %v134
    %140 = vst.msk [vmem:[#allocation8 + $0x4] sm:$0xf] %vm138, %v135
    // Predicated region
    $region26: #{ner_bert_forward.11} parent=1 // pred_check
      _
    $region27: #{ner_bert_forward.11} parent=1 // pred_check_branch
      %142 = sbr.rel (0) target = $region29
    $region28: #{ner_bert_forward.11} parent=1 // pred_region
      %s144 = ssub.s32 128, 128
      %145 = vsyncadd [#allocation4], %s144
      %s146 = sshll.u32 [#allocation8], 4
      %s147 = int_to_ptr.vmem [resolvable:$true] %s146
      %152 = dma.vmem_to_hbm [thread:$0]  %s147, 128, %s3, [#allocation4], 64, 64, 4
    $region29: #{ner_bert_forward.11} parent=1 // pred_fallthru
      _
    // Predicated region
    $region30: #{ner_bert_forward.11} parent=1 // pred_check
      _
    $region31: #{ner_bert_forward.11} parent=1 // pred_check_branch
      %154 = sbr.rel (0) target = $region33
    $region32: #{ner_bert_forward.11} parent=1 // pred_region
      %155 = dma.done [#allocation4], 128
    $region33: #{ner_bert_forward.11} parent=1 // pred_fallthru
      _
    %156 = vsyncpa [#allocation3], 1
    %157 = vsyncpa [#allocation6], 1
    %158 = vsyncpa [#allocation4], 1

// kernel: ner_bert_forward.13
$region0: #{ner_bert_forward.13}
  #allocation0 [shape = 'u32[]', space=smem, size = 0x4, offset = 0x4, fixed_abs, tag = 'smem constant byte address 0x4 - core index']
  #allocation1 [shape = 'u32[144,128]{1,0:T(1,128)}', space=vmem, size = 0x12000, scoped, tag = 'internal scratch']
  %s0 = inlined_call_operand.hbm [shape: bf16[16,32], index: 0, kind: input, shape index: {}]
  %s1 = inlined_call_operand.hbm [shape: bf16[16,32], index: 1, kind: input, shape index: {}]
  %s2 = inlined_call_operand.hbm [shape: bf16[32,32], index: 2, kind: input, shape index: {}]
  %s3 = inlined_call_operand.hbm [shape: f32[1,32], index: 3, kind: input, shape index: {}]
  %s4 = inlined_call_operand.hbm [shape: f32[1,32], index: 4, kind: input, shape index: {}]
  %s5 = inlined_call_operand.hbm [shape: f32[1,32], index: 5, kind: input, shape index: {}]
  %s6 = inlined_call_operand.hbm [shape: bf16[16,32], index: 6, kind: output, shape index: {}]
  %s7 = sld [smem:[#allocation0]]
  $region58: #{ner_bert_forward.13} parent=0
    _
  %s9 = ssub.s32 1, %s7
  %s10 = scalar_select 0, %s9, %s7
  $region1: #{ner_bert_forward.13} parent=0
    #allocation2 [shape = 'u8[4096]{0}', space=vmem, size = 0x1000, scoped, tag = 'input window, operand 0, single buffered']
    #allocation3 [shape = 's32[1]{0}', space=sflag, size = 0x4, scoped, tag = 'scoped memory for ner_bert_forward.13']
    #allocation4 [shape = 's32[1]{0}', space=sflag, size = 0x4, scoped, tag = 'scoped memory for ner_bert_forward.13']
    #allocation5 [shape = 'u8[4096]{0}', space=vmem, size = 0x1000, scoped, tag = 'input window, operand 1, single buffered']
    #allocation6 [shape = 's32[1]{0}', space=sflag, size = 0x4, scoped, tag = 'scoped memory for ner_bert_forward.13']
    #allocation7 [shape = 'u8[8192]{0}', space=vmem, size = 0x2000, scoped, tag = 'input window, operand 2, single buffered']
    #allocation8 [shape = 'u8[512]{0}', space=vmem, size = 0x400, scoped, tag = 'input window, operand 3, single buffered']
    #allocation9 [shape = 's32[1]{0}', space=sflag, size = 0x4, scoped, tag = 'scoped memory for ner_bert_forward.13']
    #allocation10 [shape = 'u8[512]{0}', space=vmem, size = 0x400, scoped, tag = 'input window, operand 4, single buffered']
    #allocation11 [shape = 'u8[512]{0}', space=vmem, size = 0x400, scoped, tag = 'input window, operand 5, single buffered']
    #allocation12 [shape = 's32[1]{0}', space=sflag, size = 0x4, scoped, tag = 'scoped memory for ner_bert_forward.13']
    #allocation13 [shape = 'u8[4096]{0}', space=vmem, size = 0x1000, scoped, tag = 'output window, operand 0, single buffered']
    %11 = vsyncpa [#allocation3], 0
    %12 = vsyncpa [#allocation6], 0
    %13 = vsyncpa [#allocation9], 0
    %14 = vsyncpa [#allocation12], 0
    %15 = vsyncpa [#allocation4], 0
    // Predicated region
    $region2: #{ner_bert_forward.13} parent=1 // pred_check
      _
    $region3: #{ner_bert_forward.13} parent=1 // pred_check_branch
      %17 = sbr.rel (0) target = $region5
    $region4: #{ner_bert_forward.13} parent=1 // pred_region
      %s19 = ssub.s32 128, 128
      %20 = vsyncadd [#allocation3], %s19
      %s21 = sshll.u32 [#allocation2], 4
      %s22 = int_to_ptr.vmem [resolvable:$true] %s21
      %27 = dma.hbm_to_vmem [thread:$0]  %s0, 128, %s22, [#allocation3], 64, 64, 4
    $region5: #{ner_bert_forward.13} parent=1 // pred_fallthru
      _
    // Predicated region
    $region6: #{ner_bert_forward.13} parent=1 // pred_check
      _
    $region7: #{ner_bert_forward.13} parent=1 // pred_check_branch
      %29 = sbr.rel (0) target = $region9
    $region8: #{ner_bert_forward.13} parent=1 // pred_region
      %s31 = ssub.s32 128, 128
      %32 = vsyncadd [#allocation6], %s31
      %s33 = sshll.u32 [#allocation5], 4
      %s34 = int_to_ptr.vmem [resolvable:$true] %s33
      %39 = dma.hbm_to_vmem [thread:$0]  %s1, 128, %s34, [#allocation6], 64, 64, 4
    $region9: #{ner_bert_forward.13} parent=1 // pred_fallthru
      _
    // Predicated region
    $region10: #{ner_bert_forward.13} parent=1 // pred_check
      _
    $region11: #{ner_bert_forward.13} parent=1 // pred_check_branch
      %41 = sbr.rel (0) target = $region13
    $region12: #{ner_bert_forward.13} parent=1 // pred_region
      %s43 = ssub.s32 256, 256
      %44 = vsyncadd [#allocation6], %s43
      %s45 = sshll.u32 [#allocation7], 4
      %s46 = int_to_ptr.vmem [resolvable:$true] %s45
      %51 = dma.hbm_to_vmem [thread:$0]  %s2, 256, %s46, [#allocation6], 64, 64, 4
    $region13: #{ner_bert_forward.13} parent=1 // pred_fallthru
      _
    // Predicated region
    $region14: #{ner_bert_forward.13} parent=1 // pred_check
      _
    $region15: #{ner_bert_forward.13} parent=1 // pred_check_branch
      %53 = sbr.rel (0) target = $region17
    $region16: #{ner_bert_forward.13} parent=1 // pred_region
      %s55 = ssub.s32 16, 16
      %56 = vsyncadd [#allocation9], %s55
      %s58 = sshll.u32 [#allocation8], 4
      %s59 = int_to_ptr.vmem [resolvable:$true] %s58
      %61 = dma.hbm_to_vmem [thread:$0]  %s3, 16, %s59, [#allocation9]
    $region17: #{ner_bert_forward.13} parent=1 // pred_fallthru
      _
    // Predicated region
    $region18: #{ner_bert_forward.13} parent=1 // pred_check
      _
    $region19: #{ner_bert_forward.13} parent=1 // pred_check_branch
      %63 = sbr.rel (0) target = $region21
    $region20: #{ner_bert_forward.13} parent=1 // pred_region
      %s65 = ssub.s32 16, 16
      %66 = vsyncadd [#allocation9], %s65
      %s68 = sshll.u32 [#allocation10], 4
      %s69 = int_to_ptr.vmem [resolvable:$true] %s68
      %71 = dma.hbm_to_vmem [thread:$0]  %s4, 16, %s69, [#allocation9]
    $region21: #{ner_bert_forward.13} parent=1 // pred_fallthru
      _
    // Predicated region
    $region22: #{ner_bert_forward.13} parent=1 // pred_check
      _
    $region23: #{ner_bert_forward.13} parent=1 // pred_check_branch
      %73 = sbr.rel (0) target = $region25
    $region24: #{ner_bert_forward.13} parent=1 // pred_region
      %s75 = ssub.s32 16, 16
      %76 = vsyncadd [#allocation12], %s75
      %s78 = sshll.u32 [#allocation11], 4
      %s79 = int_to_ptr.vmem [resolvable:$true] %s78
      %81 = dma.hbm_to_vmem [thread:$0]  %s5, 16, %s79, [#allocation12]
    $region25: #{ner_bert_forward.13} parent=1 // pred_fallthru
      _
    // Predicated region
    $region26: #{ner_bert_forward.13} parent=1 // pred_check
      _
    $region27: #{ner_bert_forward.13} parent=1 // pred_check_branch
      %83 = sbr.rel (0) target = $region29
    $region28: #{ner_bert_forward.13} parent=1 // pred_region
      %84 = dma.done [#allocation3], 128
    $region29: #{ner_bert_forward.13} parent=1 // pred_fallthru
      _
    // Predicated region
    $region30: #{ner_bert_forward.13} parent=1 // pred_check
      _
    $region31: #{ner_bert_forward.13} parent=1 // pred_check_branch
      %86 = sbr.rel (0) target = $region33
    $region32: #{ner_bert_forward.13} parent=1 // pred_region
      %87 = dma.done [#allocation6], 128
    $region33: #{ner_bert_forward.13} parent=1 // pred_fallthru
      _
    // Predicated region
    $region34: #{ner_bert_forward.13} parent=1 // pred_check
      _
    $region35: #{ner_bert_forward.13} parent=1 // pred_check_branch
      %89 = sbr.rel (0) target = $region37
    $region36: #{ner_bert_forward.13} parent=1 // pred_region
      %90 = dma.done [#allocation6], 256
    $region37: #{ner_bert_forward.13} parent=1 // pred_fallthru
      _
    // Predicated region
    $region38: #{ner_bert_forward.13} parent=1 // pred_check
      _
    $region39: #{ner_bert_forward.13} parent=1 // pred_check_branch
      %92 = sbr.rel (0) target = $region41
    $region40: #{ner_bert_forward.13} parent=1 // pred_region
      %93 = dma.done [#allocation9], 16
    $region41: #{ner_bert_forward.13} parent=1 // pred_fallthru
      _
    // Predicated region
    $region42: #{ner_bert_forward.13} parent=1 // pred_check
      _
    $region43: #{ner_bert_forward.13} parent=1 // pred_check_branch
      %95 = sbr.rel (0) target = $region45
    $region44: #{ner_bert_forward.13} parent=1 // pred_region
      %96 = dma.done [#allocation9], 16
    $region45: #{ner_bert_forward.13} parent=1 // pred_fallthru
      _
    // Predicated region
    $region46: #{ner_bert_forward.13} parent=1 // pred_check
      _
    $region47: #{ner_bert_forward.13} parent=1 // pred_check_branch
      %98 = sbr.rel (0) target = $region49
    $region48: #{ner_bert_forward.13} parent=1 // pred_region
      %99 = dma.done [#allocation12], 16
    $region49: #{ner_bert_forward.13} parent=1 // pred_fallthru
      _
    %v101 = vld [vmem:[#allocation2] sm:$0xf]
    %v102 = vld [vmem:[#allocation2 + $0x4] sm:$0xf]
    %v103 = vld [vmem:[#allocation7] sm:$0xf]
    %v104 = vld [vmem:[#allocation7 + $0x4] sm:$0xf]
    %v105 = vld [vmem:[#allocation7 + $0x8] sm:$0xf]
    %v106 = vld [vmem:[#allocation7 + $0xc] sm:$0xf]
    %v107 = vld [vmem:[#allocation8] sm:$0x1]
    %v109 = vlaneseq
    %v110 = vshrl.u32 %v109, 7
    %v111 = vsub.s32 0, %v110
    %v112 = vrot.slane %v107, %v111
    %v116 = vunpack.c.l.b16 %v101
    %v117 = vunpack.c.l.b16 %v102
    %v118 = vpack.c.b16 %v117, %v116
    %v123 = vunpack.c.l.b16 %v103
    %v124 = vunpack.c.l.b16 %v104
    %v125 = vunpack.c.l.b16 %v105
    %v126 = vunpack.c.l.b16 %v106
    %v127 = vpack.c.b16 %v124, %v123
    %v128 = vpack.c.b16 %v126, %v125
    %vm131 = vcmask 261120
    %v133 = vsel %vm131, %v118, 0
    %135 = vmatprep.subr.bf16.mxu0 0
    %136 = vmatpush1.bf16.msra.mxu0 %v127
    %137 = vmatprep.subr.bf16.mxu0 0
    %138 = vmatpush1.bf16.msra.mxu0 %v128
    %139 = vmatprep.subr.bf16.mxu0 0
    %140 = vmatpush1.bf16.msra.mxu0 0
    %141 = vmatprep.subr.bf16.mxu0 0
    %142 = vmatpush1.bf16.msra.mxu0 0
    %143 = vmatprep.subr.bf16.mxu0 0
    %144 = vmatpush1.bf16.msra.mxu0 0
    %145 = vmatprep.subr.bf16.mxu0 0
    %146 = vmatpush1.bf16.msra.mxu0 0
    %147 = vmatprep.subr.bf16.mxu0 0
    %148 = vmatpush1.bf16.msra.mxu0 0
    %149 = vmatprep.subr.bf16.mxu0 0
    %150 = vmatpush1.bf16.msra.mxu0 0
    %151 = vmatprep.subr.bf16.mxu0 0
    %152 = vmatpush1.bf16.msra.mxu0 0
    %153 = vmatprep.subr.bf16.mxu0 0
    %154 = vmatpush1.bf16.msra.mxu0 0
    %155 = vmatprep.subr.bf16.mxu0 0
    %156 = vmatpush1.bf16.msra.mxu0 0
    %157 = vmatprep.subr.bf16.mxu0 0
    %158 = vmatpush1.bf16.msra.mxu0 0
    %159 = vmatprep.subr.bf16.mxu0 0
    %160 = vmatpush1.bf16.msra.mxu0 0
    %161 = vmatprep.subr.bf16.mxu0 0
    %162 = vmatpush1.bf16.msra.mxu0 0
    %163 = vmatprep.subr.bf16.mxu0 0
    %164 = vmatpush1.bf16.msra.mxu0 0
    %165 = vmatprep.subr.bf16.mxu0 0
    %166 = vmatpush1.bf16.msra.mxu0 0
    %167 = vmatprep.mubr.bf16.mxu0 0
    %168 = vmatmul.mubr.bf16.gmra.mrb[0].mxu0 %v133
    %v169 = vpop.f32.mrb[0].mxu0
    %v170 = vadd.f32 %v112, %v169
    %v171 = vpop.f32.mrb[0].mxu0
    %v172 = vpop.f32.mrb[0].mxu0
    %v173 = vadd.f32 %v112, %v172
    %v174 = vpop.f32.mrb[0].mxu0
    %175 = vdwg.mxu0
    %v176 = vld [vmem:[#allocation5] sm:$0xf]
    %v177 = vld [vmem:[#allocation5 + $0x4] sm:$0xf]
    %v178 = vunpack.c.l.bf16 %v176
    %v179 = vunpack.c.l.bf16 %v177
    %v180 = vadd.f32 %v170, %v178
    %v181 = vadd.f32 %v173, %v179
    %v182 = vld [vmem:[#allocation10] sm:$0x1]
    %v183 = vld [vmem:[#allocation11] sm:$0x1]
    %v184 = vsel %vm131, %v180, 0.0
    %185 = vadd.xlane.f32.xlu0 %v184
    %v186 = vpop.xlane.xlu0 %185
    %v187 = vsel %vm131, %v181, 0.0
    %188 = vadd.xlane.f32.xlu0 %v187
    %v189 = vpop.xlane.xlu0 %188
    %v190 = vrcp.pop 32.0
    %v191 = vmul.f32 %v186, %v190
    %v192 = vmul.f32 %v189, %v190
    %v193 = vsub.f32 %v180, %v191
    %v194 = vsub.f32 %v181, %v192
    %v195 = vmul.f32 %v193, %v193
    %v196 = vmul.f32 %v194, %v194
    %v197 = vsel %vm131, %v195, 0.0
    %198 = vadd.xlane.f32.xlu0 %v197
    %v199 = vpop.xlane.xlu0 %198
    %v200 = vsel %vm131, %v196, 0.0
    %201 = vadd.xlane.f32.xlu0 %v200
    %v202 = vpop.xlane.xlu0 %201
    %v203 = vmul.f32 %v199, %v190
    %v204 = vmul.f32 %v202, %v190
    %v205 = vadd.f32 %v203, 1e-12
    %v206 = vadd.f32 %v204, 1e-12
    %v207 = vrsqrt.pop %v205
    %v208 = vrsqrt.pop %v206
    %v209 = vmul.f32 %v193, %v207
    %v210 = vmul.f32 %v194, %v208
    %v212 = vlaneseq
    %v213 = vshrl.u32 %v212, 7
    %v214 = vsub.s32 0, %v213
    %v215 = vrot.slane %v182, %v214
    %v217 = vmul.f32 %v209, %v215
    %v218 = vmul.f32 %v210, %v215
    %v220 = vlaneseq
    %v221 = vshrl.u32 %v220, 7
    %v222 = vsub.s32 0, %v221
    %v223 = vrot.slane %v183, %v222
    %v225 = vadd.f32 %v217, %v223
    %v226 = vadd.f32 %v218, %v223
    %v227 = vpack.c.bf16 %v226, %v225
    %v229 = vunpack.c.l.b16 %v227
    %v230 = vunpack.c.h.b16 %v227
    %v231 = vpack.c.b16 %v229, %v229
    %v232 = vpack.c.b16 %v230, %v230
    %vm235 = vcmask 257024
    %236 = vst.msk [vmem:[#allocation13] sm:$0xf] %vm235, %v231
    %237 = vst.msk [vmem:[#allocation13 + $0x4] sm:$0xf] %vm235, %v232
    // Predicated region
    $region50: #{ner_bert_forward.13} parent=1 // pred_check
      _
    $region51: #{ner_bert_forward.13} parent=1 // pred_check_branch
      %239 = sbr.rel (0) target = $region53
    $region52: #{ner_bert_forward.13} parent=1 // pred_region
      %s241 = ssub.s32 128, 128
      %242 = vsyncadd [#allocation4], %s241
      %s243 = sshll.u32 [#allocation13], 4
      %s244 = int_to_ptr.vmem [resolvable:$true] %s243
      %249 = dma.vmem_to_hbm [thread:$0]  %s244, 128, %s6, [#allocation4], 64, 64, 4
    $region53: #{ner_bert_forward.13} parent=1 // pred_fallthru
      _
    // Predicated region
    $region54: #{ner_bert_forward.13} parent=1 // pred_check
      _
    $region55: #{ner_bert_forward.13} parent=1 // pred_check_branch
      %251 = sbr.rel (0) target = $region57
    $region56: #{ner_bert_forward.13} parent=1 // pred_region
      %252 = dma.done [#allocation4], 128
    $region57: #{ner_bert_forward.13} parent=1 // pred_fallthru
      _
    %253 = vsyncpa [#allocation3], 1
    %254 = vsyncpa [#allocation6], 1
    %255 = vsyncpa [#allocation9], 1
    %256 = vsyncpa [#allocation12], 1
    %257 = vsyncpa [#allocation4], 1

// kernel: ner_bert_forward.12
$region0: #{ner_bert_forward.12}
  #allocation0 [shape = 'u32[]', space=smem, size = 0x4, offset = 0x4, fixed_abs, tag = 'smem constant byte address 0x4 - core index']
  #allocation1 [shape = 'u32[144,128]{1,0:T(1,128)}', space=vmem, size = 0x12000, scoped, tag = 'internal scratch']
  %s0 = inlined_call_operand.hbm [shape: bf16[16,96], index: 0, kind: input, shape index: {}]
  %s1 = inlined_call_operand.hbm [shape: f32[2,1,8], index: 1, kind: input, shape index: {}]
  %s2 = inlined_call_operand.hbm [shape: bf16[16,32], index: 2, kind: output, shape index: {}]
  %s3 = sld [smem:[#allocation0]]
  $region49: #{ner_bert_forward.12} parent=0
    _
  %s5 = ssub.s32 1, %s3
  %s6 = scalar_select 0, %s5, %s3
  $region1: #{ner_bert_forward.12} parent=0
    #allocation2 [shape = 'u8[4096]{0}', space=vmem, size = 0x1000, scoped, tag = 'input window, operand 0']
    #allocation3 [shape = 's32[2]{0}', space=sflag, size = 0x8, scoped, tag = 'scoped memory for ner_bert_forward.12']
    #allocation4 [shape = 's32[2]{0}', space=sflag, size = 0x8, scoped, tag = 'scoped memory for ner_bert_forward.12']
    #allocation5 [shape = 'u8[1024]{0}', space=vmem, size = 0x400, scoped, tag = 'input window, operand 1']
    #allocation6 [shape = 's32[2]{0}', space=sflag, size = 0x8, scoped, tag = 'scoped memory for ner_bert_forward.12']
    #allocation7 [shape = 'u8[4096]{0}', space=vmem, size = 0x1000, scoped, tag = 'output window, operand 0']
    %7 = vsyncpa [#allocation3], 0
    %s8 = scalar_lea.sflag [#allocation3], 1
    %9 = vsyncpa %s8, 0
    %10 = vsyncpa [#allocation6], 0
    %s11 = scalar_lea.sflag [#allocation6], 1
    %12 = vsyncpa %s11, 0
    %13 = vsyncpa [#allocation4], 0
    %s14 = scalar_lea.sflag [#allocation4], 1
    %15 = vsyncpa %s14, 0
    loop: start=0, step=1, limit=4
    $region2: #{ner_bert_forward.12} parent=1 // loop_pre_header
      _
    $region3: #{ner_bert_forward.12} parent=1 // loop_header
      %s17 = sphi 0, %s21
      %p18 = scmp.ge.s32.totalorder %s17, 4
      %s27 = sphi 0, %s29
      %s30 = sphi 0, %s27
      %s31 = sphi 0, %s30
      %s47 = sphi 0, %s31
      %s53 = sphi 0, %s55
      %s56 = sphi 0, %s53
      %s57 = sphi 0, %s56
      %s73 = sphi 0, %s57
      %s79 = sphi 0, %s81
      %s82 = sphi 0, %s79
      %s83 = sphi 0, %s82
      %s99 = sphi 0, %s83
    $region4: #{ner_bert_forward.12} parent=1 // loop_header_branch
      %20 = sbr.rel (%p18) target = $region8
    $region5: #{ner_bert_forward.12} parent=1 // loop_body
      %s22 = ssub.s32 %s17, 1
      %s23 = ssub.s32 %s17, 2
      %s24 = sadd.s32 %s17, 1
      %s25 = ssub.s32 %s17, %s24
      %p26 = scmp.eq.s32.totalorder %s25, 0
      %s28 = sadd.s32 %s27, 1
      %s29 = scalar_select %p26, %s27, %s28
      %p32 = pneg %p26
      %p33 = scmp.eq.s32.totalorder %s17, 1
      %p34 = por %p32, %p33
      %p35 = scmp.ne.s32.totalorder %s27, %s30
      %p36 = scmp.eq.s32.totalorder %s17, 0
      %p37 = por %p35, %p36
      %p38 = scmp.ne.s32.totalorder %s27, %s30
      %p39 = scmp.eq.s32.totalorder %s22, 1
      %p40 = por %p38, %p39
      %p41 = scmp.ne.s32.totalorder %s30, %s31
      %p42 = scmp.eq.s32.totalorder %s22, 0
      %p43 = por %p41, %p42
      %p44 = scmp.ne.s32.totalorder %s30, %s31
      %p45 = scmp.eq.s32.totalorder %s23, 1
      %p46 = por %p44, %p45
      %p48 = scmp.ne.s32.totalorder %s31, %s47
      %p49 = scmp.eq.s32.totalorder %s23, 0
      %p50 = por %p48, %p49
      %s51 = ssub.s32 %s17, %s24
      %p52 = scmp.eq.s32.totalorder %s51, 0
      %s54 = sadd.s32 %s53, 1
      %s55 = scalar_select %p52, %s53, %s54
      %p58 = pneg %p52
      %p59 = scmp.eq.s32.totalorder %s17, 1
      %p60 = por %p58, %p59
      %p61 = scmp.ne.s32.totalorder %s53, %s56
      %p62 = scmp.eq.s32.totalorder %s17, 0
      %p63 = por %p61, %p62
      %p64 = scmp.ne.s32.totalorder %s53, %s56
      %p65 = scmp.eq.s32.totalorder %s22, 1
      %p66 = por %p64, %p65
      %p67 = scmp.ne.s32.totalorder %s56, %s57
      %p68 = scmp.eq.s32.totalorder %s22, 0
      %p69 = por %p67, %p68
      %p70 = scmp.ne.s32.totalorder %s56, %s57
      %p71 = scmp.eq.s32.totalorder %s23, 1
      %p72 = por %p70, %p71
      %p74 = scmp.ne.s32.totalorder %s57, %s73
      %p75 = scmp.eq.s32.totalorder %s23, 0
      %p76 = por %p74, %p75
      %s77 = ssub.s32 %s17, %s24
      %p78 = scmp.eq.s32.totalorder %s77, 0
      %s80 = sadd.s32 %s79, 1
      %s81 = scalar_select %p78, %s79, %s80
      %p84 = pneg %p78
      %p85 = scmp.eq.s32.totalorder %s17, 1
      %p86 = por %p84, %p85
      %p87 = scmp.ne.s32.totalorder %s79, %s82
      %p88 = scmp.eq.s32.totalorder %s17, 0
      %p89 = por %p87, %p88
      %p90 = scmp.ne.s32.totalorder %s79, %s82
      %p91 = scmp.eq.s32.totalorder %s22, 1
      %p92 = por %p90, %p91
      %p93 = scmp.ne.s32.totalorder %s82, %s83
      %p94 = scmp.eq.s32.totalorder %s22, 0
      %p95 = por %p93, %p94
      %p96 = scmp.ne.s32.totalorder %s82, %s83
      %p97 = scmp.eq.s32.totalorder %s23, 1
      %p98 = por %p96, %p97
      %p100 = scmp.ne.s32.totalorder %s83, %s99
      %p101 = scmp.eq.s32.totalorder %s23, 0
      %p102 = por %p100, %p101
      %p103 = scmp.le.s32.totalorder 1, %s17
      %p104 = scmp.lt.s32.totalorder %s17, 3
      %p105 = pnand %p103, %p104
      %p106 = pneg %p105
      // Predicated region
      $region9: #{ner_bert_forward.12} parent=5 // pred_check
        _
      $region10: #{ner_bert_forward.12} parent=5 // pred_check_branch
        %108 = sbr.rel (%p105) target = $region12
      $region11: #{ner_bert_forward.12} parent=5 // pred_region
        %s109 = ssub.s32 %s17, 1
      $region12: #{ner_bert_forward.12} parent=5 // pred_fallthru
        _
      %p110 = scmp.lt.s32.totalorder %s17, 2
      // Predicated region
      $region13: #{ner_bert_forward.12} parent=5 // pred_check
        %p111 = pneg %p110
      $region14: #{ner_bert_forward.12} parent=5 // pred_check_branch
        %113 = sbr.rel (%p111) target = $region16
      $region15: #{ner_bert_forward.12} parent=5 // pred_region
        // Predicated region
        $region17: #{ner_bert_forward.12} parent=15 // pred_check
          %p114 = pneg %p37
        $region18: #{ner_bert_forward.12} parent=15 // pred_check_branch
          %116 = sbr.rel (%p114) target = $region20
        $region19: #{ner_bert_forward.12} parent=15 // pred_region
          %s117 = sand.u32 %s27, 1
          %s118 = scalar_lea.sflag [#allocation3], %s117
          %s119 = sand.u32 %s27, 1
          %s120 = smul.addr %s119, 4
          %s121 = scalar_lea.vmem [#allocation2], %s120
          %s123 = ssub.s32 64, 64
          %124 = vsyncadd %s118, %s123
          %s125 = smul.addr %s17, 64
          %s126 = scalar_lea.hbm %s0, %s125
          %s128 = sshll.u32 %s121, 4
          %s129 = int_to_ptr.vmem [resolvable:$true] %s128
          %131 = dma.hbm_to_vmem [thread:$0]  %s126, 64, %s129, %s118
        $region20: #{ner_bert_forward.12} parent=15 // pred_fallthru
          _
        // Predicated region
        $region21: #{ner_bert_forward.12} parent=15 // pred_check
          %p132 = pneg %p63
        $region22: #{ner_bert_forward.12} parent=15 // pred_check_branch
          %134 = sbr.rel (%p132) target = $region24
        $region23: #{ner_bert_forward.12} parent=15 // pred_region
          %s135 = sand.u32 %s53, 1
          %s136 = scalar_lea.sflag [#allocation6], %s135
          %s137 = sand.u32 %s53, 1
          %s138 = scalar_lea.vmem [#allocation5], %s137
          %s140 = ssub.s32 16, 16
          %141 = vsyncadd %s136, %s140
          %s142 = smul.addr %s17, 16
          %s143 = scalar_lea.hbm %s1, %s142
          %s145 = sshll.u32 %s138, 4
          %s146 = int_to_ptr.vmem [resolvable:$true] %s145
          %148 = dma.hbm_to_vmem [thread:$0]  %s143, 16, %s146, %s136
        $region24: #{ner_bert_forward.12} parent=15 // pred_fallthru
          _
      $region16: #{ner_bert_forward.12} parent=5 // pred_fallthru
        _
      %p149 = scmp.le.s32.totalorder 1, %s17
      %p150 = scmp.lt.s32.totalorder %s17, 3
      %p151 = pnand %p149, %p150
      %p152 = pneg %p151
      // Predicated region
      $region25: #{ner_bert_forward.12} parent=5 // pred_check
        _
      $region26: #{ner_bert_forward.12} parent=5 // pred_check_branch
        %154 = sbr.rel (%p151) target = $region28
      $region27: #{ner_bert_forward.12} parent=5 // pred_region
        %s155 = ssub.s32 %s17, 1
        %s156 = sand.u32 %s30, 1
        %s157 = scalar_lea.sflag [#allocation3], %s156
        %s158 = sand.u32 %s30, 1
        %s159 = smul.addr %s158, 4
        %s160 = scalar_lea.vmem [#allocation2], %s159
        // Predicated region
        $region29: #{ner_bert_forward.12} parent=27 // pred_check
          %p161 = pneg %p43
        $region30: #{ner_bert_forward.12} parent=27 // pred_check_branch
          %163 = sbr.rel (%p161) target = $region32
        $region31: #{ner_bert_forward.12} parent=27 // pred_region
          %164 = dma.done %s157, 64
        $region32: #{ner_bert_forward.12} parent=27 // pred_fallthru
          _
        %s165 = sand.u32 %s56, 1
        %s166 = scalar_lea.sflag [#allocation6], %s165
        %s167 = sand.u32 %s56, 1
        %s168 = scalar_lea.vmem [#allocation5], %s167
        // Predicated region
        $region33: #{ner_bert_forward.12} parent=27 // pred_check
          %p169 = pneg %p69
        $region34: #{ner_bert_forward.12} parent=27 // pred_check_branch
          %171 = sbr.rel (%p169) target = $region36
        $region35: #{ner_bert_forward.12} parent=27 // pred_region
          %172 = dma.done %s166, 16
        $region36: #{ner_bert_forward.12} parent=27 // pred_fallthru
          _
        %s173 = sand.u32 %s30, 1
        %s174 = scalar_lea.sflag [#allocation3], %s173
        %s175 = sand.u32 %s30, 1
        %s176 = smul.addr %s175, 4
        %s177 = scalar_lea.vmem [#allocation2], %s176
        %p178 = pneg %p43
        %p179 = pneg %p40
        %s180 = sand.u32 %s56, 1
        %s181 = scalar_lea.sflag [#allocation6], %s180
        %s182 = sand.u32 %s56, 1
        %s183 = scalar_lea.vmem [#allocation5], %s182
        %p184 = pneg %p69
        %p185 = pneg %p66
        %p186 = pneg %p95
        %p187 = pneg %p92
        %s188 = sand.u32 %s82, 1
        %s189 = scalar_lea.sflag [#allocation4], %s188
        %s190 = sand.u32 %s82, 1
        %s191 = smul.addr %s190, 4
        %s192 = scalar_lea.vmem [#allocation7], %s191
        %v194 = vld [vmem:[%s160] sm:$0xf]
        %v195 = vld [vmem:[%s168] sm:$0x1]
        %v197 = vunpack.c.l.b16 %v194
        %v198 = vpack.c.b16 %v197, %v197
        %199 = vrot.lane.b32.xlu0 %v198, 96
        %v200 = vpop.permute.xlu0 %199
        %vm201 = vcmask 64512
        %v203 = vsel %vm201, %v194, 0
        %v206 = vsel %vm201, %v200, 0
        %208 = vmatprep.subr.bf16.mxu0 0
        %209 = vmatpush1.bf16.xpose.msra.mxu0 %v206
        %210 = vmatprep.subr.bf16.mxu0 0
        %211 = vmatpush1.bf16.xpose.msra.mxu0 0
        %212 = vmatprep.subr.bf16.mxu0 0
        %213 = vmatpush1.bf16.xpose.msra.mxu0 0
        %214 = vmatprep.subr.bf16.mxu0 0
        %215 = vmatpush1.bf16.xpose.msra.mxu0 0
        %216 = vmatprep.subr.bf16.mxu0 0
        %217 = vmatpush1.bf16.xpose.msra.mxu0 0
        %218 = vmatprep.subr.bf16.mxu0 0
        %219 = vmatpush1.bf16.xpose.msra.mxu0 0
        %220 = vmatprep.subr.bf16.mxu0 0
        %221 = vmatpush1.bf16.xpose.msra.mxu0 0
        %222 = vmatprep.subr.bf16.mxu0 0
        %223 = vmatpush1.bf16.xpose.msra.mxu0 0
        %224 = vmatprep.subr.bf16.mxu0 0
        %225 = vmatpush1.bf16.xpose.msra.mxu0 0
        %226 = vmatprep.subr.bf16.mxu0 0
        %227 = vmatpush1.bf16.xpose.msra.mxu0 0
        %228 = vmatprep.subr.bf16.mxu0 0
        %229 = vmatpush1.bf16.xpose.msra.mxu0 0
        %230 = vmatprep.subr.bf16.mxu0 0
        %231 = vmatpush1.bf16.xpose.msra.mxu0 0
        %232 = vmatprep.subr.bf16.mxu0 0
        %233 = vmatpush1.bf16.xpose.msra.mxu0 0
        %234 = vmatprep.subr.bf16.mxu0 0
        %235 = vmatpush1.bf16.xpose.msra.mxu0 0
        %236 = vmatprep.subr.bf16.mxu0 0
        %237 = vmatpush1.bf16.xpose.msra.mxu0 0
        %238 = vmatprep.subr.bf16.mxu0 0
        %239 = vmatpush1.bf16.xpose.msra.mxu0 0
        %240 = vmatprep.mubr.bf16.mxu0 0
        %241 = vmatmul.mubr.bf16.gmra.mrb[0].mxu0 %v203
        %v242 = vpop.f32.mrb[0].mxu0
        %v243 = vadd.f32 0.0, %v242
        %v244 = vpop.f32.mrb[0].mxu0
        %v245 = vpop.f32.mrb[0].mxu0
        %v246 = vpop.f32.mrb[0].mxu0
        %247 = vdwg.mxu0
        %v248 = vmul.f32 %v243, 0.35355338
        %v250 = vlaneseq
        %v251 = vshrl.u32 %v250, 7
        %v252 = vsub.s32 0, %v251
        %v253 = vrot.slane %v195, %v252
        %v255 = vadd.f32 %v248, %v253
        %v256 = vsel %vm201, %v255, -inf
        %257 = vmax.xlane.f32.xlu0 %v256
        %v258 = vpop.xlane.xlu0 %257
        %v259 = vsub.f32 %v255, %v258
        %v260 = vmul.f32 %v259, 1.442695
        %v261 = vpow.pop %v260
        %v262 = vsel %vm201, %v261, 0.0
        %263 = vadd.xlane.f32.xlu0 %v262
        %v264 = vpop.xlane.xlu0 %263
        %v265 = vrcp.pop %v264
        %v266 = vmul.f32 %v261, %v265
        %v267 = vpack.c.bf16 %v266, %v266
        %268 = vrot.lane.b32.xlu0 %v198, 64
        %v269 = vpop.permute.xlu0 %268
        %v271 = vsel %vm201, %v267, 0
        %vm273 = vcmask 1043456
        %v275 = vsel %vm273, %v269, 0
        %277 = vmatprep.subr.bf16.mxu0 0
        %278 = vmatpush1.bf16.msra.mxu0 %v275
        %279 = vmatprep.subr.bf16.mxu0 0
        %280 = vmatpush1.bf16.msra.mxu0 0
        %281 = vmatprep.subr.bf16.mxu0 0
        %282 = vmatpush1.bf16.msra.mxu0 0
        %283 = vmatprep.subr.bf16.mxu0 0
        %284 = vmatpush1.bf16.msra.mxu0 0
        %285 = vmatprep.subr.bf16.mxu0 0
        %286 = vmatpush1.bf16.msra.mxu0 0
        %287 = vmatprep.subr.bf16.mxu0 0
        %288 = vmatpush1.bf16.msra.mxu0 0
        %289 = vmatprep.subr.bf16.mxu0 0
        %290 = vmatpush1.bf16.msra.mxu0 0
        %291 = vmatprep.subr.bf16.mxu0 0
        %292 = vmatpush1.bf16.msra.mxu0 0
        %293 = vmatprep.subr.bf16.mxu0 0
        %294 = vmatpush1.bf16.msra.mxu0 0
        %295 = vmatprep.subr.bf16.mxu0 0
        %296 = vmatpush1.bf16.msra.mxu0 0
        %297 = vmatprep.subr.bf16.mxu0 0
        %298 = vmatpush1.bf16.msra.mxu0 0
        %299 = vmatprep.subr.bf16.mxu0 0
        %300 = vmatpush1.bf16.msra.mxu0 0
        %301 = vmatprep.subr.bf16.mxu0 0
        %302 = vmatpush1.bf16.msra.mxu0 0
        %303 = vmatprep.subr.bf16.mxu0 0
        %304 = vmatpush1.bf16.msra.mxu0 0
        %305 = vmatprep.subr.bf16.mxu0 0
        %306 = vmatpush1.bf16.msra.mxu0 0
        %307 = vmatprep.subr.bf16.mxu0 0
        %308 = vmatpush1.bf16.msra.mxu0 0
        %309 = vmatprep.mubr.bf16.mxu0 0
        %310 = vmatmul.mubr.bf16.gmra.mrb[0].mxu0 %v271
        %v311 = vpop.f32.mrb[0].mxu0
        %v312 = vadd.f32 0.0, %v311
        %v313 = vpop.f32.mrb[0].mxu0
        %v314 = vpop.f32.mrb[0].mxu0
        %v315 = vpop.f32.mrb[0].mxu0
        %316 = vdwg.mxu0
        %317 = vrot.lane.b32.xlu0 %v198, 120
        %v318 = vpop.permute.xlu0 %317
        %319 = vrot.lane.b32.xlu0 %v198, 88
        %v320 = vpop.permute.xlu0 %319
        %v322 = vsel %vm201, %v318, 0
        %v325 = vsel %vm201, %v320, 0
        %327 = vmatprep.subr.bf16.mxu0 0
        %328 = vmatpush1.bf16.xpose.msra.mxu0 %v325
        %329 = vmatprep.subr.bf16.mxu0 0
        %330 = vmatpush1.bf16.xpose.msra.mxu0 0
        %331 = vmatprep.subr.bf16.mxu0 0
        %332 = vmatpush1.bf16.xpose.msra.mxu0 0
        %333 = vmatprep.subr.bf16.mxu0 0
        %334 = vmatpush1.bf16.xpose.msra.mxu0 0
        %335 = vmatprep.subr.bf16.mxu0 0
        %336 = vmatpush1.bf16.xpose.msra.mxu0 0
        %337 = vmatprep.subr.bf16.mxu0 0
        %338 = vmatpush1.bf16.xpose.msra.mxu0 0
        %339 = vmatprep.subr.bf16.mxu0 0
        %340 = vmatpush1.bf16.xpose.msra.mxu0 0
        %341 = vmatprep.subr.bf16.mxu0 0
        %342 = vmatpush1.bf16.xpose.msra.mxu0 0
        %343 = vmatprep.subr.bf16.mxu0 0
        %344 = vmatpush1.bf16.xpose.msra.mxu0 0
        %345 = vmatprep.subr.bf16.mxu0 0
        %346 = vmatpush1.bf16.xpose.msra.mxu0 0
        %347 = vmatprep.subr.bf16.mxu0 0
        %348 = vmatpush1.bf16.xpose.msra.mxu0 0
        %349 = vmatprep.subr.bf16.mxu0 0
        %350 = vmatpush1.bf16.xpose.msra.mxu0 0
        %351 = vmatprep.subr.bf16.mxu0 0
        %352 = vmatpush1.bf16.xpose.msra.mxu0 0
        %353 = vmatprep.subr.bf16.mxu0 0
        %354 = vmatpush1.bf16.xpose.msra.mxu0 0
        %355 = vmatprep.subr.bf16.mxu0 0
        %356 = vmatpush1.bf16.xpose.msra.mxu0 0
        %357 = vmatprep.subr.bf16.mxu0 0
        %358 = vmatpush1.bf16.xpose.msra.mxu0 0
        %359 = vmatprep.mubr.bf16.mxu0 0
        %360 = vmatmul.mubr.bf16.gmra.mrb[0].mxu0 %v322
        %v361 = vpop.f32.mrb[0].mxu0
        %v362 = vadd.f32 0.0, %v361
        %v363 = vpop.f32.mrb[0].mxu0
        %v364 = vpop.f32.mrb[0].mxu0
        %v365 = vpop.f32.mrb[0].mxu0
        %366 = vdwg.mxu0
        %v367 = vmul.f32 %v362, 0.35355338
        %v368 = vadd.f32 %v367, %v253
        %v369 = vsel %vm201, %v368, -inf
        %370 = vmax.xlane.f32.xlu0 %v369
        %v371 = vpop.xlane.xlu0 %370
        %v372 = vsub.f32 %v368, %v371
        %v373 = vmul.f32 %v372, 1.442695
        %v374 = vpow.pop %v373
        %v375 = vsel %vm201, %v374, 0.0
        %376 = vadd.xlane.f32.xlu0 %v375
        %v377 = vpop.xlane.xlu0 %376
        %v378 = vrcp.pop %v377
        %v379 = vmul.f32 %v374, %v378
        %v380 = vpack.c.bf16 %v379, %v379
        %381 = vrot.lane.b32.xlu0 %v198, 56
        %v382 = vpop.permute.xlu0 %381
        %v384 = vsel %vm201, %v380, 0
        %v387 = vsel %vm273, %v382, 0
        %389 = vmatprep.subr.bf16.mxu0 0
        %390 = vmatpush1.bf16.msra.mxu0 %v387
        %391 = vmatprep.subr.bf16.mxu0 0
        %392 = vmatpush1.bf16.msra.mxu0 0
        %393 = vmatprep.subr.bf16.mxu0 0
        %394 = vmatpush1.bf16.msra.mxu0 0
        %395 = vmatprep.subr.bf16.mxu0 0
        %396 = vmatpush1.bf16.msra.mxu0 0
        %397 = vmatprep.subr.bf16.mxu0 0
        %398 = vmatpush1.bf16.msra.mxu0 0
        %399 = vmatprep.subr.bf16.mxu0 0
        %400 = vmatpush1.bf16.msra.mxu0 0
        %401 = vmatprep.subr.bf16.mxu0 0
        %402 = vmatpush1.bf16.msra.mxu0 0
        %403 = vmatprep.subr.bf16.mxu0 0
        %404 = vmatpush1.bf16.msra.mxu0 0
        %405 = vmatprep.subr.bf16.mxu0 0
        %406 = vmatpush1.bf16.msra.mxu0 0
        %407 = vmatprep.subr.bf16.mxu0 0
        %408 = vmatpush1.bf16.msra.mxu0 0
        %409 = vmatprep.subr.bf16.mxu0 0
        %410 = vmatpush1.bf16.msra.mxu0 0
        %411 = vmatprep.subr.bf16.mxu0 0
        %412 = vmatpush1.bf16.msra.mxu0 0
        %413 = vmatprep.subr.bf16.mxu0 0
        %414 = vmatpush1.bf16.msra.mxu0 0
        %415 = vmatprep.subr.bf16.mxu0 0
        %416 = vmatpush1.bf16.msra.mxu0 0
        %417 = vmatprep.subr.bf16.mxu0 0
        %418 = vmatpush1.bf16.msra.mxu0 0
        %419 = vmatprep.subr.bf16.mxu0 0
        %420 = vmatpush1.bf16.msra.mxu0 0
        %421 = vmatprep.mubr.bf16.mxu0 0
        %422 = vmatmul.mubr.bf16.gmra.mrb[0].mxu0 %v384
        %v423 = vpop.f32.mrb[0].mxu0
        %v424 = vadd.f32 0.0, %v423
        %v425 = vpop.f32.mrb[0].mxu0
        %v426 = vpop.f32.mrb[0].mxu0
        %v427 = vpop.f32.mrb[0].mxu0
        %428 = vdwg.mxu0
        %429 = vrot.lane.b32.xlu0 %v198, 112
        %v430 = vpop.permute.xlu0 %429
        %431 = vrot.lane.b32.xlu0 %v198, 80
        %v432 = vpop.permute.xlu0 %431
        %v434 = vsel %vm201, %v430, 0
        %v437 = vsel %vm201, %v432, 0
        %439 = vmatprep.subr.bf16.mxu0 0
        %440 = vmatpush1.bf16.xpose.msra.mxu0 %v437
        %441 = vmatprep.subr.bf16.mxu0 0
        %442 = vmatpush1.bf16.xpose.msra.mxu0 0
        %443 = vmatprep.subr.bf16.mxu0 0
        %444 = vmatpush1.bf16.xpose.msra.mxu0 0
        %445 = vmatprep.subr.bf16.mxu0 0
        %446 = vmatpush1.bf16.xpose.msra.mxu0 0
        %447 = vmatprep.subr.bf16.mxu0 0
        %448 = vmatpush1.bf16.xpose.msra.mxu0 0
        %449 = vmatprep.subr.bf16.mxu0 0
        %450 = vmatpush1.bf16.xpose.msra.mxu0 0
        %451 = vmatprep.subr.bf16.mxu0 0
        %452 = vmatpush1.bf16.xpose.msra.mxu0 0
        %453 = vmatprep.subr.bf16.mxu0 0
        %454 = vmatpush1.bf16.xpose.msra.mxu0 0
        %455 = vmatprep.subr.bf16.mxu0 0
        %456 = vmatpush1.bf16.xpose.msra.mxu0 0
        %457 = vmatprep.subr.bf16.mxu0 0
        %458 = vmatpush1.bf16.xpose.msra.mxu0 0
        %459 = vmatprep.subr.bf16.mxu0 0
        %460 = vmatpush1.bf16.xpose.msra.mxu0 0
        %461 = vmatprep.subr.bf16.mxu0 0
        %462 = vmatpush1.bf16.xpose.msra.mxu0 0
        %463 = vmatprep.subr.bf16.mxu0 0
        %464 = vmatpush1.bf16.xpose.msra.mxu0 0
        %465 = vmatprep.subr.bf16.mxu0 0
        %466 = vmatpush1.bf16.xpose.msra.mxu0 0
        %467 = vmatprep.subr.bf16.mxu0 0
        %468 = vmatpush1.bf16.xpose.msra.mxu0 0
        %469 = vmatprep.subr.bf16.mxu0 0
        %470 = vmatpush1.bf16.xpose.msra.mxu0 0
        %471 = vmatprep.mubr.bf16.mxu0 0
        %472 = vmatmul.mubr.bf16.gmra.mrb[0].mxu0 %v434
        %v473 = vpop.f32.mrb[0].mxu0
        %v474 = vadd.f32 0.0, %v473
        %v475 = vpop.f32.mrb[0].mxu0
        %v476 = vpop.f32.mrb[0].mxu0
        %v477 = vpop.f32.mrb[0].mxu0
        %478 = vdwg.mxu0
        %v479 = vmul.f32 %v474, 0.35355338
        %v480 = vadd.f32 %v479, %v253
        %v481 = vsel %vm201, %v480, -inf
        %482 = vmax.xlane.f32.xlu0 %v481
        %v483 = vpop.xlane.xlu0 %482
        %v484 = vsub.f32 %v480, %v483
        %v485 = vmul.f32 %v484, 1.442695
        %v486 = vpow.pop %v485
        %v487 = vsel %vm201, %v486, 0.0
        %488 = vadd.xlane.f32.xlu0 %v487
        %v489 = vpop.xlane.xlu0 %488
        %v490 = vrcp.pop %v489
        %v491 = vmul.f32 %v486, %v490
        %v492 = vpack.c.bf16 %v491, %v491
        %493 = vrot.lane.b32.xlu0 %v198, 48
        %v494 = vpop.permute.xlu0 %493
        %v496 = vsel %vm201, %v492, 0
        %v499 = vsel %vm273, %v494, 0
        %501 = vmatprep.subr.bf16.mxu0 0
        %502 = vmatpush1.bf16.msra.mxu0 %v499
        %503 = vmatprep.subr.bf16.mxu0 0
        %504 = vmatpush1.bf16.msra.mxu0 0
        %505 = vmatprep.subr.bf16.mxu0 0
        %506 = vmatpush1.bf16.msra.mxu0 0
        %507 = vmatprep.subr.bf16.mxu0 0
        %508 = vmatpush1.bf16.msra.mxu0 0
        %509 = vmatprep.subr.bf16.mxu0 0
        %510 = vmatpush1.bf16.msra.mxu0 0
        %511 = vmatprep.subr.bf16.mxu0 0
        %512 = vmatpush1.bf16.msra.mxu0 0
        %513 = vmatprep.subr.bf16.mxu0 0
        %514 = vmatpush1.bf16.msra.mxu0 0
        %515 = vmatprep.subr.bf16.mxu0 0
        %516 = vmatpush1.bf16.msra.mxu0 0
        %517 = vmatprep.subr.bf16.mxu0 0
        %518 = vmatpush1.bf16.msra.mxu0 0
        %519 = vmatprep.subr.bf16.mxu0 0
        %520 = vmatpush1.bf16.msra.mxu0 0
        %521 = vmatprep.subr.bf16.mxu0 0
        %522 = vmatpush1.bf16.msra.mxu0 0
        %523 = vmatprep.subr.bf16.mxu0 0
        %524 = vmatpush1.bf16.msra.mxu0 0
        %525 = vmatprep.subr.bf16.mxu0 0
        %526 = vmatpush1.bf16.msra.mxu0 0
        %527 = vmatprep.subr.bf16.mxu0 0
        %528 = vmatpush1.bf16.msra.mxu0 0
        %529 = vmatprep.subr.bf16.mxu0 0
        %530 = vmatpush1.bf16.msra.mxu0 0
        %531 = vmatprep.subr.bf16.mxu0 0
        %532 = vmatpush1.bf16.msra.mxu0 0
        %533 = vmatprep.mubr.bf16.mxu0 0
        %534 = vmatmul.mubr.bf16.gmra.mrb[0].mxu0 %v496
        %v535 = vpop.f32.mrb[0].mxu0
        %v536 = vadd.f32 0.0, %v535
        %v537 = vpop.f32.mrb[0].mxu0
        %v538 = vpop.f32.mrb[0].mxu0
        %v539 = vpop.f32.mrb[0].mxu0
        %540 = vdwg.mxu0
        %541 = vrot.lane.b32.xlu0 %v198, 104
        %v542 = vpop.permute.xlu0 %541
        %543 = vrot.lane.b32.xlu0 %v198, 72
        %v544 = vpop.permute.xlu0 %543
        %v546 = vsel %vm201, %v542, 0
        %v549 = vsel %vm201, %v544, 0
        %551 = vmatprep.subr.bf16.mxu0 0
        %552 = vmatpush1.bf16.xpose.msra.mxu0 %v549
        %553 = vmatprep.subr.bf16.mxu0 0
        %554 = vmatpush1.bf16.xpose.msra.mxu0 0
        %555 = vmatprep.subr.bf16.mxu0 0
        %556 = vmatpush1.bf16.xpose.msra.mxu0 0
        %557 = vmatprep.subr.bf16.mxu0 0
        %558 = vmatpush1.bf16.xpose.msra.mxu0 0
        %559 = vmatprep.subr.bf16.mxu0 0
        %560 = vmatpush1.bf16.xpose.msra.mxu0 0
        %561 = vmatprep.subr.bf16.mxu0 0
        %562 = vmatpush1.bf16.xpose.msra.mxu0 0
        %563 = vmatprep.subr.bf16.mxu0 0
        %564 = vmatpush1.bf16.xpose.msra.mxu0 0
        %565 = vmatprep.subr.bf16.mxu0 0
        %566 = vmatpush1.bf16.xpose.msra.mxu0 0
        %567 = vmatprep.subr.bf16.mxu0 0
        %568 = vmatpush1.bf16.xpose.msra.mxu0 0
        %569 = vmatprep.subr.bf16.mxu0 0
        %570 = vmatpush1.bf16.xpose.msra.mxu0 0
        %571 = vmatprep.subr.bf16.mxu0 0
        %572 = vmatpush1.bf16.xpose.msra.mxu0 0
        %573 = vmatprep.subr.bf16.mxu0 0
        %574 = vmatpush1.bf16.xpose.msra.mxu0 0
        %575 = vmatprep.subr.bf16.mxu0 0
        %576 = vmatpush1.bf16.xpose.msra.mxu0 0
        %577 = vmatprep.subr.bf16.mxu0 0
        %578 = vmatpush1.bf16.xpose.msra.mxu0 0
        %579 = vmatprep.subr.bf16.mxu0 0
        %580 = vmatpush1.bf16.xpose.msra.mxu0 0
        %581 = vmatprep.subr.bf16.mxu0 0
        %582 = vmatpush1.bf16.xpose.msra.mxu0 0
        %583 = vmatprep.mubr.bf16.mxu0 0
        %584 = vmatmul.mubr.bf16.gmra.mrb[0].mxu0 %v546
        %v585 = vpop.f32.mrb[0].mxu0
        %v586 = vadd.f32 0.0, %v585
        %v587 = vpop.f32.mrb[0].mxu0
        %v588 = vpop.f32.mrb[0].mxu0
        %v589 = vpop.f32.mrb[0].mxu0
        %590 = vdwg.mxu0
        %v591 = vmul.f32 %v586, 0.35355338
        %v592 = vadd.f32 %v591, %v253
        %v593 = vsel %vm201, %v592, -inf
        %594 = vmax.xlane.f32.xlu0 %v593
        %v595 = vpop.xlane.xlu0 %594
        %v596 = vsub.f32 %v592, %v595
        %v597 = vmul.f32 %v596, 1.442695
        %v598 = vpow.pop %v597
        %v599 = vsel %vm201, %v598, 0.0
        %600 = vadd.xlane.f32.xlu0 %v599
        %v601 = vpop.xlane.xlu0 %600
        %v602 = vrcp.pop %v601
        %v603 = vmul.f32 %v598, %v602
        %v604 = vpack.c.bf16 %v603, %v603
        %605 = vrot.lane.b32.xlu0 %v198, 40
        %v606 = vpop.permute.xlu0 %605
        %v608 = vsel %vm201, %v604, 0
        %v611 = vsel %vm273, %v606, 0
        %613 = vmatprep.subr.bf16.mxu0 0
        %614 = vmatpush1.bf16.msra.mxu0 %v611
        %615 = vmatprep.subr.bf16.mxu0 0
        %616 = vmatpush1.bf16.msra.mxu0 0
        %617 = vmatprep.subr.bf16.mxu0 0
        %618 = vmatpush1.bf16.msra.mxu0 0
        %619 = vmatprep.subr.bf16.mxu0 0
        %620 = vmatpush1.bf16.msra.mxu0 0
        %621 = vmatprep.subr.bf16.mxu0 0
        %622 = vmatpush1.bf16.msra.mxu0 0
        %623 = vmatprep.subr.bf16.mxu0 0
        %624 = vmatpush1.bf16.msra.mxu0 0
        %625 = vmatprep.subr.bf16.mxu0 0
        %626 = vmatpush1.bf16.msra.mxu0 0
        %627 = vmatprep.subr.bf16.mxu0 0
        %628 = vmatpush1.bf16.msra.mxu0 0
        %629 = vmatprep.subr.bf16.mxu0 0
        %630 = vmatpush1.bf16.msra.mxu0 0
        %631 = vmatprep.subr.bf16.mxu0 0
        %632 = vmatpush1.bf16.msra.mxu0 0
        %633 = vmatprep.subr.bf16.mxu0 0
        %634 = vmatpush1.bf16.msra.mxu0 0
        %635 = vmatprep.subr.bf16.mxu0 0
        %636 = vmatpush1.bf16.msra.mxu0 0
        %637 = vmatprep.subr.bf16.mxu0 0
        %638 = vmatpush1.bf16.msra.mxu0 0
        %639 = vmatprep.subr.bf16.mxu0 0
        %640 = vmatpush1.bf16.msra.mxu0 0
        %641 = vmatprep.subr.bf16.mxu0 0
        %642 = vmatpush1.bf16.msra.mxu0 0
        %643 = vmatprep.subr.bf16.mxu0 0
        %644 = vmatpush1.bf16.msra.mxu0 0
        %645 = vmatprep.mubr.bf16.mxu0 0
        %646 = vmatmul.mubr.bf16.gmra.mrb[0].mxu0 %v608
        %v647 = vpop.f32.mrb[0].mxu0
        %v648 = vadd.f32 0.0, %v647
        %v649 = vpop.f32.mrb[0].mxu0
        %v650 = vpop.f32.mrb[0].mxu0
        %v651 = vpop.f32.mrb[0].mxu0
        %652 = vdwg.mxu0
        %654 = vrot.lane.b32.xlu0 %v424, 8
        %v655 = vpop.permute.xlu0 %654
        %658 = vrot.lane.b32.xlu0 %v536, 16
        %v659 = vpop.permute.xlu0 %658
        %662 = vrot.lane.b32.xlu0 %v648, 24
        %v663 = vpop.permute.xlu0 %662
        %v665 = vsel %vm201, %v312, %v655
        %vm666 = vcmask 130048
        %v667 = vsel %vm666, %v665, %v659
        %vm668 = vcmask 195584
        %v669 = vsel %vm668, %v667, %v663
        %v670 = vpack.c.bf16 %v669, %v669
        %vm671 = vcmask 257024
        %672 = vst.msk [vmem:[%s192] sm:$0xf] %vm671, %v670
        %s673 = sand.u32 %s82, 1
        %s674 = scalar_lea.sflag [#allocation4], %s673
        %s675 = sand.u32 %s82, 1
        %s676 = smul.addr %s675, 4
        %s677 = scalar_lea.vmem [#allocation7], %s676
        // Predicated region
        $region37: #{ner_bert_forward.12} parent=27 // pred_check
          %p678 = pneg %p92
        $region38: #{ner_bert_forward.12} parent=27 // pred_check_branch
          %680 = sbr.rel (%p678) target = $region40
        $region39: #{ner_bert_forward.12} parent=27 // pred_region
          %s682 = ssub.s32 64, 64
          %683 = vsyncadd %s674, %s682
          %s684 = smul.addr %s22, 64
          %s685 = scalar_lea.hbm %s2, %s684
          %s687 = sshll.u32 %s677, 4
          %s688 = int_to_ptr.vmem [resolvable:$true] %s687
          %690 = dma.vmem_to_hbm [thread:$0]  %s688, 64, %s685, %s674
        $region40: #{ner_bert_forward.12} parent=27 // pred_fallthru
          _
      $region28: #{ner_bert_forward.12} parent=5 // pred_fallthru
        _
      %p691 = scmp.le.s32.totalorder 2, %s17
      // Predicated region
      $region41: #{ner_bert_forward.12} parent=5 // pred_check
        %p692 = pneg %p691
      $region42: #{ner_bert_forward.12} parent=5 // pred_check_branch
        %694 = sbr.rel (%p692) target = $region44
      $region43: #{ner_bert_forward.12} parent=5 // pred_region
        %s695 = ssub.s32 %s17, 2
        // Predicated region
        $region45: #{ner_bert_forward.12} parent=43 // pred_check
          %p696 = pneg %p98
        $region46: #{ner_bert_forward.12} parent=43 // pred_check_branch
          %698 = sbr.rel (%p696) target = $region48
        $region47: #{ner_bert_forward.12} parent=43 // pred_region
          %s699 = sand.u32 %s83, 1
          %s700 = scalar_lea.sflag [#allocation4], %s699
          %s701 = sand.u32 %s83, 1
          %s702 = smul.addr %s701, 4
          %s703 = scalar_lea.vmem [#allocation7], %s702
          %704 = dma.done %s700, 64
        $region48: #{ner_bert_forward.12} parent=43 // pred_fallthru
          _
      $region44: #{ner_bert_forward.12} parent=5 // pred_fallthru
        _
    $region6: #{ner_bert_forward.12} parent=1 // loop_footer
      %s21 = sadd.s32 1, %s17
    $region7: #{ner_bert_forward.12} parent=1 // loop_footer_branch
      %16 = sbr.rel target = $region3
    $region8: #{ner_bert_forward.12} parent=1 // loop_exit
      _
    %705 = vsyncpa [#allocation3], 1
    %s706 = scalar_lea.sflag [#allocation3], 1
    %707 = vsyncpa %s706, 1
    %708 = vsyncpa [#allocation6], 1
    %s709 = scalar_lea.sflag [#allocation6], 1
    %710 = vsyncpa %s709, 1
    %711 = vsyncpa [#allocation4], 1
    %s712 = scalar_lea.sflag [#allocation4], 1
    %713 = vsyncpa %s712, 1

// kernel: ner_bert_forward.14
$region0: #{ner_bert_forward.14}
  #allocation0 [shape = 'u32[]', space=smem, size = 0x4, offset = 0x4, fixed_abs, tag = 'smem constant byte address 0x4 - core index']
  #allocation1 [shape = 'u32[144,128]{1,0:T(1,128)}', space=vmem, size = 0x12000, scoped, tag = 'internal scratch']
  %s0 = inlined_call_operand.hbm [shape: bf16[16,32], index: 0, kind: input, shape index: {}]
  %s1 = inlined_call_operand.hbm [shape: bf16[32,64], index: 1, kind: input, shape index: {}]
  %s2 = inlined_call_operand.hbm [shape: f32[1,64], index: 2, kind: input, shape index: {}]
  %s3 = inlined_call_operand.hbm [shape: bf16[64,32], index: 3, kind: input, shape index: {}]
  %s4 = inlined_call_operand.hbm [shape: f32[1,32], index: 4, kind: input, shape index: {}]
  %s5 = inlined_call_operand.hbm [shape: f32[1,32], index: 5, kind: input, shape index: {}]
  %s6 = inlined_call_operand.hbm [shape: f32[1,32], index: 6, kind: input, shape index: {}]
  %s7 = inlined_call_operand.hbm [shape: bf16[16,32], index: 7, kind: output, shape index: {}]
  %s8 = sld [smem:[#allocation0]]
  $region66: #{ner_bert_forward.14} parent=0
    _
  %s10 = ssub.s32 1, %s8
  %s11 = scalar_select 0, %s10, %s8
  $region1: #{ner_bert_forward.14} parent=0
    #allocation2 [shape = 'u8[4096]{0}', space=vmem, size = 0x1000, scoped, tag = 'input window, operand 0, single buffered']
    #allocation3 [shape = 's32[1]{0}', space=sflag, size = 0x4, scoped, tag = 'scoped memory for ner_bert_forward.14']
    #allocation4 [shape = 's32[1]{0}', space=sflag, size = 0x4, scoped, tag = 'scoped memory for ner_bert_forward.14']
    #allocation5 [shape = 'u8[8192]{0}', space=vmem, size = 0x2000, scoped, tag = 'input window, operand 1, single buffered']
    #allocation6 [shape = 's32[1]{0}', space=sflag, size = 0x4, scoped, tag = 'scoped memory for ner_bert_forward.14']
    #allocation7 [shape = 'u8[512]{0}', space=vmem, size = 0x400, scoped, tag = 'input window, operand 2, single buffered']
    #allocation8 [shape = 'u8[16384]{0}', space=vmem, size = 0x4000, scoped, tag = 'input window, operand 3, single buffered']
    #allocation9 [shape = 's32[1]{0}', space=sflag, size = 0x4, scoped, tag = 'scoped memory for ner_bert_forward.14']
    #allocation10 [shape = 'u8[512]{0}', space=vmem, size = 0x400, scoped, tag = 'input window, operand 4, single buffered']
    #allocation11 [shape = 'u8[512]{0}', space=vmem, size = 0x400, scoped, tag = 'input window, operand 5, single buffered']
    #allocation12 [shape = 's32[1]{0}', space=sflag, size = 0x4, scoped, tag = 'scoped memory for ner_bert_forward.14']
    #allocation13 [shape = 'u8[512]{0}', space=vmem, size = 0x400, scoped, tag = 'input window, operand 6, single buffered']
    #allocation14 [shape = 'u8[4096]{0}', space=vmem, size = 0x1000, scoped, tag = 'output window, operand 0, single buffered']
    %12 = vsyncpa [#allocation3], 0
    %13 = vsyncpa [#allocation6], 0
    %14 = vsyncpa [#allocation9], 0
    %15 = vsyncpa [#allocation12], 0
    %16 = vsyncpa [#allocation4], 0
    // Predicated region
    $region2: #{ner_bert_forward.14} parent=1 // pred_check
      _
    $region3: #{ner_bert_forward.14} parent=1 // pred_check_branch
      %18 = sbr.rel (0) target = $region5
    $region4: #{ner_bert_forward.14} parent=1 // pred_region
      %s20 = ssub.s32 128, 128
      %21 = vsyncadd [#allocation3], %s20
      %s22 = sshll.u32 [#allocation2], 4
      %s23 = int_to_ptr.vmem [resolvable:$true] %s22
      %28 = dma.hbm_to_vmem [thread:$0]  %s0, 128, %s23, [#allocation3], 64, 64, 4
    $region5: #{ner_bert_forward.14} parent=1 // pred_fallthru
      _
    // Predicated region
    $region6: #{ner_bert_forward.14} parent=1 // pred_check
      _
    $region7: #{ner_bert_forward.14} parent=1 // pred_check_branch
      %30 = sbr.rel (0) target = $region9
    $region8: #{ner_bert_forward.14} parent=1 // pred_region
      %s32 = ssub.s32 256, 256
      %33 = vsyncadd [#allocation6], %s32
      %s34 = sshll.u32 [#allocation5], 4
      %s35 = int_to_ptr.vmem [resolvable:$true] %s34
      %40 = dma.hbm_to_vmem [thread:$0]  %s1, 256, %s35, [#allocation6], 64, 64, 4
    $region9: #{ner_bert_forward.14} parent=1 // pred_fallthru
      _
    // Predicated region
    $region10: #{ner_bert_forward.14} parent=1 // pred_check
      _
    $region11: #{ner_bert_forward.14} parent=1 // pred_check_branch
      %42 = sbr.rel (0) target = $region13
    $region12: #{ner_bert_forward.14} parent=1 // pred_region
      %s44 = ssub.s32 16, 16
      %45 = vsyncadd [#allocation6], %s44
      %s47 = sshll.u32 [#allocation7], 4
      %s48 = int_to_ptr.vmem [resolvable:$true] %s47
      %50 = dma.hbm_to_vmem [thread:$0]  %s2, 16, %s48, [#allocation6]
    $region13: #{ner_bert_forward.14} parent=1 // pred_fallthru
      _
    // Predicated region
    $region14: #{ner_bert_forward.14} parent=1 // pred_check
      _
    $region15: #{ner_bert_forward.14} parent=1 // pred_check_branch
      %52 = sbr.rel (0) target = $region17
    $region16: #{ner_bert_forward.14} parent=1 // pred_region
      %s54 = ssub.s32 512, 512
      %55 = vsyncadd [#allocation9], %s54
      %s56 = sshll.u32 [#allocation8], 4
      %s57 = int_to_ptr.vmem [resolvable:$true] %s56
      %62 = dma.hbm_to_vmem [thread:$0]  %s3, 512, %s57, [#allocation9], 64, 64, 4
    $region17: #{ner_bert_forward.14} parent=1 // pred_fallthru
      _
    // Predicated region
    $region18: #{ner_bert_forward.14} parent=1 // pred_check
      _
    $region19: #{ner_bert_forward.14} parent=1 // pred_check_branch
      %64 = sbr.rel (0) target = $region21
    $region20: #{ner_bert_forward.14} parent=1 // pred_region
      %s66 = ssub.s32 16, 16
      %67 = vsyncadd [#allocation9], %s66
      %s69 = sshll.u32 [#allocation10], 4
      %s70 = int_to_ptr.vmem [resolvable:$true] %s69
      %72 = dma.hbm_to_vmem [thread:$0]  %s4, 16, %s70, [#allocation9]
    $region21: #{ner_bert_forward.14} parent=1 // pred_fallthru
      _
    // Predicated region
    $region22: #{ner_bert_forward.14} parent=1 // pred_check
      _
    $region23: #{ner_bert_forward.14} parent=1 // pred_check_branch
      %74 = sbr.rel (0) target = $region25
    $region24: #{ner_bert_forward.14} parent=1 // pred_region
      %s76 = ssub.s32 16, 16
      %77 = vsyncadd [#allocation12], %s76
      %s79 = sshll.u32 [#allocation11], 4
      %s80 = int_to_ptr.vmem [resolvable:$true] %s79
      %82 = dma.hbm_to_vmem [thread:$0]  %s5, 16, %s80, [#allocation12]
    $region25: #{ner_bert_forward.14} parent=1 // pred_fallthru
      _
    // Predicated region
    $region26: #{ner_bert_forward.14} parent=1 // pred_check
      _
    $region27: #{ner_bert_forward.14} parent=1 // pred_check_branch
      %84 = sbr.rel (0) target = $region29
    $region28: #{ner_bert_forward.14} parent=1 // pred_region
      %s86 = ssub.s32 16, 16
      %87 = vsyncadd [#allocation12], %s86
      %s89 = sshll.u32 [#allocation13], 4
      %s90 = int_to_ptr.vmem [resolvable:$true] %s89
      %92 = dma.hbm_to_vmem [thread:$0]  %s6, 16, %s90, [#allocation12]
    $region29: #{ner_bert_forward.14} parent=1 // pred_fallthru
      _
    // Predicated region
    $region30: #{ner_bert_forward.14} parent=1 // pred_check
      _
    $region31: #{ner_bert_forward.14} parent=1 // pred_check_branch
      %94 = sbr.rel (0) target = $region33
    $region32: #{ner_bert_forward.14} parent=1 // pred_region
      %95 = dma.done [#allocation3], 128
    $region33: #{ner_bert_forward.14} parent=1 // pred_fallthru
      _
    // Predicated region
    $region34: #{ner_bert_forward.14} parent=1 // pred_check
      _
    $region35: #{ner_bert_forward.14} parent=1 // pred_check_branch
      %97 = sbr.rel (0) target = $region37
    $region36: #{ner_bert_forward.14} parent=1 // pred_region
      %98 = dma.done [#allocation6], 256
    $region37: #{ner_bert_forward.14} parent=1 // pred_fallthru
      _
    // Predicated region
    $region38: #{ner_bert_forward.14} parent=1 // pred_check
      _
    $region39: #{ner_bert_forward.14} parent=1 // pred_check_branch
      %100 = sbr.rel (0) target = $region41
    $region40: #{ner_bert_forward.14} parent=1 // pred_region
      %101 = dma.done [#allocation6], 16
    $region41: #{ner_bert_forward.14} parent=1 // pred_fallthru
      _
    // Predicated region
    $region42: #{ner_bert_forward.14} parent=1 // pred_check
      _
    $region43: #{ner_bert_forward.14} parent=1 // pred_check_branch
      %103 = sbr.rel (0) target = $region45
    $region44: #{ner_bert_forward.14} parent=1 // pred_region
      %104 = dma.done [#allocation9], 512
    $region45: #{ner_bert_forward.14} parent=1 // pred_fallthru
      _
    // Predicated region
    $region46: #{ner_bert_forward.14} parent=1 // pred_check
      _
    $region47: #{ner_bert_forward.14} parent=1 // pred_check_branch
      %106 = sbr.rel (0) target = $region49
    $region48: #{ner_bert_forward.14} parent=1 // pred_region
      %107 = dma.done [#allocation9], 16
    $region49: #{ner_bert_forward.14} parent=1 // pred_fallthru
      _
    // Predicated region
    $region50: #{ner_bert_forward.14} parent=1 // pred_check
      _
    $region51: #{ner_bert_forward.14} parent=1 // pred_check_branch
      %109 = sbr.rel (0) target = $region53
    $region52: #{ner_bert_forward.14} parent=1 // pred_region
      %110 = dma.done [#allocation12], 16
    $region53: #{ner_bert_forward.14} parent=1 // pred_fallthru
      _
    // Predicated region
    $region54: #{ner_bert_forward.14} parent=1 // pred_check
      _
    $region55: #{ner_bert_forward.14} parent=1 // pred_check_branch
      %112 = sbr.rel (0) target = $region57
    $region56: #{ner_bert_forward.14} parent=1 // pred_region
      %113 = dma.done [#allocation12], 16
    $region57: #{ner_bert_forward.14} parent=1 // pred_fallthru
      _
    %v115 = vld [vmem:[#allocation2] sm:$0xf]
    %v116 = vld [vmem:[#allocation2 + $0x4] sm:$0xf]
    %v117 = vld [vmem:[#allocation5] sm:$0xf]
    %v118 = vld [vmem:[#allocation5 + $0x4] sm:$0xf]
    %v119 = vld [vmem:[#allocation5 + $0x8] sm:$0xf]
    %v120 = vld [vmem:[#allocation5 + $0xc] sm:$0xf]
    %v121 = vld [vmem:[#allocation7] sm:$0x1]
    %v123 = vlaneseq
    %v124 = vshrl.u32 %v123, 7
    %v125 = vsub.s32 0, %v124
    %v126 = vrot.slane %v121, %v125
    %v130 = vunpack.c.l.b16 %v115
    %v131 = vunpack.c.l.b16 %v116
    %v132 = vpack.c.b16 %v131, %v130
    %v137 = vunpack.c.l.b16 %v117
    %v138 = vunpack.c.l.b16 %v118
    %v139 = vunpack.c.l.b16 %v119
    %v140 = vunpack.c.l.b16 %v120
    %v141 = vpack.c.b16 %v138, %v137
    %v142 = vpack.c.b16 %v140, %v139
    %vm145 = vcmask 261120
    %v147 = vsel %vm145, %v132, 0
    %149 = vmatprep.subr.bf16.mxu0 0
    %150 = vmatpush1.bf16.msra.mxu0 %v141
    %151 = vmatprep.subr.bf16.mxu0 0
    %152 = vmatpush1.bf16.msra.mxu0 %v142
    %153 = vmatprep.subr.bf16.mxu0 0
    %154 = vmatpush1.bf16.msra.mxu0 0
    %155 = vmatprep.subr.bf16.mxu0 0
    %156 = vmatpush1.bf16.msra.mxu0 0
    %157 = vmatprep.subr.bf16.mxu0 0
    %158 = vmatpush1.bf16.msra.mxu0 0
    %159 = vmatprep.subr.bf16.mxu0 0
    %160 = vmatpush1.bf16.msra.mxu0 0
    %161 = vmatprep.subr.bf16.mxu0 0
    %162 = vmatpush1.bf16.msra.mxu0 0
    %163 = vmatprep.subr.bf16.mxu0 0
    %164 = vmatpush1.bf16.msra.mxu0 0
    %165 = vmatprep.subr.bf16.mxu0 0
    %166 = vmatpush1.bf16.msra.mxu0 0
    %167 = vmatprep.subr.bf16.mxu0 0
    %168 = vmatpush1.bf16.msra.mxu0 0
    %169 = vmatprep.subr.bf16.mxu0 0
    %170 = vmatpush1.bf16.msra.mxu0 0
    %171 = vmatprep.subr.bf16.mxu0 0
    %172 = vmatpush1.bf16.msra.mxu0 0
    %173 = vmatprep.subr.bf16.mxu0 0
    %174 = vmatpush1.bf16.msra.mxu0 0
    %175 = vmatprep.subr.bf16.mxu0 0
    %176 = vmatpush1.bf16.msra.mxu0 0
    %177 = vmatprep.subr.bf16.mxu0 0
    %178 = vmatpush1.bf16.msra.mxu0 0
    %179 = vmatprep.subr.bf16.mxu0 0
    %180 = vmatpush1.bf16.msra.mxu0 0
    %181 = vmatprep.mubr.bf16.mxu0 0
    %182 = vmatmul.mubr.bf16.gmra.mrb[0].mxu0 %v147
    %v183 = vpop.f32.mrb[0].mxu0
    %v184 = vadd.f32 %v126, %v183
    %v185 = vpop.f32.mrb[0].mxu0
    %v186 = vpop.f32.mrb[0].mxu0
    %v187 = vadd.f32 %v126, %v186
    %v188 = vpop.f32.mrb[0].mxu0
    %189 = vdwg.mxu0
    %v190 = vmul.f32 %v184, 0.5
    %v191 = vmul.f32 %v187, 0.5
    %v192 = vmul.f32 %v184, 0.044715
    %v193 = vmul.f32 %v187, 0.044715
    %v194 = vmul.f32 %v192, %v184
    %v195 = vmul.f32 %v193, %v187
    %v196 = vmul.f32 %v194, %v184
    %v197 = vmul.f32 %v195, %v187
    %v198 = vadd.f32 %v184, %v196
    %v199 = vadd.f32 %v187, %v197
    %v200 = vmul.f32 %v198, 0.7978846
    %v201 = vmul.f32 %v199, 0.7978846
    %v202 = vtanh.pop %v200
    %v203 = vtanh.pop %v201
    %v204 = vadd.f32 %v202, 1.0
    %v205 = vadd.f32 %v203, 1.0
    %v206 = vmul.f32 %v190, %v204
    %v207 = vmul.f32 %v191, %v205
    %v208 = vpack.c.bf16 %v207, %v206
    %v209 = vld [vmem:[#allocation8] sm:$0xf]
    %v210 = vld [vmem:[#allocation8 + $0x4] sm:$0xf]
    %v211 = vld [vmem:[#allocation8 + $0x8] sm:$0xf]
    %v212 = vld [vmem:[#allocation8 + $0xc] sm:$0xf]
    %v213 = vld [vmem:[#allocation8 + $0x10] sm:$0xf]
    %v214 = vld [vmem:[#allocation8 + $0x14] sm:$0xf]
    %v215 = vld [vmem:[#allocation8 + $0x18] sm:$0xf]
    %v216 = vld [vmem:[#allocation8 + $0x1c] sm:$0xf]
    %v217 = vld [vmem:[#allocation10] sm:$0x1]
    %v219 = vlaneseq
    %v220 = vshrl.u32 %v219, 7
    %v221 = vsub.s32 0, %v220
    %v222 = vrot.slane %v217, %v221
    %v232 = vunpack.c.l.b16 %v209
    %v233 = vunpack.c.l.b16 %v210
    %v234 = vunpack.c.l.b16 %v211
    %v235 = vunpack.c.l.b16 %v212
    %v236 = vunpack.c.l.b16 %v213
    %v237 = vunpack.c.l.b16 %v214
    %v238 = vunpack.c.l.b16 %v215
    %v239 = vunpack.c.l.b16 %v216
    %v240 = vpack.c.b16 %v233, %v232
    %v241 = vpack.c.b16 %v235, %v234
    %v242 = vpack.c.b16 %v237, %v236
    %v243 = vpack.c.b16 %v239, %v238
    %vm248 = vcmask 523264
    %v250 = vsel %vm248, %v208, 0
    %252 = vmatprep.subr.bf16.mxu0 0
    %253 = vmatpush1.bf16.msra.mxu0 %v240
    %254 = vmatprep.subr.bf16.mxu0 0
    %255 = vmatpush1.bf16.msra.mxu0 %v241
    %256 = vmatprep.subr.bf16.mxu0 0
    %257 = vmatpush1.bf16.msra.mxu0 %v242
    %258 = vmatprep.subr.bf16.mxu0 0
    %259 = vmatpush1.bf16.msra.mxu0 %v243
    %260 = vmatprep.subr.bf16.mxu0 0
    %261 = vmatpush1.bf16.msra.mxu0 0
    %262 = vmatprep.subr.bf16.mxu0 0
    %263 = vmatpush1.bf16.msra.mxu0 0
    %264 = vmatprep.subr.bf16.mxu0 0
    %265 = vmatpush1.bf16.msra.mxu0 0
    %266 = vmatprep.subr.bf16.mxu0 0
    %267 = vmatpush1.bf16.msra.mxu0 0
    %268 = vmatprep.subr.bf16.mxu0 0
    %269 = vmatpush1.bf16.msra.mxu0 0
    %270 = vmatprep.subr.bf16.mxu0 0
    %271 = vmatpush1.bf16.msra.mxu0 0
    %272 = vmatprep.subr.bf16.mxu0 0
    %273 = vmatpush1.bf16.msra.mxu0 0
    %274 = vmatprep.subr.bf16.mxu0 0
    %275 = vmatpush1.bf16.msra.mxu0 0
    %276 = vmatprep.subr.bf16.mxu0 0
    %277 = vmatpush1.bf16.msra.mxu0 0
    %278 = vmatprep.subr.bf16.mxu0 0
    %279 = vmatpush1.bf16.msra.mxu0 0
    %280 = vmatprep.subr.bf16.mxu0 0
    %281 = vmatpush1.bf16.msra.mxu0 0
    %282 = vmatprep.subr.bf16.mxu0 0
    %283 = vmatpush1.bf16.msra.mxu0 0
    %284 = vmatprep.mubr.bf16.mxu0 0
    %285 = vmatmul.mubr.bf16.gmra.mrb[0].mxu0 %v250
    %v286 = vpop.f32.mrb[0].mxu0
    %v287 = vadd.f32 %v222, %v286
    %v288 = vpop.f32.mrb[0].mxu0
    %v289 = vpop.f32.mrb[0].mxu0
    %v290 = vadd.f32 %v222, %v289
    %v291 = vpop.f32.mrb[0].mxu0
    %292 = vdwg.mxu0
    %v293 = vunpack.c.l.bf16 %v115
    %v294 = vunpack.c.l.bf16 %v116
    %v295 = vadd.f32 %v287, %v293
    %v296 = vadd.f32 %v290, %v294
    %v297 = vld [vmem:[#allocation11] sm:$0x1]
    %v298 = vld [vmem:[#allocation13] sm:$0x1]
    %v299 = vsel %vm145, %v295, 0.0
    %300 = vadd.xlane.f32.xlu0 %v299
    %v301 = vpop.xlane.xlu0 %300
    %v302 = vsel %vm145, %v296, 0.0
    %303 = vadd.xlane.f32.xlu0 %v302
    %v304 = vpop.xlane.xlu0 %303
    %v305 = vrcp.pop 32.0
    %v306 = vmul.f32 %v301, %v305
    %v307 = vmul.f32 %v304, %v305
    %v308 = vsub.f32 %v295, %v306
    %v309 = vsub.f32 %v296, %v307
    %v310 = vmul.f32 %v308, %v308
    %v311 = vmul.f32 %v309, %v309
    %v312 = vsel %vm145, %v310, 0.0
    %313 = vadd.xlane.f32.xlu0 %v312
    %v314 = vpop.xlane.xlu0 %313
    %v315 = vsel %vm145, %v311, 0.0
    %316 = vadd.xlane.f32.xlu0 %v315
    %v317 = vpop.xlane.xlu0 %316
    %v318 = vmul.f32 %v314, %v305
    %v319 = vmul.f32 %v317, %v305
    %v320 = vadd.f32 %v318, 1e-12
    %v321 = vadd.f32 %v319, 1e-12
    %v322 = vrsqrt.pop %v320
    %v323 = vrsqrt.pop %v321
    %v324 = vmul.f32 %v308, %v322
    %v325 = vmul.f32 %v309, %v323
    %v327 = vlaneseq
    %v328 = vshrl.u32 %v327, 7
    %v329 = vsub.s32 0, %v328
    %v330 = vrot.slane %v297, %v329
    %v332 = vmul.f32 %v324, %v330
    %v333 = vmul.f32 %v325, %v330
    %v335 = vlaneseq
    %v336 = vshrl.u32 %v335, 7
    %v337 = vsub.s32 0, %v336
    %v338 = vrot.slane %v298, %v337
    %v340 = vadd.f32 %v332, %v338
    %v341 = vadd.f32 %v333, %v338
    %v342 = vpack.c.bf16 %v341, %v340
    %v344 = vunpack.c.l.b16 %v342
    %v345 = vunpack.c.h.b16 %v342
    %v346 = vpack.c.b16 %v344, %v344
    %v347 = vpack.c.b16 %v345, %v345
    %vm350 = vcmask 257024
    %351 = vst.msk [vmem:[#allocation14] sm:$0xf] %vm350, %v346
    %352 = vst.msk [vmem:[#allocation14 + $0x4] sm:$0xf] %vm350, %v347
    // Predicated region
    $region58: #{ner_bert_forward.14} parent=1 // pred_check
      _
    $region59: #{ner_bert_forward.14} parent=1 // pred_check_branch
      %354 = sbr.rel (0) target = $region61
    $region60: #{ner_bert_forward.14} parent=1 // pred_region
      %s356 = ssub.s32 128, 128
      %357 = vsyncadd [#allocation4], %s356
      %s358 = sshll.u32 [#allocation14], 4
      %s359 = int_to_ptr.vmem [resolvable:$true] %s358
      %364 = dma.vmem_to_hbm [thread:$0]  %s359, 128, %s7, [#allocation4], 64, 64, 4
    $region61: #{ner_bert_forward.14} parent=1 // pred_fallthru
      _
    // Predicated region
    $region62: #{ner_bert_forward.14} parent=1 // pred_check
      _
    $region63: #{ner_bert_forward.14} parent=1 // pred_check_branch
      %366 = sbr.rel (0) target = $region65
    $region64: #{ner_bert_forward.14} parent=1 // pred_region
      %367 = dma.done [#allocation4], 128
    $region65: #{ner_bert_forward.14} parent=1 // pred_fallthru
      _
    %368 = vsyncpa [#allocation3], 1
    %369 = vsyncpa [#allocation6], 1
    %370 = vsyncpa [#allocation9], 1
    %371 = vsyncpa [#allocation12], 1
    %372 = vsyncpa [#allocation4], 1

// kernel: ner_bert_forward.19
$region0: #{ner_bert_forward.19}
  #allocation0 [shape = 'u32[]', space=smem, size = 0x4, offset = 0x4, fixed_abs, tag = 'smem constant byte address 0x4 - core index']
  #allocation1 [shape = 'u32[144,128]{1,0:T(1,128)}', space=vmem, size = 0x12000, scoped, tag = 'internal scratch']
  #allocation2 [shape = 'f32[1,1]{1,0:T(1,128)}', space=vmem, size = 0x200, scoped, tag = 'scratch operand']
  #allocation3 [shape = 'f32[1,1]{1,0:T(1,128)}', space=vmem, size = 0x200, scoped, tag = 'scratch operand']
  %s0 = inlined_call_operand.hbm [shape: bf16[16,32], index: 0, kind: input, shape index: {}]
  %s1 = inlined_call_operand.hbm [shape: bf16[32,128], index: 1, kind: input, shape index: {}]
  %s2 = inlined_call_operand.hbm [shape: f32[1,128], index: 2, kind: input, shape index: {}]
  %s3 = inlined_call_operand.hbm [shape: s32[16,1], index: 3, kind: input, shape index: {}]
  %s4 = inlined_call_operand.hbm [shape: f32[16,5], index: 4, kind: output, shape index: {0}]
  %s5 = inlined_call_operand.hbm [shape: f32[1,1], index: 5, kind: output, shape index: {1}]
  %6 = xla_tuple %s4, %s5
  %s7 = sld [smem:[#allocation0]]
  $region58: #{ner_bert_forward.19} parent=0
    _
  %s9 = ssub.s32 1, %s7
  %s10 = scalar_select 0, %s9, %s7
  $region1: #{ner_bert_forward.19} parent=0
    #allocation4 [shape = 'u8[4096]{0}', space=vmem, size = 0x1000, scoped, tag = 'input window, operand 0, single buffered']
    #allocation5 [shape = 's32[1]{0}', space=sflag, size = 0x4, scoped, tag = 'scoped memory for ner_bert_forward.19']
    #allocation6 [shape = 's32[1]{0}', space=sflag, size = 0x4, scoped, tag = 'scoped memory for ner_bert_forward.19']
    #allocation7 [shape = 'u8[8192]{0}', space=vmem, size = 0x2000, scoped, tag = 'input window, operand 1, single buffered']
    #allocation8 [shape = 's32[1]{0}', space=sflag, size = 0x4, scoped, tag = 'scoped memory for ner_bert_forward.19']
    #allocation9 [shape = 'u8[512]{0}', space=vmem, size = 0x400, scoped, tag = 'input window, operand 2, single buffered']
    #allocation10 [shape = 'u8[8192]{0}', space=vmem, size = 0x2000, scoped, tag = 'input window, operand 3, single buffered']
    #allocation11 [shape = 's32[1]{0}', space=sflag, size = 0x4, scoped, tag = 'scoped memory for ner_bert_forward.19']
    #allocation12 [shape = 'u8[8192]{0}', space=vmem, size = 0x2000, scoped, tag = 'output window, operand 0, single buffered']
    #allocation13 [shape = 'u8[512]{0}', space=vmem, size = 0x400, scoped, tag = 'output window, operand 1, single buffered']
    #allocation14 [shape = 's32[1]{0}', space=sflag, size = 0x4, scoped, tag = 'scoped memory for ner_bert_forward.19']
    %11 = vsyncpa [#allocation5], 0
    %12 = vsyncpa [#allocation8], 0
    %13 = vsyncpa [#allocation11], 0
    %14 = vsyncpa [#allocation6], 0
    %15 = vsyncpa [#allocation14], 0
    // Predicated region
    $region2: #{ner_bert_forward.19} parent=1 // pred_check
      _
    $region3: #{ner_bert_forward.19} parent=1 // pred_check_branch
      %17 = sbr.rel (0) target = $region5
    $region4: #{ner_bert_forward.19} parent=1 // pred_region
      %s19 = ssub.s32 128, 128
      %20 = vsyncadd [#allocation5], %s19
      %s21 = sshll.u32 [#allocation4], 4
      %s22 = int_to_ptr.vmem [resolvable:$true] %s21
      %27 = dma.hbm_to_vmem [thread:$0]  %s0, 128, %s22, [#allocation5], 64, 64, 4
    $region5: #{ner_bert_forward.19} parent=1 // pred_fallthru
      _
    // Predicated region
    $region6: #{ner_bert_forward.19} parent=1 // pred_check
      _
    $region7: #{ner_bert_forward.19} parent=1 // pred_check_branch
      %29 = sbr.rel (0) target = $region9
    $region8: #{ner_bert_forward.19} parent=1 // pred_region
      %s31 = ssub.s32 256, 256
      %32 = vsyncadd [#allocation8], %s31
      %s33 = sshll.u32 [#allocation7], 4
      %s34 = int_to_ptr.vmem [resolvable:$true] %s33
      %39 = dma.hbm_to_vmem [thread:$0]  %s1, 256, %s34, [#allocation8], 64, 64, 4
    $region9: #{ner_bert_forward.19} parent=1 // pred_fallthru
      _
    // Predicated region
    $region10: #{ner_bert_forward.19} parent=1 // pred_check
      _
    $region11: #{ner_bert_forward.19} parent=1 // pred_check_branch
      %41 = sbr.rel (0) target = $region13
    $region12: #{ner_bert_forward.19} parent=1 // pred_region
      %s43 = ssub.s32 16, 16
      %44 = vsyncadd [#allocation8], %s43
      %s46 = sshll.u32 [#allocation9], 4
      %s47 = int_to_ptr.vmem [resolvable:$true] %s46
      %49 = dma.hbm_to_vmem [thread:$0]  %s2, 16, %s47, [#allocation8]
    $region13: #{ner_bert_forward.19} parent=1 // pred_fallthru
      _
    // Predicated region
    $region14: #{ner_bert_forward.19} parent=1 // pred_check
      _
    $region15: #{ner_bert_forward.19} parent=1 // pred_check_branch
      %51 = sbr.rel (0) target = $region17
    $region16: #{ner_bert_forward.19} parent=1 // pred_region
      %s53 = ssub.s32 256, 256
      %54 = vsyncadd [#allocation11], %s53
      %s55 = sshll.u32 [#allocation10], 4
      %s56 = int_to_ptr.vmem [resolvable:$true] %s55
      %61 = dma.hbm_to_vmem [thread:$0]  %s3, 256, %s56, [#allocation11], 128, 128, 8
    $region17: #{ner_bert_forward.19} parent=1 // pred_fallthru
      _
    // Predicated region
    $region18: #{ner_bert_forward.19} parent=1 // pred_check
      _
    $region19: #{ner_bert_forward.19} parent=1 // pred_check_branch
      %63 = sbr.rel (0) target = $region21
    $region20: #{ner_bert_forward.19} parent=1 // pred_region
      %64 = dma.done [#allocation5], 128
    $region21: #{ner_bert_forward.19} parent=1 // pred_fallthru
      _
    // Predicated region
    $region22: #{ner_bert_forward.19} parent=1 // pred_check
      _
    $region23: #{ner_bert_forward.19} parent=1 // pred_check_branch
      %66 = sbr.rel (0) target = $region25
    $region24: #{ner_bert_forward.19} parent=1 // pred_region
      %67 = dma.done [#allocation8], 256
    $region25: #{ner_bert_forward.19} parent=1 // pred_fallthru
      _
    // Predicated region
    $region26: #{ner_bert_forward.19} parent=1 // pred_check
      _
    $region27: #{ner_bert_forward.19} parent=1 // pred_check_branch
      %69 = sbr.rel (0) target = $region29
    $region28: #{ner_bert_forward.19} parent=1 // pred_region
      %70 = dma.done [#allocation8], 16
    $region29: #{ner_bert_forward.19} parent=1 // pred_fallthru
      _
    // Predicated region
    $region30: #{ner_bert_forward.19} parent=1 // pred_check
      _
    $region31: #{ner_bert_forward.19} parent=1 // pred_check_branch
      %72 = sbr.rel (0) target = $region33
    $region32: #{ner_bert_forward.19} parent=1 // pred_region
      %73 = dma.done [#allocation11], 256
    $region33: #{ner_bert_forward.19} parent=1 // pred_fallthru
      _
    %p75 = scmp.eq.s32.totalorder 0, 0
    // Predicated region
    $region34: #{ner_bert_forward.19} parent=1 // pred_check
      %p76 = pneg %p75
    $region35: #{ner_bert_forward.19} parent=1 // pred_check_branch
      %78 = sbr.rel (%p76) target = $region37
    $region36: #{ner_bert_forward.19} parent=1 // pred_region
      %vm79 = vcmask 0
      %80 = vst.msk [vmem:[#allocation2] sm:$0x1] %vm79, 0.0
      %81 = vst.msk [vmem:[#allocation3] sm:$0x1] %vm79, 0.0
    $region37: #{ner_bert_forward.19} parent=1 // pred_fallthru
      _
    %v82 = vld [vmem:[#allocation4] sm:$0xf]
    %v83 = vld [vmem:[#allocation4 + $0x4] sm:$0xf]
    %v84 = vld [vmem:[#allocation7] sm:$0xf]
    %v85 = vld [vmem:[#allocation7 + $0x4] sm:$0xf]
    %v86 = vld [vmem:[#allocation7 + $0x8] sm:$0xf]
    %v87 = vld [vmem:[#allocation7 + $0xc] sm:$0xf]
    %v88 = vld [vmem:[#allocation9] sm:$0x1]
    %v90 = vlaneseq
    %v91 = vshrl.u32 %v90, 7
    %v92 = vsub.s32 0, %v91
    %v93 = vrot.slane %v88, %v92
    %v97 = vunpack.c.l.b16 %v82
    %v98 = vunpack.c.l.b16 %v83
    %v99 = vpack.c.b16 %v98, %v97
    %v104 = vunpack.c.l.b16 %v84
    %v105 = vunpack.c.l.b16 %v85
    %v106 = vunpack.c.l.b16 %v86
    %v107 = vunpack.c.l.b16 %v87
    %v108 = vpack.c.b16 %v105, %v104
    %v109 = vpack.c.b16 %v107, %v106
    %vm112 = vcmask 261120
    %v114 = vsel %vm112, %v99, 0
    %116 = vmatprep.subr.bf16.mxu0 0
    %117 = vmatpush1.bf16.msra.mxu0 %v108
    %118 = vmatprep.subr.bf16.mxu0 0
    %119 = vmatpush1.bf16.msra.mxu0 %v109
    %120 = vmatprep.subr.bf16.mxu0 0
    %121 = vmatpush1.bf16.msra.mxu0 0
    %122 = vmatprep.subr.bf16.mxu0 0
    %123 = vmatpush1.bf16.msra.mxu0 0
    %124 = vmatprep.subr.bf16.mxu0 0
    %125 = vmatpush1.bf16.msra.mxu0 0
    %126 = vmatprep.subr.bf16.mxu0 0
    %127 = vmatpush1.bf16.msra.mxu0 0
    %128 = vmatprep.subr.bf16.mxu0 0
    %129 = vmatpush1.bf16.msra.mxu0 0
    %130 = vmatprep.subr.bf16.mxu0 0
    %131 = vmatpush1.bf16.msra.mxu0 0
    %132 = vmatprep.subr.bf16.mxu0 0
    %133 = vmatpush1.bf16.msra.mxu0 0
    %134 = vmatprep.subr.bf16.mxu0 0
    %135 = vmatpush1.bf16.msra.mxu0 0
    %136 = vmatprep.subr.bf16.mxu0 0
    %137 = vmatpush1.bf16.msra.mxu0 0
    %138 = vmatprep.subr.bf16.mxu0 0
    %139 = vmatpush1.bf16.msra.mxu0 0
    %140 = vmatprep.subr.bf16.mxu0 0
    %141 = vmatpush1.bf16.msra.mxu0 0
    %142 = vmatprep.subr.bf16.mxu0 0
    %143 = vmatpush1.bf16.msra.mxu0 0
    %144 = vmatprep.subr.bf16.mxu0 0
    %145 = vmatpush1.bf16.msra.mxu0 0
    %146 = vmatprep.subr.bf16.mxu0 0
    %147 = vmatpush1.bf16.msra.mxu0 0
    %148 = vmatprep.mubr.bf16.mxu0 0
    %149 = vmatmul.mubr.bf16.gmra.mrb[0].mxu0 %v114
    %v150 = vpop.f32.mrb[0].mxu0
    %v151 = vadd.f32 %v93, %v150
    %v152 = vpop.f32.mrb[0].mxu0
    %v153 = vpop.f32.mrb[0].mxu0
    %v154 = vadd.f32 %v93, %v153
    %v155 = vpop.f32.mrb[0].mxu0
    %156 = vdwg.mxu0
    %v157 = vlaneseq
    %v158 = vand.u32 %v157, 127
    %vm159 = vcmp.lt.s32.totalorder %v158, 5
    %v160 = vsel %vm159, %v151, -1e+30
    %v161 = vsel %vm159, %v154, -1e+30
    %vm162 = vcmask 39936
    %163 = vst.msk [vmem:[#allocation12] sm:$0xff] %vm162, %v151
    %164 = vst.msk [vmem:[#allocation12 + $0x8] sm:$0xff] %vm162, %v154
    %v165 = vld [vmem:[#allocation10] sm:$0xff]
    %v166 = vld [vmem:[#allocation10 + $0x8] sm:$0xff]
    %v167 = vlaneseq
    %v168 = vshrl.u32 %v167, 7
    %v169 = vadd.s32 %v168, 8
    %s170 = smul.u32 0, 16
    %v171 = vstv %s170
    %v172 = vadd.s32 %v168, %v171
    %v173 = vadd.s32 %v169, %v171
    %vm174 = vcmp.ne.s32.totalorder %v165, 4294967196
    %vm175 = vcmp.ne.s32.totalorder %v166, 4294967196
    %vm176 = vcmp.lt.s32.totalorder %v172, 16
    %vm177 = vcmp.lt.s32.totalorder %v173, 16
    %vm178 = vmand %vm174, %vm176
    %vm179 = vmand %vm175, %vm177
    %180 = vmax.xlane.f32.xlu0 %v160
    %v181 = vpop.xlane.xlu0 %180
    %182 = vmax.xlane.f32.xlu0 %v161
    %v183 = vpop.xlane.xlu0 %182
    %v184 = vsub.f32 %v160, %v181
    %v185 = vsub.f32 %v161, %v183
    %v186 = vmul.f32 %v184, 1.442695
    %v187 = vpow.pop %v186
    %v188 = vmul.f32 %v185, 1.442695
    %v189 = vpow.pop %v188
    %190 = vadd.xlane.f32.xlu0 %v187
    %v191 = vpop.xlane.xlu0 %190
    %192 = vadd.xlane.f32.xlu0 %v189
    %v193 = vpop.xlane.xlu0 %192
    %v194 = vlog2.pop %v191
    %v195 = vmul.f32 %v194, 0.6931472
    %v196 = vlog2.pop %v193
    %v197 = vmul.f32 %v196, 0.6931472
    %v198 = vadd.f32 %v195, %v181
    %v199 = vadd.f32 %v197, %v183
    %200 = vset.pattern.permute.xlu0 0
    %201 = vperm.xlu0 %200, %v165
    %v202 = vpop.permute.xlu0 %201
    %203 = vset.pattern.permute.xlu0 0
    %204 = vperm.xlu0 %203, %v166
    %v205 = vpop.permute.xlu0 %204
    %vm206 = vcmp.eq.s32.totalorder %v158, %v202
    %vm207 = vcmp.eq.s32.totalorder %v158, %v205
    %v208 = vsel %vm206, %v160, 0.0
    %v209 = vsel %vm207, %v161, 0.0
    %210 = vadd.xlane.f32.xlu0 %v208
    %v211 = vpop.xlane.xlu0 %210
    %212 = vadd.xlane.f32.xlu0 %v209
    %v213 = vpop.xlane.xlu0 %212
    %v214 = vsub.f32 %v198, %v211
    %v215 = vsub.f32 %v199, %v213
    %v216 = vsel %vm178, %v214, 0.0
    %v217 = vsel %vm179, %v215, 0.0
    %v218 = vld [vmem:[#allocation2] sm:$0x1]
    %vm219 = vcmask 7168
    %v220 = vsel %vm219, %v216, 0.0
    %v221 = vsel %vm219, %v217, 0.0
    %v222 = vadd.f32 %v220, %v221
    %223 = vadd.xlane.f32.xlu0 %v222
    %v224 = vpop.xlane.xlu0 %223
    %v225 = vrot.slane %v224, 4
    %v226 = vadd.f32 %v224, %v225
    %v227 = vrot.slane %v226, 2
    %v228 = vadd.f32 %v226, %v227
    %v229 = vrot.slane %v228, 1
    %v230 = vadd.f32 %v228, %v229
    %s231 = vtos %v230
    %v232 = vstv %s231
    %v233 = vadd.f32 %v218, %v232
    %vm234 = vcmask 0
    %235 = vst.msk [vmem:[#allocation2] sm:$0x1] %vm234, %v233
    %v236 = vld [vmem:[#allocation3] sm:$0x1]
    %v237 = vsel %vm178, 1, 0
    %v238 = vsel %vm179, 1, 0
    %v239 = vcvt.s32.f32 %v237
    %v240 = vcvt.s32.f32 %v238
    %v241 = vsel %vm219, %v239, 0.0
    %v242 = vsel %vm219, %v240, 0.0
    %v243 = vadd.f32 %v241, %v242
    %244 = vadd.xlane.f32.xlu0 %v243
    %v245 = vpop.xlane.xlu0 %244
    %v246 = vrot.slane %v245, 4
    %v247 = vadd.f32 %v245, %v246
    %v248 = vrot.slane %v247, 2
    %v249 = vadd.f32 %v247, %v248
    %v250 = vrot.slane %v249, 1
    %v251 = vadd.f32 %v249, %v250
    %s252 = vtos %v251
    %v253 = vstv %s252
    %v254 = vadd.f32 %v236, %v253
    %255 = vst.msk [vmem:[#allocation3] sm:$0x1] %vm234, %v254
    // Predicated region
    $region38: #{ner_bert_forward.19} parent=1 // pred_check
      %p256 = pneg %p75
    $region39: #{ner_bert_forward.19} parent=1 // pred_check_branch
      %258 = sbr.rel (%p256) target = $region41
    $region40: #{ner_bert_forward.19} parent=1 // pred_region
      %v259 = vld [vmem:[#allocation2] sm:$0x1]
      %v260 = vld [vmem:[#allocation3] sm:$0x1]
      %v261 = vmax.f32 %v260, 1.0
      %v262 = vrcp.pop %v261
      %v263 = vmul.f32 %v259, %v262
      %264 = vst.msk [vmem:[#allocation13] sm:$0x1] %vm234, %v263
    $region41: #{ner_bert_forward.19} parent=1 // pred_fallthru
      _
    // Predicated region
    $region42: #{ner_bert_forward.19} parent=1 // pred_check
      _
    $region43: #{ner_bert_forward.19} parent=1 // pred_check_branch
      %266 = sbr.rel (0) target = $region45
    $region44: #{ner_bert_forward.19} parent=1 // pred_region
      %s268 = ssub.s32 256, 256
      %269 = vsyncadd [#allocation6], %s268
      %s270 = sshll.u32 [#allocation12], 4
      %s271 = int_to_ptr.vmem [resolvable:$true] %s270
      %276 = dma.vmem_to_hbm [thread:$0]  %s271, 256, %s4, [#allocation6], 128, 128, 8
    $region45: #{ner_bert_forward.19} parent=1 // pred_fallthru
      _
    // Predicated region
    $region46: #{ner_bert_forward.19} parent=1 // pred_check
      _
    $region47: #{ner_bert_forward.19} parent=1 // pred_check_branch
      %278 = sbr.rel (0) target = $region49
    $region48: #{ner_bert_forward.19} parent=1 // pred_region
      %s280 = ssub.s32 16, 16
      %281 = vsyncadd [#allocation14], %s280
      %s283 = sshll.u32 [#allocation13], 4
      %s284 = int_to_ptr.vmem [resolvable:$true] %s283
      %286 = dma.vmem_to_hbm [thread:$0]  %s284, 16, %s5, [#allocation14]
    $region49: #{ner_bert_forward.19} parent=1 // pred_fallthru
      _
    // Predicated region
    $region50: #{ner_bert_forward.19} parent=1 // pred_check
      _
    $region51: #{ner_bert_forward.19} parent=1 // pred_check_branch
      %288 = sbr.rel (0) target = $region53
    $region52: #{ner_bert_forward.19} parent=1 // pred_region
      %289 = dma.done [#allocation6], 256
    $region53: #{ner_bert_forward.19} parent=1 // pred_fallthru
      _
    // Predicated region
    $region54: #{ner_bert_forward.19} parent=1 // pred_check
      _
    $region55: #{ner_bert_forward.19} parent=1 // pred_check_branch
      %291 = sbr.rel (0) target = $region57
    $region56: #{ner_bert_forward.19} parent=1 // pred_region
      %292 = dma.done [#allocation14], 16
    $region57: #{ner_bert_forward.19} parent=1 // pred_fallthru
      _
    %293 = vsyncpa [#allocation5], 1
    %294 = vsyncpa [#allocation8], 1
    %295 = vsyncpa [#allocation11], 1
    %296 = vsyncpa [#allocation6], 1
    %297 = vsyncpa [#allocation14], 1

</llo_original>
